<compile_context>
chip_gen: v7x
topology: tpu7x:2x2x1
jax: 0.10.0
libtpu: 0.0.40
codegen_flags: <defaults>
</compile_context>

<pallas_src>
import jax
import jax.numpy as jnp
from jax import lax
from jax.experimental import pallas as pl
from jax.experimental.pallas import tpu as pltpu

_EPS = 1e-5
_HIGHEST = lax.Precision.HIGHEST
_COL = 8   # sublane-aligned column offset of the image inside the padding scratch


# ----------------------------------------------------------------------------
# Pallas kernel: one batch element per grid step, everything fused in VMEM.
# ----------------------------------------------------------------------------
def _mid_block_kernel(x_ref, w1_ref, b1_ref, w2_ref, b2_ref, w3_ref, b3_ref,
                      wt_ref, bt_ref, up_ref, xs_ref, pad_scr):
    H, W, cin = x_ref.shape
    cout = xs_ref.shape[0]               # out_c
    Hp = H + 2
    c_scr = pad_scr.shape[-1]

    # ---- zero only the halo cells the 3x3 taps actually read (cheap, and
    #      megacore-safe: no reliance on scratch state from other grid steps) --
    zcol = jnp.zeros((Hp, 1, c_scr), pad_scr.dtype)
    zrow = jnp.zeros((1, W, c_scr), pad_scr.dtype)
    pad_scr[:, pl.ds(_COL - 1, 1), :] = zcol          # left halo column
    pad_scr[:, pl.ds(_COL + W, 1), :] = zcol          # right halo column
    pad_scr[pl.ds(0, 1), pl.ds(_COL, W), :] = zrow    # top halo row
    pad_scr[pl.ds(H + 1, 1), pl.ds(_COL, W), :] = zrow  # bottom halo row

    def conv3x3_relu(c, w_ref, b_ref):
        # 3 dx-shifted slabs (only 2 sublane-misaligned loads), reused for all dy.
        slabs = [pad_scr[:, pl.ds(_COL - 1 + dx, W), pl.ds(0, c)]
                 for dx in range(3)]                       # each (Hp, W, c)
        slab3 = jnp.concatenate(slabs, axis=-1)            # (Hp, W, 3c)
        rows = [slab3[dy:dy + H] for dy in range(3)]       # cheap leading-dim slices
        patches = jnp.concatenate(rows, axis=-1).reshape(H * W, 9 * c)
        # single MXU matmul per conv, bf16 operands, f32 accumulation
        y = jnp.dot(patches.astype(jnp.bfloat16), w_ref[...],
                    preferred_element_type=jnp.float32)     # (H*W, cout) f32
        return jnp.maximum(y + b_ref[...], 0.0)

    # --- self.conv: Dropout(identity) -> Conv3x3 -> BN(folded) -> ReLU
    # padding done in-kernel: write x into the (halo-zeroed) scratch interior
    pad_scr[pl.ds(1, H), pl.ds(_COL, W), pl.ds(0, cin)] = x_ref[...]
    h1 = conv3x3_relu(cin, w1_ref, b1_ref)                  # (H*W, cout)

    # --- self.mid_conv: two more Conv3x3 + BN(folded) + ReLU
    pad_scr[pl.ds(1, H), pl.ds(_COL, W), pl.ds(0, cout)] = h1.reshape(H, W, cout)
    h2 = conv3x3_relu(cout, w2_ref, b2_ref)

    pad_scr[pl.ds(1, H), pl.ds(_COL, W), pl.ds(0, cout)] = h2.reshape(H, W, cout)
    h3 = conv3x3_relu(cout, w3_ref, b3_ref)

    # --- residual add
    xs = h3 + h1                                            # (H*W, cout) f32
    xs_bf = xs.astype(jnp.bfloat16)

    nt = (((1,), (1,)), ((), ()))                           # contract last dims (A . B^T)

    # lane-dense xs output: transpose via a tiny identity matmul on the MXU
    rr = lax.broadcasted_iota(jnp.int32, (cout, cout), 0)
    cc = lax.broadcasted_iota(jnp.int32, (cout, cout), 1)
    eye = (rr == cc).astype(jnp.bfloat16)
    xs_t = lax.dot_general(eye, xs_bf, nt,
                           preferred_element_type=jnp.float32)   # (cout, H*W)
    xs_ref[...] = xs_t.astype(xs_ref.dtype)

    # --- ConvTranspose2d(k=2, s=2): 4 parities fused into ONE lane-dense matmul
    up_t = lax.dot_general(wt_ref[...], xs_bf, nt,
                           preferred_element_type=jnp.float32)   # (4*cup, H*W)
    up_ref[...] = (up_t + bt_ref[...]).astype(up_ref.dtype)


# ----------------------------------------------------------------------------
# Wrapper: fold BN into convs, lay out weights for the fused matmuls, call.
# ----------------------------------------------------------------------------
def _fold_conv_bn(p):
    """Conv3x3 + eval-mode BatchNorm -> (9*Cin, Cout) bf16 weight, (1, Cout) f32 bias."""
    cout, cin = p["w"].shape[0], p["w"].shape[1]
    scale = p["gamma"] / jnp.sqrt(p["var"] + _EPS)            # (Cout,)
    w = p["w"] * scale[:, None, None, None]                   # (Cout,Cin,3,3)
    b = (p["b"] - p["mean"]) * scale + p["beta"]              # (Cout,)
    # tap-major layout: row index = ky*3*Cin + kx*Cin + ci  (matches kernel im2col)
    w_k = jnp.transpose(w, (2, 3, 1, 0)).reshape(9 * cin, cout).astype(jnp.bfloat16)
    return w_k, b.reshape(1, cout).astype(jnp.float32)


def my_mid_block_forward(x, params):
    """x: (B, in_c, H, W) NCHW. Returns (up, xs) in NCHW, like the PyTorch module."""
    B, in_c, H, W = x.shape
    out_c = params["c1"]["w"].shape[0]
    cup = params["up"]["w"].shape[1]                          # out_c // 2
    Hp = H + 2
    c_scr = max(in_c, out_c)
    w_scr = ((_COL + W + 1 + 7) // 8) * 8                     # padded scratch width

    # boundary glue: NCHW -> NHWC (padding now happens inside the kernel)
    x_nhwc = jnp.transpose(x, (0, 2, 3, 1))

    w1, b1 = _fold_conv_bn(params["c1"])
    w2, b2 = _fold_conv_bn(params["c2"])
    w3, b3 = _fold_conv_bn(params["c3"])

    # ConvTranspose2d weight (out_c, cup, 2, 2) -> (4*cup, out_c),
    # parity-major rows: index = (di*2+dj)*cup + cu  (NT contraction over out_c).
    wt = params["up"]["w"]
    wt_k = jnp.transpose(wt, (2, 3, 1, 0)).reshape(4 * cup, out_c).astype(jnp.bfloat16)
    bt_k = jnp.tile(params["up"]["b"], 4).reshape(4 * cup, 1).astype(jnp.float32)

    # rough per-step VMEM footprint -> scoped limit with headroom (review item)
    f32 = 4
    est = (2 * H * W * in_c * f32                             # x block (double-buffered)
           + 2 * (4 * cup + out_c) * H * W * f32              # output blocks (x2 bufs)
           + 2 * 2 * (9 * in_c + 18 * out_c + 4 * cup) * out_c  # bf16 weights (x2 bufs)
           + Hp * w_scr * c_scr * f32                         # padding scratch
           + 6 * H * W * 9 * max(in_c, out_c) * f32)          # im2col temps headroom
    vmem_limit = int(min(48 * 2 ** 20, max(32 * 2 ** 20, 2 * est)))

    up_g, xs_g = pl.pallas_call(
        _mid_block_kernel,
        out_shape=(
            jax.ShapeDtypeStruct((B, 4 * cup, H * W), x.dtype),  # parity-fused up^T
            jax.ShapeDtypeStruct((B, out_c, H * W), x.dtype),    # xs^T (2nd output)
        ),
        grid=(B,),
        in_specs=[
            pl.BlockSpec((None, H, W, in_c), lambda b: (b, 0, 0, 0)),  # x (unpadded)
            pl.BlockSpec((9 * in_c, out_c), lambda b: (0, 0)),         # w1
            pl.BlockSpec((1, out_c), lambda b: (0, 0)),                # b1
            pl.BlockSpec((9 * out_c, out_c), lambda b: (0, 0)),        # w2
            pl.BlockSpec((1, out_c), lambda b: (0, 0)),                # b2
            pl.BlockSpec((9 * out_c, out_c), lambda b: (0, 0)),        # w3
            pl.BlockSpec((1, out_c), lambda b: (0, 0)),                # b3
            pl.BlockSpec((4 * cup, out_c), lambda b: (0, 0)),          # wt (transposed)
            pl.BlockSpec((4 * cup, 1), lambda b: (0, 0)),              # bt (column)
        ],
        out_specs=(
            pl.BlockSpec((None, 4 * cup, H * W), lambda b: (b, 0, 0)),
            pl.BlockSpec((None, out_c, H * W), lambda b: (b, 0, 0)),
        ),
        scratch_shapes=[pltpu.VMEM((Hp, w_scr, c_scr), jnp.float32)],
        compiler_params=pltpu.CompilerParams(
            dimension_semantics=("parallel",),
            vmem_limit_bytes=vmem_limit),
    )(x_nhwc, w1, b1, w2, b2, w3, b3, wt_k, bt_k)

    # boundary glue: xs^T is already NCHW up to a free reshape; up needs the
    # 2x2 parity interleave (cheap XLA op on the small result).
    xs = xs_g.reshape(B, out_c, H, W)
    up = (up_g.reshape(B, 2, 2, cup, H, W)
              .transpose(0, 3, 4, 1, 5, 2)
              .reshape(B, cup, 2 * H, 2 * W))
    return up, xs


# ----------------------------------------------------------------------------
# Deterministic synthetic parameters matching the PyTorch module shapes.
# ----------------------------------------------------------------------------
def init_params(key, in_c, out_c):
    def conv_bn(k, cin, cout):
        ks = jax.random.split(k, 6)
        return dict(
            w=jax.random.normal(ks[0], (cout, cin, 3, 3), jnp.float32) * 0.2,
            b=jax.random.normal(ks[1], (cout,), jnp.float32) * 0.1,
            gamma=1.0 + 0.1 * jax.random.normal(ks[2], (cout,), jnp.float32),
            beta=0.1 * jax.random.normal(ks[3], (cout,), jnp.float32),
            mean=0.1 * jax.random.normal(ks[4], (cout,), jnp.float32),
            var=jax.random.uniform(ks[5], (cout,), jnp.float32, 0.5, 1.5),
        )
    k1, k2, k3, k4, k5 = jax.random.split(key, 5)
    return dict(
        c1=conv_bn(k1, in_c, out_c),
        c2=conv_bn(k2, out_c, out_c),
        c3=conv_bn(k3, out_c, out_c),
        up=dict(
            w=jax.random.normal(k4, (out_c, out_c // 2, 2, 2), jnp.float32) * 0.2,
            b=jax.random.normal(k5, (out_c // 2,), jnp.float32) * 0.1,
        ),
    )


# ----------------------------------------------------------------------------
# Pure-JAX f32 NCHW reference mirroring the PyTorch forward (for validation).
# ----------------------------------------------------------------------------
def reference_forward(x, params):
    def conv_bn_relu(h, p):
        z = lax.conv_general_dilated(
            h, p["w"], window_strides=(1, 1), padding=((1, 1), (1, 1)),
            dimension_numbers=("NCHW", "OIHW", "NCHW"), precision=_HIGHEST)
        z = z + p["b"][None, :, None, None]
        scale = p["gamma"] / jnp.sqrt(p["var"] + _EPS)
        z = (z - p["mean"][None, :, None, None]) * scale[None, :, None, None] \
            + p["beta"][None, :, None, None]
        return jnp.maximum(z, 0.0)

    h1 = conv_bn_relu(x, params["c1"])
    h2 = conv_bn_relu(h1, params["c2"])
    h3 = conv_bn_relu(h2, params["c3"])
    xs = h3 + h1

    wt, bt = params["up"]["w"], params["up"]["b"]
    B, _, H, W = xs.shape
    cup = wt.shape[1]
    per = jnp.einsum("bchw,cuij->bijuhw", xs, wt, precision=_HIGHEST)
    up = jnp.zeros((B, cup, 2 * H, 2 * W), xs.dtype)
    up = up.at[:, :, 0::2, 0::2].set(per[:, 0, 0])
    up = up.at[:, :, 0::2, 1::2].set(per[:, 0, 1])
    up = up.at[:, :, 1::2, 0::2].set(per[:, 1, 0])
    up = up.at[:, :, 1::2, 1::2].set(per[:, 1, 1])
    up = up + bt[None, :, None, None]
    return up, xs


if __name__ == "__main__":
    key = jax.random.PRNGKey(0)
    kx, kp = jax.random.split(key)

    B, in_c, out_c = 2, 4, 8
    H = W = 16

    x = jax.random.normal(kx, (B, in_c, H, W), jnp.float32)
    params = init_params(kp, in_c, out_c)

    up, xs = my_mid_block_forward(x, params)
    jax.block_until_ready((up, xs))

    up_ref, xs_ref = reference_forward(x, params)
    assert up.shape == (B, out_c // 2, 2 * H, 2 * W), up.shape
    assert xs.shape == (B, out_c, H, W), xs.shape
    # Kernel matmuls use bf16 operands with f32 accumulation (native MXU rate),
    # so compare against the f32 reference with bf16-appropriate tolerances.
    assert jnp.allclose(xs, xs_ref, atol=5e-2, rtol=2e-2), float(
        jnp.max(jnp.abs(xs - xs_ref)))
    assert jnp.allclose(up, up_ref, atol=5e-2, rtol=2e-2), float(
        jnp.max(jnp.abs(up - up_ref)))
    print("KERNEL_OK")
</pallas_src>

<mosaic_0001>
module attributes {stable_mosaic.version = 11 : i64} {
  func.func @_mid_block_kernel(%arg0: i32, %arg1: memref<1x16x16x4xf32, #tpu.memory_space<vmem>>, %arg2: memref<36x8xbf16, #tpu.memory_space<vmem>>, %arg3: memref<1x8xf32, #tpu.memory_space<vmem>>, %arg4: memref<72x8xbf16, #tpu.memory_space<vmem>>, %arg5: memref<1x8xf32, #tpu.memory_space<vmem>>, %arg6: memref<72x8xbf16, #tpu.memory_space<vmem>>, %arg7: memref<1x8xf32, #tpu.memory_space<vmem>>, %arg8: memref<16x8xbf16, #tpu.memory_space<vmem>>, %arg9: memref<16x1xf32, #tpu.memory_space<vmem>>, %arg10: memref<1x16x256xf32, #tpu.memory_space<vmem>>, %arg11: memref<1x8x256xf32, #tpu.memory_space<vmem>>, %arg12: memref<18x32x8xf32, #tpu.memory_space<vmem>>) attributes {dimension_semantics = [#tpu.dimension_semantics<parallel>], iteration_bounds = array<i64: 2>, scalar_prefetch = 0 : i64, scratch_operands = 1 : i64, tpu.core_type = #tpu.core_type<tc>, window_params = [{transform_indices = @transform_0, window_bounds = array<i64: 1, 16, 16, 4>}, {pipeline_mode = #tpu.pipeline_mode<synchronous>, transform_indices = @transform_1, window_bounds = array<i64: 36, 8>}, {pipeline_mode = #tpu.pipeline_mode<synchronous>, transform_indices = @transform_2, window_bounds = array<i64: 1, 8>}, {pipeline_mode = #tpu.pipeline_mode<synchronous>, transform_indices = @transform_3, window_bounds = array<i64: 72, 8>}, {pipeline_mode = #tpu.pipeline_mode<synchronous>, transform_indices = @transform_4, window_bounds = array<i64: 1, 8>}, {pipeline_mode = #tpu.pipeline_mode<synchronous>, transform_indices = @transform_5, window_bounds = array<i64: 72, 8>}, {pipeline_mode = #tpu.pipeline_mode<synchronous>, transform_indices = @transform_6, window_bounds = array<i64: 1, 8>}, {pipeline_mode = #tpu.pipeline_mode<synchronous>, transform_indices = @transform_7, window_bounds = array<i64: 16, 8>}, {pipeline_mode = #tpu.pipeline_mode<synchronous>, transform_indices = @transform_8, window_bounds = array<i64: 16, 1>}, {transform_indices = @transform_9, window_bounds = array<i64: 1, 16, 256>}, {transform_indices = @transform_10, window_bounds = array<i64: 1, 8, 256>}]} {
    %cst = arith.constant 0.000000e+00 : f32
    %0 = vector.broadcast %cst : f32 to vector<18x1x8xf32>
    %cst_0 = arith.constant 0.000000e+00 : f32
    %1 = vector.broadcast %cst_0 : f32 to vector<1x16x8xf32>
    %c0 = arith.constant 0 : index
    %c7 = arith.constant 7 : index
    %c0_1 = arith.constant 0 : index
    %2 = vector.load %arg12[%c0, %c7, %c0_1] : memref<18x32x8xf32, #tpu.memory_space<vmem>>, vector<18x1x8xf32>
    tpu.vector_store %arg12[%c0, %c7, %c0_1], %0 {strides = array<i32>} : memref<18x32x8xf32, #tpu.memory_space<vmem>>, vector<18x1x8xf32>,
    %c0_2 = arith.constant 0 : index
    %c24 = arith.constant 24 : index
    %c0_3 = arith.constant 0 : index
    %3 = vector.load %arg12[%c0_2, %c24, %c0_3] : memref<18x32x8xf32, #tpu.memory_space<vmem>>, vector<18x1x8xf32>
    tpu.vector_store %arg12[%c0_2, %c24, %c0_3], %0 {strides = array<i32>} : memref<18x32x8xf32, #tpu.memory_space<vmem>>, vector<18x1x8xf32>,
    %c0_4 = arith.constant 0 : index
    %c8 = arith.constant 8 : index
    %c0_5 = arith.constant 0 : index
    %4 = vector.load %arg12[%c0_4, %c8, %c0_5] : memref<18x32x8xf32, #tpu.memory_space<vmem>>, vector<1x16x8xf32>
    tpu.vector_store %arg12[%c0_4, %c8, %c0_5], %1 {strides = array<i32>} : memref<18x32x8xf32, #tpu.memory_space<vmem>>, vector<1x16x8xf32>,
    %c17 = arith.constant 17 : index
    %c8_6 = arith.constant 8 : index
    %c0_7 = arith.constant 0 : index
    %5 = vector.load %arg12[%c17, %c8_6, %c0_7] : memref<18x32x8xf32, #tpu.memory_space<vmem>>, vector<1x16x8xf32>
    tpu.vector_store %arg12[%c17, %c8_6, %c0_7], %1 {strides = array<i32>} : memref<18x32x8xf32, #tpu.memory_space<vmem>>, vector<1x16x8xf32>,
    %c0_8 = arith.constant 0 : index
    %c0_9 = arith.constant 0 : index
    %c0_10 = arith.constant 0 : index
    %c0_11 = arith.constant 0 : index
    %6 = vector.load %arg1[%c0_8, %c0_9, %c0_10, %c0_11] : memref<1x16x16x4xf32, #tpu.memory_space<vmem>>, vector<1x16x16x4xf32>
    %7 = vector.shape_cast %6 : vector<1x16x16x4xf32> to vector<16x16x4xf32>
    %c1 = arith.constant 1 : index
    %c8_12 = arith.constant 8 : index
    %c0_13 = arith.constant 0 : index
    %8 = vector.load %arg12[%c1, %c8_12, %c0_13] : memref<18x32x8xf32, #tpu.memory_space<vmem>>, vector<16x16x4xf32>
    tpu.vector_store %arg12[%c1, %c8_12, %c0_13], %7 {strides = array<i32>} : memref<18x32x8xf32, #tpu.memory_space<vmem>>, vector<16x16x4xf32>,
    %c0_14 = arith.constant 0 : index
    %c7_15 = arith.constant 7 : index
    %c0_16 = arith.constant 0 : index
    %9 = vector.load %arg12[%c0_14, %c7_15, %c0_16] : memref<18x32x8xf32, #tpu.memory_space<vmem>>, vector<18x16x4xf32>
    %c0_17 = arith.constant 0 : index
    %c8_18 = arith.constant 8 : index
    %c0_19 = arith.constant 0 : index
    %10 = vector.load %arg12[%c0_17, %c8_18, %c0_19] : memref<18x32x8xf32, #tpu.memory_space<vmem>>, vector<18x16x4xf32>
    %c0_20 = arith.constant 0 : index
    %c9 = arith.constant 9 : index
    %c0_21 = arith.constant 0 : index
    %11 = vector.load %arg12[%c0_20, %c9, %c0_21] : memref<18x32x8xf32, #tpu.memory_space<vmem>>, vector<18x16x4xf32>
    %12 = tpu.concatenate %9, %10, %11 in 2 : vector<18x16x4xf32>, vector<18x16x4xf32>, vector<18x16x4xf32> -> vector<18x16x12xf32>
    %13 = vector.extract_strided_slice %12 {offsets = [0, 0, 0], sizes = [16, 16, 12], strides = [1, 1, 1]} : vector<18x16x12xf32> to vector<16x16x12xf32>
    %14 = vector.extract_strided_slice %12 {offsets = [1, 0, 0], sizes = [16, 16, 12], strides = [1, 1, 1]} : vector<18x16x12xf32> to vector<16x16x12xf32>
    %15 = vector.extract_strided_slice %12 {offsets = [2, 0, 0], sizes = [16, 16, 12], strides = [1, 1, 1]} : vector<18x16x12xf32> to vector<16x16x12xf32>
    %16 = tpu.concatenate %13, %14, %15 in 2 : vector<16x16x12xf32>, vector<16x16x12xf32>, vector<16x16x12xf32> -> vector<16x16x36xf32>
    %17 = vector.shape_cast %16 : vector<16x16x36xf32> to vector<256x36xf32>
    %18 = arith.truncf %17 : vector<256x36xf32> to vector<256x36xbf16>
    %c0_22 = arith.constant 0 : index
    %c0_23 = arith.constant 0 : index
    %19 = vector.load %arg2[%c0_22, %c0_23] : memref<36x8xbf16, #tpu.memory_space<vmem>>, vector<36x8xbf16>
    %cst_24 = arith.constant dense<0.000000e+00> : vector<256x8xf32>
    %20 = tpu.matmul %18, %19, %cst_24 {dimension_numbers = #tpu.dot_dimension_numbers<[1], [0], [0], [1], [0, 0, 1, 1], [], []>} : vector<256x36xbf16>, vector<36x8xbf16>, vector<256x8xf32> -> vector<256x8xf32>
    %c0_25 = arith.constant 0 : index
    %c0_26 = arith.constant 0 : index
    %21 = vector.load %arg3[%c0_25, %c0_26] : memref<1x8xf32, #tpu.memory_space<vmem>>, vector<1x8xf32>
    %22 = vector.broadcast %21 : vector<1x8xf32> to vector<256x8xf32>
    %23 = arith.addf %20, %22 : vector<256x8xf32>
    %cst_27 = arith.constant 0.000000e+00 : f32
    %24 = vector.broadcast %cst_27 : f32 to vector<256x8xf32>
    %25 = arith.maximumf %23, %24 : vector<256x8xf32>
    %26 = vector.shape_cast %25 : vector<256x8xf32> to vector<16x16x8xf32>
    %c1_28 = arith.constant 1 : index
    %c8_29 = arith.constant 8 : index
    %c0_30 = arith.constant 0 : index
    %27 = vector.load %arg12[%c1_28, %c8_29, %c0_30] : memref<18x32x8xf32, #tpu.memory_space<vmem>>, vector<16x16x8xf32>
    tpu.vector_store %arg12[%c1_28, %c8_29, %c0_30], %26 {strides = array<i32>} : memref<18x32x8xf32, #tpu.memory_space<vmem>>, vector<16x16x8xf32>,
    %c0_31 = arith.constant 0 : index
    %c7_32 = arith.constant 7 : index
    %c0_33 = arith.constant 0 : index
    %28 = vector.load %arg12[%c0_31, %c7_32, %c0_33] : memref<18x32x8xf32, #tpu.memory_space<vmem>>, vector<18x16x8xf32>
    %c0_34 = arith.constant 0 : index
    %c8_35 = arith.constant 8 : index
    %c0_36 = arith.constant 0 : index
    %29 = vector.load %arg12[%c0_34, %c8_35, %c0_36] : memref<18x32x8xf32, #tpu.memory_space<vmem>>, vector<18x16x8xf32>
    %c0_37 = arith.constant 0 : index
    %c9_38 = arith.constant 9 : index
    %c0_39 = arith.constant 0 : index
    %30 = vector.load %arg12[%c0_37, %c9_38, %c0_39] : memref<18x32x8xf32, #tpu.memory_space<vmem>>, vector<18x16x8xf32>
    %31 = tpu.concatenate %28, %29, %30 in 2 : vector<18x16x8xf32>, vector<18x16x8xf32>, vector<18x16x8xf32> -> vector<18x16x24xf32>
    %32 = vector.extract_strided_slice %31 {offsets = [0, 0, 0], sizes = [16, 16, 24], strides = [1, 1, 1]} : vector<18x16x24xf32> to vector<16x16x24xf32>
    %33 = vector.extract_strided_slice %31 {offsets = [1, 0, 0], sizes = [16, 16, 24], strides = [1, 1, 1]} : vector<18x16x24xf32> to vector<16x16x24xf32>
    %34 = vector.extract_strided_slice %31 {offsets = [2, 0, 0], sizes = [16, 16, 24], strides = [1, 1, 1]} : vector<18x16x24xf32> to vector<16x16x24xf32>
    %35 = tpu.concatenate %32, %33, %34 in 2 : vector<16x16x24xf32>, vector<16x16x24xf32>, vector<16x16x24xf32> -> vector<16x16x72xf32>
    %36 = vector.shape_cast %35 : vector<16x16x72xf32> to vector<256x72xf32>
    %37 = arith.truncf %36 : vector<256x72xf32> to vector<256x72xbf16>
    %c0_40 = arith.constant 0 : index
    %c0_41 = arith.constant 0 : index
    %38 = vector.load %arg4[%c0_40, %c0_41] : memref<72x8xbf16, #tpu.memory_space<vmem>>, vector<72x8xbf16>
    %cst_42 = arith.constant dense<0.000000e+00> : vector<256x8xf32>
    %39 = tpu.matmul %37, %38, %cst_42 {dimension_numbers = #tpu.dot_dimension_numbers<[1], [0], [0], [1], [0, 0, 1, 1], [], []>} : vector<256x72xbf16>, vector<72x8xbf16>, vector<256x8xf32> -> vector<256x8xf32>
    %c0_43 = arith.constant 0 : index
    %c0_44 = arith.constant 0 : index
    %40 = vector.load %arg5[%c0_43, %c0_44] : memref<1x8xf32, #tpu.memory_space<vmem>>, vector<1x8xf32>
    %41 = vector.broadcast %40 : vector<1x8xf32> to vector<256x8xf32>
    %42 = arith.addf %39, %41 : vector<256x8xf32>
    %cst_45 = arith.constant 0.000000e+00 : f32
    %43 = vector.broadcast %cst_45 : f32 to vector<256x8xf32>
    %44 = arith.maximumf %42, %43 : vector<256x8xf32>
    %45 = vector.shape_cast %44 : vector<256x8xf32> to vector<16x16x8xf32>
    %c1_46 = arith.constant 1 : index
    %c8_47 = arith.constant 8 : index
    %c0_48 = arith.constant 0 : index
    %46 = vector.load %arg12[%c1_46, %c8_47, %c0_48] : memref<18x32x8xf32, #tpu.memory_space<vmem>>, vector<16x16x8xf32>
    tpu.vector_store %arg12[%c1_46, %c8_47, %c0_48], %45 {strides = array<i32>} : memref<18x32x8xf32, #tpu.memory_space<vmem>>, vector<16x16x8xf32>,
    %c0_49 = arith.constant 0 : index
    %c7_50 = arith.constant 7 : index
    %c0_51 = arith.constant 0 : index
    %47 = vector.load %arg12[%c0_49, %c7_50, %c0_51] : memref<18x32x8xf32, #tpu.memory_space<vmem>>, vector<18x16x8xf32>
    %c0_52 = arith.constant 0 : index
    %c8_53 = arith.constant 8 : index
    %c0_54 = arith.constant 0 : index
    %48 = vector.load %arg12[%c0_52, %c8_53, %c0_54] : memref<18x32x8xf32, #tpu.memory_space<vmem>>, vector<18x16x8xf32>
    %c0_55 = arith.constant 0 : index
    %c9_56 = arith.constant 9 : index
    %c0_57 = arith.constant 0 : index
    %49 = vector.load %arg12[%c0_55, %c9_56, %c0_57] : memref<18x32x8xf32, #tpu.memory_space<vmem>>, vector<18x16x8xf32>
    %50 = tpu.concatenate %47, %48, %49 in 2 : vector<18x16x8xf32>, vector<18x16x8xf32>, vector<18x16x8xf32> -> vector<18x16x24xf32>
    %51 = vector.extract_strided_slice %50 {offsets = [0, 0, 0], sizes = [16, 16, 24], strides = [1, 1, 1]} : vector<18x16x24xf32> to vector<16x16x24xf32>
    %52 = vector.extract_strided_slice %50 {offsets = [1, 0, 0], sizes = [16, 16, 24], strides = [1, 1, 1]} : vector<18x16x24xf32> to vector<16x16x24xf32>
    %53 = vector.extract_strided_slice %50 {offsets = [2, 0, 0], sizes = [16, 16, 24], strides = [1, 1, 1]} : vector<18x16x24xf32> to vector<16x16x24xf32>
    %54 = tpu.concatenate %51, %52, %53 in 2 : vector<16x16x24xf32>, vector<16x16x24xf32>, vector<16x16x24xf32> -> vector<16x16x72xf32>
    %55 = vector.shape_cast %54 : vector<16x16x72xf32> to vector<256x72xf32>
    %56 = arith.truncf %55 : vector<256x72xf32> to vector<256x72xbf16>
    %c0_58 = arith.constant 0 : index
    %c0_59 = arith.constant 0 : index
    %57 = vector.load %arg6[%c0_58, %c0_59] : memref<72x8xbf16, #tpu.memory_space<vmem>>, vector<72x8xbf16>
    %cst_60 = arith.constant dense<0.000000e+00> : vector<256x8xf32>
    %58 = tpu.matmul %56, %57, %cst_60 {dimension_numbers = #tpu.dot_dimension_numbers<[1], [0], [0], [1], [0, 0, 1, 1], [], []>} : vector<256x72xbf16>, vector<72x8xbf16>, vector<256x8xf32> -> vector<256x8xf32>
    %c0_61 = arith.constant 0 : index
    %c0_62 = arith.constant 0 : index
    %59 = vector.load %arg7[%c0_61, %c0_62] : memref<1x8xf32, #tpu.memory_space<vmem>>, vector<1x8xf32>
    %60 = vector.broadcast %59 : vector<1x8xf32> to vector<256x8xf32>
    %61 = arith.addf %58, %60 : vector<256x8xf32>
    %cst_63 = arith.constant 0.000000e+00 : f32
    %62 = vector.broadcast %cst_63 : f32 to vector<256x8xf32>
    %63 = arith.maximumf %61, %62 : vector<256x8xf32>
    %64 = arith.addf %63, %25 : vector<256x8xf32>
    %65 = arith.truncf %64 : vector<256x8xf32> to vector<256x8xbf16>
    %66 = tpu.iota {dimensions = array<i32: 0>} : vector<8x8xi32>
    %67 = tpu.iota {dimensions = array<i32: 1>} : vector<8x8xi32>
    %68 = arith.cmpi eq, %66, %67 : vector<8x8xi32>
    %69 = arith.extui %68 : vector<8x8xi1> to vector<8x8xi32>
    %70 = arith.sitofp %69 : vector<8x8xi32> to vector<8x8xf32>
    %71 = arith.truncf %70 : vector<8x8xf32> to vector<8x8xbf16>
    %cst_64 = arith.constant dense<0.000000e+00> : vector<8x256xf32>
    %72 = tpu.matmul %71, %65, %cst_64 {dimension_numbers = #tpu.dot_dimension_numbers<[1], [1], [0], [0], [0, 0, 1, 0], [], []>} : vector<8x8xbf16>, vector<256x8xbf16>, vector<8x256xf32> -> vector<8x256xf32>
    %c0_65 = arith.constant 0 : index
    %c0_66 = arith.constant 0 : index
    %c0_67 = arith.constant 0 : index
    %73 = vector.load %arg11[%c0_65, %c0_66, %c0_67] : memref<1x8x256xf32, #tpu.memory_space<vmem>>, vector<1x8x256xf32>
    %74 = vector.shape_cast %73 : vector<1x8x256xf32> to vector<8x256xf32>
    %75 = vector.shape_cast %72 : vector<8x256xf32> to vector<1x8x256xf32>
    tpu.vector_store %arg11[%c0_65, %c0_66, %c0_67], %75 {strides = array<i32>} : memref<1x8x256xf32, #tpu.memory_space<vmem>>, vector<1x8x256xf32>,
    %c0_68 = arith.constant 0 : index
    %c0_69 = arith.constant 0 : index
    %76 = vector.load %arg8[%c0_68, %c0_69] : memref<16x8xbf16, #tpu.memory_space<vmem>>, vector<16x8xbf16>
    %cst_70 = arith.constant dense<0.000000e+00> : vector<16x256xf32>
    %77 = tpu.matmul %76, %65, %cst_70 {dimension_numbers = #tpu.dot_dimension_numbers<[1], [1], [0], [0], [0, 0, 1, 0], [], []>} : vector<16x8xbf16>, vector<256x8xbf16>, vector<16x256xf32> -> vector<16x256xf32>
    %c0_71 = arith.constant 0 : index
    %c0_72 = arith.constant 0 : index
    %78 = vector.load %arg9[%c0_71, %c0_72] : memref<16x1xf32, #tpu.memory_space<vmem>>, vector<16x1xf32>
    %79 = vector.broadcast %78 : vector<16x1xf32> to vector<16x256xf32>
    %80 = arith.addf %77, %79 : vector<16x256xf32>
    %c0_73 = arith.constant 0 : index
    %c0_74 = arith.constant 0 : index
    %c0_75 = arith.constant 0 : index
    %81 = vector.load %arg10[%c0_73, %c0_74, %c0_75] : memref<1x16x256xf32, #tpu.memory_space<vmem>>, vector<1x16x256xf32>
    %82 = vector.shape_cast %81 : vector<1x16x256xf32> to vector<16x256xf32>
    %83 = vector.shape_cast %80 : vector<16x256xf32> to vector<1x16x256xf32>
    tpu.vector_store %arg10[%c0_73, %c0_74, %c0_75], %83 {strides = array<i32>} : memref<1x16x256xf32, #tpu.memory_space<vmem>>, vector<1x16x256xf32>,
    return
  }
  func.func @transform_0(%arg0: i32) -> (i32, i32, i32, i32) {
    %c0_i32 = arith.constant 0 : i32
    %c0_i32_0 = arith.constant 0 : i32
    %c0_i32_1 = arith.constant 0 : i32
    %c0_i32_2 = arith.constant 0 : i32
    return %arg0, %c0_i32, %c0_i32_0, %c0_i32_1 : i32, i32, i32, i32
  }
  func.func @transform_1(%arg0: i32) -> (i32, i32) {
    %c0_i32 = arith.constant 0 : i32
    %c0_i32_0 = arith.constant 0 : i32
    %c0_i32_1 = arith.constant 0 : i32
    return %c0_i32, %c0_i32_0 : i32, i32
  }
  func.func @transform_2(%arg0: i32) -> (i32, i32) {
    %c0_i32 = arith.constant 0 : i32
    %c0_i32_0 = arith.constant 0 : i32
    %c0_i32_1 = arith.constant 0 : i32
    return %c0_i32, %c0_i32_0 : i32, i32
  }
  func.func @transform_3(%arg0: i32) -> (i32, i32) {
    %c0_i32 = arith.constant 0 : i32
    %c0_i32_0 = arith.constant 0 : i32
    %c0_i32_1 = arith.constant 0 : i32
    return %c0_i32, %c0_i32_0 : i32, i32
  }
  func.func @transform_4(%arg0: i32) -> (i32, i32) {
    %c0_i32 = arith.constant 0 : i32
    %c0_i32_0 = arith.constant 0 : i32
    %c0_i32_1 = arith.constant 0 : i32
    return %c0_i32, %c0_i32_0 : i32, i32
  }
  func.func @transform_5(%arg0: i32) -> (i32, i32) {
    %c0_i32 = arith.constant 0 : i32
    %c0_i32_0 = arith.constant 0 : i32
    %c0_i32_1 = arith.constant 0 : i32
    return %c0_i32, %c0_i32_0 : i32, i32
  }
  func.func @transform_6(%arg0: i32) -> (i32, i32) {
    %c0_i32 = arith.constant 0 : i32
    %c0_i32_0 = arith.constant 0 : i32
    %c0_i32_1 = arith.constant 0 : i32
    return %c0_i32, %c0_i32_0 : i32, i32
  }
  func.func @transform_7(%arg0: i32) -> (i32, i32) {
    %c0_i32 = arith.constant 0 : i32
    %c0_i32_0 = arith.constant 0 : i32
    %c0_i32_1 = arith.constant 0 : i32
    return %c0_i32, %c0_i32_0 : i32, i32
  }
  func.func @transform_8(%arg0: i32) -> (i32, i32) {
    %c0_i32 = arith.constant 0 : i32
    %c0_i32_0 = arith.constant 0 : i32
    %c0_i32_1 = arith.constant 0 : i32
    return %c0_i32, %c0_i32_0 : i32, i32
  }
  func.func @transform_9(%arg0: i32) -> (i32, i32, i32) {
    %c0_i32 = arith.constant 0 : i32
    %c0_i32_0 = arith.constant 0 : i32
    %c0_i32_1 = arith.constant 0 : i32
    return %arg0, %c0_i32, %c0_i32_0 : i32, i32, i32
  }
  func.func @transform_10(%arg0: i32) -> (i32, i32, i32) {
    %c0_i32 = arith.constant 0 : i32
    %c0_i32_0 = arith.constant 0 : i32
    %c0_i32_1 = arith.constant 0 : i32
    return %arg0, %c0_i32, %c0_i32_0 : i32, i32, i32
  }
}

</mosaic_0001>

<llo_original>
// kernel: tpu_custom_call.1
$region0: #{tpu_custom_call.1}
  #allocation0 [shape = 'u32[]', space=smem, size = 0x4, offset = 0x4, fixed_abs, tag = 'smem constant byte address 0x4 - core index']
  #allocation1 [shape = 'u32[144,128]{1,0:T(1,128)}', space=vmem, size = 0x12000, scoped, tag = 'internal scratch']
  #allocation2 [shape = 'f32[18,32,8]{2,1,0:T(8,128)}', space=vmem, size = 0x48000, scoped, tag = 'scratch operand']
  %s0 = inlined_call_operand.vmem [shape: f32[2,16,16,4], index: 0, kind: input, shape index: {}]
  %s1 = inlined_call_operand.vmem [shape: bf16[36,8], index: 1, kind: input, shape index: {}]
  %s2 = inlined_call_operand.vmem [shape: f32[1,8], index: 2, kind: input, shape index: {}]
  %s3 = inlined_call_operand.vmem [shape: bf16[72,8], index: 3, kind: input, shape index: {}]
  %s4 = inlined_call_operand.vmem [shape: f32[1,8], index: 4, kind: input, shape index: {}]
  %s5 = inlined_call_operand.vmem [shape: bf16[72,8], index: 5, kind: input, shape index: {}]
  %s6 = inlined_call_operand.vmem [shape: f32[1,8], index: 6, kind: input, shape index: {}]
  %s7 = inlined_call_operand.vmem [shape: bf16[16,8], index: 7, kind: input, shape index: {}]
  %s8 = inlined_call_operand.vmem [shape: f32[16,1], index: 8, kind: input, shape index: {}]
  %s9 = inlined_call_operand.hbm [shape: f32[2,16,256], index: 9, kind: output, shape index: {0}]
  %s10 = inlined_call_operand.hbm [shape: f32[2,8,256], index: 10, kind: output, shape index: {1}]
  %11 = xla_tuple %s9, %s10
  %s12 = sld [smem:[#allocation0]]
  $region77: #{tpu_custom_call.1} parent=0
    _
  %s14 = ssub.s32 1, %s12
  %s15 = scalar_select 0, %s14, %s12
  $region1: #{tpu_custom_call.1} parent=0
    #allocation3 [shape = 'u8[32768]{0}', space=vmem, size = 0x8000, scoped, tag = 'output window, operand 0']
    #allocation4 [shape = 's32[2]{0}', space=sflag, size = 0x8, scoped, tag = 'scoped memory for tpu_custom_call.1']
    #allocation5 [shape = 'u8[16384]{0}', space=vmem, size = 0x4000, scoped, tag = 'output window, operand 1']
    #allocation6 [shape = 's32[2]{0}', space=sflag, size = 0x8, scoped, tag = 'scoped memory for tpu_custom_call.1']
    %16 = vsyncpa [#allocation4], 0
    %s17 = scalar_lea.sflag [#allocation4], 1
    %18 = vsyncpa %s17, 0
    %19 = vsyncpa [#allocation6], 0
    %s20 = scalar_lea.sflag [#allocation6], 1
    %21 = vsyncpa %s20, 0
    loop: start=0, step=1, limit=4
    $region2: #{tpu_custom_call.1} parent=1 // loop_pre_header
      _
    $region3: #{tpu_custom_call.1} parent=1 // loop_header
      %s23 = sphi 0, %s27
      %p24 = scmp.ge.s32.totalorder %s23, 4
      %s33 = sphi 0, %s35
      %s36 = sphi 0, %s33
      %s37 = sphi 0, %s36
      %s53 = sphi 0, %s37
      %s57 = sphi 0, %s57
      %s59 = sphi 0, %s57
      %s60 = sphi 0, %s59
      %s74 = sphi 0, %s60
      %s78 = sphi 0, %s78
      %s80 = sphi 0, %s78
      %s81 = sphi 0, %s80
      %s95 = sphi 0, %s81
      %s99 = sphi 0, %s99
      %s101 = sphi 0, %s99
      %s102 = sphi 0, %s101
      %s116 = sphi 0, %s102
      %s120 = sphi 0, %s120
      %s122 = sphi 0, %s120
      %s123 = sphi 0, %s122
      %s137 = sphi 0, %s123
      %s141 = sphi 0, %s141
      %s143 = sphi 0, %s141
      %s144 = sphi 0, %s143
      %s158 = sphi 0, %s144
      %s162 = sphi 0, %s162
      %s164 = sphi 0, %s162
      %s165 = sphi 0, %s164
      %s179 = sphi 0, %s165
      %s183 = sphi 0, %s183
      %s185 = sphi 0, %s183
      %s186 = sphi 0, %s185
      %s200 = sphi 0, %s186
      %s204 = sphi 0, %s204
      %s206 = sphi 0, %s204
      %s207 = sphi 0, %s206
      %s221 = sphi 0, %s207
      %s227 = sphi 0, %s229
      %s230 = sphi 0, %s227
      %s231 = sphi 0, %s230
      %s247 = sphi 0, %s231
      %s253 = sphi 0, %s255
      %s256 = sphi 0, %s253
      %s257 = sphi 0, %s256
      %s273 = sphi 0, %s257
    $region4: #{tpu_custom_call.1} parent=1 // loop_header_branch
      %26 = sbr.rel (%p24) target = $region8
    $region5: #{tpu_custom_call.1} parent=1 // loop_body
      %s28 = ssub.s32 %s23, 1
      %s29 = ssub.s32 %s23, 2
      %s30 = sadd.s32 %s23, 1
      %s31 = ssub.s32 %s23, %s30
      %p32 = scmp.eq.s32.totalorder %s31, 0
      %s34 = sadd.s32 %s33, 1
      %s35 = scalar_select %p32, %s33, %s34
      %p38 = pneg %p32
      %p39 = scmp.eq.s32.totalorder %s23, 1
      %p40 = por %p38, %p39
      %p41 = scmp.ne.s32.totalorder %s33, %s36
      %p42 = scmp.eq.s32.totalorder %s23, 0
      %p43 = por %p41, %p42
      %p44 = scmp.ne.s32.totalorder %s33, %s36
      %p45 = scmp.eq.s32.totalorder %s28, 1
      %p46 = por %p44, %p45
      %p47 = scmp.ne.s32.totalorder %s36, %s37
      %p48 = scmp.eq.s32.totalorder %s28, 0
      %p49 = por %p47, %p48
      %p50 = scmp.ne.s32.totalorder %s36, %s37
      %p51 = scmp.eq.s32.totalorder %s29, 1
      %p52 = por %p50, %p51
      %p54 = scmp.ne.s32.totalorder %s37, %s53
      %p55 = scmp.eq.s32.totalorder %s29, 0
      %p56 = por %p54, %p55
      %s58 = sadd.s32 %s57, 1
      %p61 = scmp.eq.s32.totalorder %s23, 1
      %p62 = scmp.ne.s32.totalorder %s57, %s59
      %p63 = scmp.eq.s32.totalorder %s23, 0
      %p64 = por %p62, %p63
      %p65 = scmp.ne.s32.totalorder %s57, %s59
      %p66 = scmp.eq.s32.totalorder %s28, 1
      %p67 = por %p65, %p66
      %p68 = scmp.ne.s32.totalorder %s59, %s60
      %p69 = scmp.eq.s32.totalorder %s28, 0
      %p70 = por %p68, %p69
      %p71 = scmp.ne.s32.totalorder %s59, %s60
      %p72 = scmp.eq.s32.totalorder %s29, 1
      %p73 = por %p71, %p72
      %p75 = scmp.ne.s32.totalorder %s60, %s74
      %p76 = scmp.eq.s32.totalorder %s29, 0
      %p77 = por %p75, %p76
      %s79 = sadd.s32 %s78, 1
      %p82 = scmp.eq.s32.totalorder %s23, 1
      %p83 = scmp.ne.s32.totalorder %s78, %s80
      %p84 = scmp.eq.s32.totalorder %s23, 0
      %p85 = por %p83, %p84
      %p86 = scmp.ne.s32.totalorder %s78, %s80
      %p87 = scmp.eq.s32.totalorder %s28, 1
      %p88 = por %p86, %p87
      %p89 = scmp.ne.s32.totalorder %s80, %s81
      %p90 = scmp.eq.s32.totalorder %s28, 0
      %p91 = por %p89, %p90
      %p92 = scmp.ne.s32.totalorder %s80, %s81
      %p93 = scmp.eq.s32.totalorder %s29, 1
      %p94 = por %p92, %p93
      %p96 = scmp.ne.s32.totalorder %s81, %s95
      %p97 = scmp.eq.s32.totalorder %s29, 0
      %p98 = por %p96, %p97
      %s100 = sadd.s32 %s99, 1
      %p103 = scmp.eq.s32.totalorder %s23, 1
      %p104 = scmp.ne.s32.totalorder %s99, %s101
      %p105 = scmp.eq.s32.totalorder %s23, 0
      %p106 = por %p104, %p105
      %p107 = scmp.ne.s32.totalorder %s99, %s101
      %p108 = scmp.eq.s32.totalorder %s28, 1
      %p109 = por %p107, %p108
      %p110 = scmp.ne.s32.totalorder %s101, %s102
      %p111 = scmp.eq.s32.totalorder %s28, 0
      %p112 = por %p110, %p111
      %p113 = scmp.ne.s32.totalorder %s101, %s102
      %p114 = scmp.eq.s32.totalorder %s29, 1
      %p115 = por %p113, %p114
      %p117 = scmp.ne.s32.totalorder %s102, %s116
      %p118 = scmp.eq.s32.totalorder %s29, 0
      %p119 = por %p117, %p118
      %s121 = sadd.s32 %s120, 1
      %p124 = scmp.eq.s32.totalorder %s23, 1
      %p125 = scmp.ne.s32.totalorder %s120, %s122
      %p126 = scmp.eq.s32.totalorder %s23, 0
      %p127 = por %p125, %p126
      %p128 = scmp.ne.s32.totalorder %s120, %s122
      %p129 = scmp.eq.s32.totalorder %s28, 1
      %p130 = por %p128, %p129
      %p131 = scmp.ne.s32.totalorder %s122, %s123
      %p132 = scmp.eq.s32.totalorder %s28, 0
      %p133 = por %p131, %p132
      %p134 = scmp.ne.s32.totalorder %s122, %s123
      %p135 = scmp.eq.s32.totalorder %s29, 1
      %p136 = por %p134, %p135
      %p138 = scmp.ne.s32.totalorder %s123, %s137
      %p139 = scmp.eq.s32.totalorder %s29, 0
      %p140 = por %p138, %p139
      %s142 = sadd.s32 %s141, 1
      %p145 = scmp.eq.s32.totalorder %s23, 1
      %p146 = scmp.ne.s32.totalorder %s141, %s143
      %p147 = scmp.eq.s32.totalorder %s23, 0
      %p148 = por %p146, %p147
      %p149 = scmp.ne.s32.totalorder %s141, %s143
      %p150 = scmp.eq.s32.totalorder %s28, 1
      %p151 = por %p149, %p150
      %p152 = scmp.ne.s32.totalorder %s143, %s144
      %p153 = scmp.eq.s32.totalorder %s28, 0
      %p154 = por %p152, %p153
      %p155 = scmp.ne.s32.totalorder %s143, %s144
      %p156 = scmp.eq.s32.totalorder %s29, 1
      %p157 = por %p155, %p156
      %p159 = scmp.ne.s32.totalorder %s144, %s158
      %p160 = scmp.eq.s32.totalorder %s29, 0
      %p161 = por %p159, %p160
      %s163 = sadd.s32 %s162, 1
      %p166 = scmp.eq.s32.totalorder %s23, 1
      %p167 = scmp.ne.s32.totalorder %s162, %s164
      %p168 = scmp.eq.s32.totalorder %s23, 0
      %p169 = por %p167, %p168
      %p170 = scmp.ne.s32.totalorder %s162, %s164
      %p171 = scmp.eq.s32.totalorder %s28, 1
      %p172 = por %p170, %p171
      %p173 = scmp.ne.s32.totalorder %s164, %s165
      %p174 = scmp.eq.s32.totalorder %s28, 0
      %p175 = por %p173, %p174
      %p176 = scmp.ne.s32.totalorder %s164, %s165
      %p177 = scmp.eq.s32.totalorder %s29, 1
      %p178 = por %p176, %p177
      %p180 = scmp.ne.s32.totalorder %s165, %s179
      %p181 = scmp.eq.s32.totalorder %s29, 0
      %p182 = por %p180, %p181
      %s184 = sadd.s32 %s183, 1
      %p187 = scmp.eq.s32.totalorder %s23, 1
      %p188 = scmp.ne.s32.totalorder %s183, %s185
      %p189 = scmp.eq.s32.totalorder %s23, 0
      %p190 = por %p188, %p189
      %p191 = scmp.ne.s32.totalorder %s183, %s185
      %p192 = scmp.eq.s32.totalorder %s28, 1
      %p193 = por %p191, %p192
      %p194 = scmp.ne.s32.totalorder %s185, %s186
      %p195 = scmp.eq.s32.totalorder %s28, 0
      %p196 = por %p194, %p195
      %p197 = scmp.ne.s32.totalorder %s185, %s186
      %p198 = scmp.eq.s32.totalorder %s29, 1
      %p199 = por %p197, %p198
      %p201 = scmp.ne.s32.totalorder %s186, %s200
      %p202 = scmp.eq.s32.totalorder %s29, 0
      %p203 = por %p201, %p202
      %s205 = sadd.s32 %s204, 1
      %p208 = scmp.eq.s32.totalorder %s23, 1
      %p209 = scmp.ne.s32.totalorder %s204, %s206
      %p210 = scmp.eq.s32.totalorder %s23, 0
      %p211 = por %p209, %p210
      %p212 = scmp.ne.s32.totalorder %s204, %s206
      %p213 = scmp.eq.s32.totalorder %s28, 1
      %p214 = por %p212, %p213
      %p215 = scmp.ne.s32.totalorder %s206, %s207
      %p216 = scmp.eq.s32.totalorder %s28, 0
      %p217 = por %p215, %p216
      %p218 = scmp.ne.s32.totalorder %s206, %s207
      %p219 = scmp.eq.s32.totalorder %s29, 1
      %p220 = por %p218, %p219
      %p222 = scmp.ne.s32.totalorder %s207, %s221
      %p223 = scmp.eq.s32.totalorder %s29, 0
      %p224 = por %p222, %p223
      %s225 = ssub.s32 %s23, %s30
      %p226 = scmp.eq.s32.totalorder %s225, 0
      %s228 = sadd.s32 %s227, 1
      %s229 = scalar_select %p226, %s227, %s228
      %p232 = pneg %p226
      %p233 = scmp.eq.s32.totalorder %s23, 1
      %p234 = por %p232, %p233
      %p235 = scmp.ne.s32.totalorder %s227, %s230
      %p236 = scmp.eq.s32.totalorder %s23, 0
      %p237 = por %p235, %p236
      %p238 = scmp.ne.s32.totalorder %s227, %s230
      %p239 = scmp.eq.s32.totalorder %s28, 1
      %p240 = por %p238, %p239
      %p241 = scmp.ne.s32.totalorder %s230, %s231
      %p242 = scmp.eq.s32.totalorder %s28, 0
      %p243 = por %p241, %p242
      %p244 = scmp.ne.s32.totalorder %s230, %s231
      %p245 = scmp.eq.s32.totalorder %s29, 1
      %p246 = por %p244, %p245
      %p248 = scmp.ne.s32.totalorder %s231, %s247
      %p249 = scmp.eq.s32.totalorder %s29, 0
      %p250 = por %p248, %p249
      %s251 = ssub.s32 %s23, %s30
      %p252 = scmp.eq.s32.totalorder %s251, 0
      %s254 = sadd.s32 %s253, 1
      %s255 = scalar_select %p252, %s253, %s254
      %p258 = pneg %p252
      %p259 = scmp.eq.s32.totalorder %s23, 1
      %p260 = por %p258, %p259
      %p261 = scmp.ne.s32.totalorder %s253, %s256
      %p262 = scmp.eq.s32.totalorder %s23, 0
      %p263 = por %p261, %p262
      %p264 = scmp.ne.s32.totalorder %s253, %s256
      %p265 = scmp.eq.s32.totalorder %s28, 1
      %p266 = por %p264, %p265
      %p267 = scmp.ne.s32.totalorder %s256, %s257
      %p268 = scmp.eq.s32.totalorder %s28, 0
      %p269 = por %p267, %p268
      %p270 = scmp.ne.s32.totalorder %s256, %s257
      %p271 = scmp.eq.s32.totalorder %s29, 1
      %p272 = por %p270, %p271
      %p274 = scmp.ne.s32.totalorder %s257, %s273
      %p275 = scmp.eq.s32.totalorder %s29, 0
      %p276 = por %p274, %p275
      %p277 = scmp.le.s32.totalorder 1, %s23
      %p278 = scmp.lt.s32.totalorder %s23, 3
      %p279 = pnand %p277, %p278
      %p280 = pneg %p279
      // Predicated region
      $region9: #{tpu_custom_call.1} parent=5 // pred_check
        _
      $region10: #{tpu_custom_call.1} parent=5 // pred_check_branch
        %282 = sbr.rel (%p279) target = $region12
      $region11: #{tpu_custom_call.1} parent=5 // pred_region
        %s283 = ssub.s32 %s23, 1
        // Predicated region
        $region13: #{tpu_custom_call.1} parent=11 // pred_check
          %p284 = pneg %p70
        $region14: #{tpu_custom_call.1} parent=11 // pred_check_branch
          %286 = sbr.rel (%p284) target = $region16
        $region15: #{tpu_custom_call.1} parent=11 // pred_region
          _
        $region16: #{tpu_custom_call.1} parent=11 // pred_fallthru
          _
        // Predicated region
        $region17: #{tpu_custom_call.1} parent=11 // pred_check
          %p287 = pneg %p91
        $region18: #{tpu_custom_call.1} parent=11 // pred_check_branch
          %289 = sbr.rel (%p287) target = $region20
        $region19: #{tpu_custom_call.1} parent=11 // pred_region
          _
        $region20: #{tpu_custom_call.1} parent=11 // pred_fallthru
          _
        // Predicated region
        $region21: #{tpu_custom_call.1} parent=11 // pred_check
          %p290 = pneg %p112
        $region22: #{tpu_custom_call.1} parent=11 // pred_check_branch
          %292 = sbr.rel (%p290) target = $region24
        $region23: #{tpu_custom_call.1} parent=11 // pred_region
          _
        $region24: #{tpu_custom_call.1} parent=11 // pred_fallthru
          _
        // Predicated region
        $region25: #{tpu_custom_call.1} parent=11 // pred_check
          %p293 = pneg %p133
        $region26: #{tpu_custom_call.1} parent=11 // pred_check_branch
          %295 = sbr.rel (%p293) target = $region28
        $region27: #{tpu_custom_call.1} parent=11 // pred_region
          _
        $region28: #{tpu_custom_call.1} parent=11 // pred_fallthru
          _
        // Predicated region
        $region29: #{tpu_custom_call.1} parent=11 // pred_check
          %p296 = pneg %p154
        $region30: #{tpu_custom_call.1} parent=11 // pred_check_branch
          %298 = sbr.rel (%p296) target = $region32
        $region31: #{tpu_custom_call.1} parent=11 // pred_region
          _
        $region32: #{tpu_custom_call.1} parent=11 // pred_fallthru
          _
        // Predicated region
        $region33: #{tpu_custom_call.1} parent=11 // pred_check
          %p299 = pneg %p175
        $region34: #{tpu_custom_call.1} parent=11 // pred_check_branch
          %301 = sbr.rel (%p299) target = $region36
        $region35: #{tpu_custom_call.1} parent=11 // pred_region
          _
        $region36: #{tpu_custom_call.1} parent=11 // pred_fallthru
          _
        // Predicated region
        $region37: #{tpu_custom_call.1} parent=11 // pred_check
          %p302 = pneg %p196
        $region38: #{tpu_custom_call.1} parent=11 // pred_check_branch
          %304 = sbr.rel (%p302) target = $region40
        $region39: #{tpu_custom_call.1} parent=11 // pred_region
          _
        $region40: #{tpu_custom_call.1} parent=11 // pred_fallthru
          _
        // Predicated region
        $region41: #{tpu_custom_call.1} parent=11 // pred_check
          %p305 = pneg %p217
        $region42: #{tpu_custom_call.1} parent=11 // pred_check_branch
          %307 = sbr.rel (%p305) target = $region44
        $region43: #{tpu_custom_call.1} parent=11 // pred_region
          _
        $region44: #{tpu_custom_call.1} parent=11 // pred_fallthru
          _
      $region12: #{tpu_custom_call.1} parent=5 // pred_fallthru
        _
      %p308 = scmp.lt.s32.totalorder %s23, 2
      // Predicated region
      $region45: #{tpu_custom_call.1} parent=5 // pred_check
        %p309 = pneg %p308
      $region46: #{tpu_custom_call.1} parent=5 // pred_check_branch
        %311 = sbr.rel (%p309) target = $region48
      $region47: #{tpu_custom_call.1} parent=5 // pred_region
        // Predicated region
        $region49: #{tpu_custom_call.1} parent=47 // pred_check
          %p312 = pneg %p43
        $region50: #{tpu_custom_call.1} parent=47 // pred_check_branch
          %314 = sbr.rel (%p312) target = $region52
        $region51: #{tpu_custom_call.1} parent=47 // pred_region
          %p315 = scmp.lt.s32.totalorder %s23, 1
          %s316 = scalar_select %p315, %s23, 1
          %s317 = smul.addr %s316, 32
          %s318 = smul.addr %s317, 8
          %s319 = scalar_lea.vmem %s0, %s318
        $region52: #{tpu_custom_call.1} parent=47 // pred_fallthru
          _
      $region48: #{tpu_custom_call.1} parent=5 // pred_fallthru
        _
      %p320 = scmp.le.s32.totalorder 1, %s23
      %p321 = scmp.lt.s32.totalorder %s23, 3
      %p322 = pnand %p320, %p321
      %p323 = pneg %p322
      // Predicated region
      $region53: #{tpu_custom_call.1} parent=5 // pred_check
        _
      $region54: #{tpu_custom_call.1} parent=5 // pred_check_branch
        %325 = sbr.rel (%p322) target = $region56
      $region55: #{tpu_custom_call.1} parent=5 // pred_region
        %s326 = ssub.s32 %s23, 1
        %p327 = scmp.lt.s32.totalorder %s28, 1
        %s328 = scalar_select %p327, %s28, 1
        %s329 = smul.addr %s328, 32
        %s330 = smul.addr %s329, 8
        %s331 = scalar_lea.vmem %s0, %s330
        %p332 = pneg %p49
        %p333 = pneg %p46
        %p334 = pneg %p70
        %p335 = pneg %p67
        %p336 = pneg %p91
        %p337 = pneg %p88
        %p338 = pneg %p112
        %p339 = pneg %p109
        %p340 = pneg %p133
        %p341 = pneg %p130
        %p342 = pneg %p154
        %p343 = pneg %p151
        %p344 = pneg %p175
        %p345 = pneg %p172
        %p346 = pneg %p196
        %p347 = pneg %p193
        %p348 = pneg %p217
        %p349 = pneg %p214
        %p350 = pneg %p243
        %p351 = pneg %p240
        %s352 = sand.u32 %s230, 1
        %s353 = scalar_lea.sflag [#allocation4], %s352
        %s354 = sand.u32 %s230, 1
        %s355 = smul.addr %s354, 32
        %s356 = scalar_lea.vmem [#allocation3], %s355
        %p357 = pneg %p269
        %p358 = pneg %p266
        %s359 = sand.u32 %s256, 1
        %s360 = scalar_lea.sflag [#allocation6], %s359
        %s361 = sand.u32 %s256, 1
        %s362 = smul.addr %s361, 16
        %s363 = scalar_lea.vmem [#allocation5], %s362
        %p364 = scmp.lt.s32.totalorder %s28, 1
        %s365 = scalar_select %p364, %s28, 1
        %s366 = smul.addr %s365, 32
        %s367 = smul.addr %s366, 8
        %s368 = scalar_lea.vmem %s0, %s367
        %vm370 = vcmask 57344
        %371 = vst.msk [vmem:[#allocation2 + $0x7] sm:$0x1] %vm370, 0.0
        %372 = vst.msk [vmem:[#allocation2 + $0x27] sm:$0x1] %vm370, 0.0
        %373 = vst.msk [vmem:[#allocation2 + $0x47] sm:$0x1] %vm370, 0.0
        %374 = vst.msk [vmem:[#allocation2 + $0x67] sm:$0x1] %vm370, 0.0
        %375 = vst.msk [vmem:[#allocation2 + $0x87] sm:$0x1] %vm370, 0.0
        %376 = vst.msk [vmem:[#allocation2 + $0xa7] sm:$0x1] %vm370, 0.0
        %377 = vst.msk [vmem:[#allocation2 + $0xc7] sm:$0x1] %vm370, 0.0
        %378 = vst.msk [vmem:[#allocation2 + $0xe7] sm:$0x1] %vm370, 0.0
        %379 = vst.msk [vmem:[#allocation2 + $0x107] sm:$0x1] %vm370, 0.0
        %380 = vst.msk [vmem:[#allocation2 + $0x127] sm:$0x1] %vm370, 0.0
        %381 = vst.msk [vmem:[#allocation2 + $0x147] sm:$0x1] %vm370, 0.0
        %382 = vst.msk [vmem:[#allocation2 + $0x167] sm:$0x1] %vm370, 0.0
        %383 = vst.msk [vmem:[#allocation2 + $0x187] sm:$0x1] %vm370, 0.0
        %384 = vst.msk [vmem:[#allocation2 + $0x1a7] sm:$0x1] %vm370, 0.0
        %385 = vst.msk [vmem:[#allocation2 + $0x1c7] sm:$0x1] %vm370, 0.0
        %386 = vst.msk [vmem:[#allocation2 + $0x1e7] sm:$0x1] %vm370, 0.0
        %387 = vst.msk [vmem:[#allocation2 + $0x207] sm:$0x1] %vm370, 0.0
        %388 = vst.msk [vmem:[#allocation2 + $0x227] sm:$0x1] %vm370, 0.0
        %389 = vst.msk [vmem:[#allocation2 + $0x18] sm:$0x1] %vm370, 0.0
        %390 = vst.msk [vmem:[#allocation2 + $0x38] sm:$0x1] %vm370, 0.0
        %391 = vst.msk [vmem:[#allocation2 + $0x58] sm:$0x1] %vm370, 0.0
        %392 = vst.msk [vmem:[#allocation2 + $0x78] sm:$0x1] %vm370, 0.0
        %393 = vst.msk [vmem:[#allocation2 + $0x98] sm:$0x1] %vm370, 0.0
        %394 = vst.msk [vmem:[#allocation2 + $0xb8] sm:$0x1] %vm370, 0.0
        %395 = vst.msk [vmem:[#allocation2 + $0xd8] sm:$0x1] %vm370, 0.0
        %396 = vst.msk [vmem:[#allocation2 + $0xf8] sm:$0x1] %vm370, 0.0
        %397 = vst.msk [vmem:[#allocation2 + $0x118] sm:$0x1] %vm370, 0.0
        %398 = vst.msk [vmem:[#allocation2 + $0x138] sm:$0x1] %vm370, 0.0
        %399 = vst.msk [vmem:[#allocation2 + $0x158] sm:$0x1] %vm370, 0.0
        %400 = vst.msk [vmem:[#allocation2 + $0x178] sm:$0x1] %vm370, 0.0
        %401 = vst.msk [vmem:[#allocation2 + $0x198] sm:$0x1] %vm370, 0.0
        %402 = vst.msk [vmem:[#allocation2 + $0x1b8] sm:$0x1] %vm370, 0.0
        %403 = vst.msk [vmem:[#allocation2 + $0x1d8] sm:$0x1] %vm370, 0.0
        %404 = vst.msk [vmem:[#allocation2 + $0x1f8] sm:$0x1] %vm370, 0.0
        %405 = vst.msk [vmem:[#allocation2 + $0x218] sm:$0x1] %vm370, 0.0
        %406 = vst.msk [vmem:[#allocation2 + $0x238] sm:$0x1] %vm370, 0.0
        %vm407 = vcmask 64512
        %408 = vst.msk [vmem:[#allocation2 + $0x8] sm:$0xff] %vm407, 0.0
        %409 = vst.msk [vmem:[#allocation2 + $0x10] sm:$0xff] %vm407, 0.0
        %s410 = scalar_lea.vmem [#allocation2], 544
        %411 = vst.msk [vmem:[%s410 + $0x8] sm:$0xff] %vm407, 0.0
        %412 = vst.msk [vmem:[%s410 + $0x10] sm:$0xff] %vm407, 0.0
        %v413 = vld [vmem:[%s368] sm:$0xff]
        %v414 = vld [vmem:[%s368 + $0x8] sm:$0xff]
        %v415 = vld [vmem:[%s368 + $0x10] sm:$0xff]
        %v416 = vld [vmem:[%s368 + $0x18] sm:$0xff]
        %v417 = vld [vmem:[%s368 + $0x20] sm:$0xff]
        %v418 = vld [vmem:[%s368 + $0x28] sm:$0xff]
        %v419 = vld [vmem:[%s368 + $0x30] sm:$0xff]
        %v420 = vld [vmem:[%s368 + $0x38] sm:$0xff]
        %v421 = vld [vmem:[%s368 + $0x40] sm:$0xff]
        %v422 = vld [vmem:[%s368 + $0x48] sm:$0xff]
        %v423 = vld [vmem:[%s368 + $0x50] sm:$0xff]
        %v424 = vld [vmem:[%s368 + $0x58] sm:$0xff]
        %v425 = vld [vmem:[%s368 + $0x60] sm:$0xff]
        %v426 = vld [vmem:[%s368 + $0x68] sm:$0xff]
        %v427 = vld [vmem:[%s368 + $0x70] sm:$0xff]
        %v428 = vld [vmem:[%s368 + $0x78] sm:$0xff]
        %v429 = vld [vmem:[%s368 + $0x80] sm:$0xff]
        %v430 = vld [vmem:[%s368 + $0x88] sm:$0xff]
        %v431 = vld [vmem:[%s368 + $0x90] sm:$0xff]
        %v432 = vld [vmem:[%s368 + $0x98] sm:$0xff]
        %v433 = vld [vmem:[%s368 + $0xa0] sm:$0xff]
        %v434 = vld [vmem:[%s368 + $0xa8] sm:$0xff]
        %v435 = vld [vmem:[%s368 + $0xb0] sm:$0xff]
        %v436 = vld [vmem:[%s368 + $0xb8] sm:$0xff]
        %v437 = vld [vmem:[%s368 + $0xc0] sm:$0xff]
        %v438 = vld [vmem:[%s368 + $0xc8] sm:$0xff]
        %v439 = vld [vmem:[%s368 + $0xd0] sm:$0xff]
        %v440 = vld [vmem:[%s368 + $0xd8] sm:$0xff]
        %v441 = vld [vmem:[%s368 + $0xe0] sm:$0xff]
        %v442 = vld [vmem:[%s368 + $0xe8] sm:$0xff]
        %v443 = vld [vmem:[%s368 + $0xf0] sm:$0xff]
        %v444 = vld [vmem:[%s368 + $0xf8] sm:$0xff]
        %s445 = scalar_lea.vmem [#allocation2], 32
        %vm446 = vcmask 31744
        %447 = vst.msk [vmem:[%s445 + $0x8] sm:$0xff] %vm446, %v413
        %448 = vst.msk [vmem:[%s445 + $0x10] sm:$0xff] %vm446, %v414
        %449 = vst.msk [vmem:[%s445 + $0x28] sm:$0xff] %vm446, %v415
        %450 = vst.msk [vmem:[%s445 + $0x30] sm:$0xff] %vm446, %v416
        %451 = vst.msk [vmem:[%s445 + $0x48] sm:$0xff] %vm446, %v417
        %452 = vst.msk [vmem:[%s445 + $0x50] sm:$0xff] %vm446, %v418
        %453 = vst.msk [vmem:[%s445 + $0x68] sm:$0xff] %vm446, %v419
        %454 = vst.msk [vmem:[%s445 + $0x70] sm:$0xff] %vm446, %v420
        %455 = vst.msk [vmem:[%s445 + $0x88] sm:$0xff] %vm446, %v421
        %456 = vst.msk [vmem:[%s445 + $0x90] sm:$0xff] %vm446, %v422
        %457 = vst.msk [vmem:[%s445 + $0xa8] sm:$0xff] %vm446, %v423
        %458 = vst.msk [vmem:[%s445 + $0xb0] sm:$0xff] %vm446, %v424
        %459 = vst.msk [vmem:[%s445 + $0xc8] sm:$0xff] %vm446, %v425
        %460 = vst.msk [vmem:[%s445 + $0xd0] sm:$0xff] %vm446, %v426
        %461 = vst.msk [vmem:[%s445 + $0xe8] sm:$0xff] %vm446, %v427
        %462 = vst.msk [vmem:[%s445 + $0xf0] sm:$0xff] %vm446, %v428
        %463 = vst.msk [vmem:[%s445 + $0x108] sm:$0xff] %vm446, %v429
        %464 = vst.msk [vmem:[%s445 + $0x110] sm:$0xff] %vm446, %v430
        %465 = vst.msk [vmem:[%s445 + $0x128] sm:$0xff] %vm446, %v431
        %466 = vst.msk [vmem:[%s445 + $0x130] sm:$0xff] %vm446, %v432
        %467 = vst.msk [vmem:[%s445 + $0x148] sm:$0xff] %vm446, %v433
        %468 = vst.msk [vmem:[%s445 + $0x150] sm:$0xff] %vm446, %v434
        %469 = vst.msk [vmem:[%s445 + $0x168] sm:$0xff] %vm446, %v435
        %470 = vst.msk [vmem:[%s445 + $0x170] sm:$0xff] %vm446, %v436
        %471 = vst.msk [vmem:[%s445 + $0x188] sm:$0xff] %vm446, %v437
        %472 = vst.msk [vmem:[%s445 + $0x190] sm:$0xff] %vm446, %v438
        %473 = vst.msk [vmem:[%s445 + $0x1a8] sm:$0xff] %vm446, %v439
        %474 = vst.msk [vmem:[%s445 + $0x1b0] sm:$0xff] %vm446, %v440
        %475 = vst.msk [vmem:[%s445 + $0x1c8] sm:$0xff] %vm446, %v441
        %476 = vst.msk [vmem:[%s445 + $0x1d0] sm:$0xff] %vm446, %v442
        %477 = vst.msk [vmem:[%s445 + $0x1e8] sm:$0xff] %vm446, %v443
        %478 = vst.msk [vmem:[%s445 + $0x1f0] sm:$0xff] %vm446, %v444
        %v479 = vld [vmem:[#allocation2 + $0x7] sm:$0xff]
        %v480 = vld [vmem:[#allocation2 + $0xf] sm:$0xff]
        %v481 = vld [vmem:[#allocation2 + $0x27] sm:$0xff]
        %v482 = vld [vmem:[#allocation2 + $0x2f] sm:$0xff]
        %v483 = vld [vmem:[#allocation2 + $0x47] sm:$0xff]
        %v484 = vld [vmem:[#allocation2 + $0x4f] sm:$0xff]
        %v485 = vld [vmem:[#allocation2 + $0x67] sm:$0xff]
        %v486 = vld [vmem:[#allocation2 + $0x6f] sm:$0xff]
        %v487 = vld [vmem:[#allocation2 + $0x87] sm:$0xff]
        %v488 = vld [vmem:[#allocation2 + $0x8f] sm:$0xff]
        %v489 = vld [vmem:[#allocation2 + $0xa7] sm:$0xff]
        %v490 = vld [vmem:[#allocation2 + $0xaf] sm:$0xff]
        %v491 = vld [vmem:[#allocation2 + $0xc7] sm:$0xff]
        %v492 = vld [vmem:[#allocation2 + $0xcf] sm:$0xff]
        %v493 = vld [vmem:[#allocation2 + $0xe7] sm:$0xff]
        %v494 = vld [vmem:[#allocation2 + $0xef] sm:$0xff]
        %v495 = vld [vmem:[#allocation2 + $0x107] sm:$0xff]
        %v496 = vld [vmem:[#allocation2 + $0x10f] sm:$0xff]
        %v497 = vld [vmem:[#allocation2 + $0x127] sm:$0xff]
        %v498 = vld [vmem:[#allocation2 + $0x12f] sm:$0xff]
        %v499 = vld [vmem:[#allocation2 + $0x147] sm:$0xff]
        %v500 = vld [vmem:[#allocation2 + $0x14f] sm:$0xff]
        %v501 = vld [vmem:[#allocation2 + $0x167] sm:$0xff]
        %v502 = vld [vmem:[#allocation2 + $0x16f] sm:$0xff]
        %v503 = vld [vmem:[#allocation2 + $0x187] sm:$0xff]
        %v504 = vld [vmem:[#allocation2 + $0x18f] sm:$0xff]
        %v505 = vld [vmem:[#allocation2 + $0x1a7] sm:$0xff]
        %v506 = vld [vmem:[#allocation2 + $0x1af] sm:$0xff]
        %v507 = vld [vmem:[#allocation2 + $0x1c7] sm:$0xff]
        %v508 = vld [vmem:[#allocation2 + $0x1cf] sm:$0xff]
        %v509 = vld [vmem:[#allocation2 + $0x1e7] sm:$0xff]
        %v510 = vld [vmem:[#allocation2 + $0x1ef] sm:$0xff]
        %v511 = vld [vmem:[#allocation2 + $0x207] sm:$0xff]
        %v512 = vld [vmem:[#allocation2 + $0x20f] sm:$0xff]
        %v513 = vld [vmem:[#allocation2 + $0x227] sm:$0xff]
        %v514 = vld [vmem:[#allocation2 + $0x22f] sm:$0xff]
        %v515 = vld [vmem:[#allocation2 + $0x8] sm:$0xff]
        %v516 = vld [vmem:[#allocation2 + $0x10] sm:$0xff]
        %v517 = vld [vmem:[#allocation2 + $0x28] sm:$0xff]
        %v518 = vld [vmem:[#allocation2 + $0x30] sm:$0xff]
        %v519 = vld [vmem:[#allocation2 + $0x48] sm:$0xff]
        %v520 = vld [vmem:[#allocation2 + $0x50] sm:$0xff]
        %v521 = vld [vmem:[#allocation2 + $0x68] sm:$0xff]
        %v522 = vld [vmem:[#allocation2 + $0x70] sm:$0xff]
        %v523 = vld [vmem:[#allocation2 + $0x88] sm:$0xff]
        %v524 = vld [vmem:[#allocation2 + $0x90] sm:$0xff]
        %v525 = vld [vmem:[#allocation2 + $0xa8] sm:$0xff]
        %v526 = vld [vmem:[#allocation2 + $0xb0] sm:$0xff]
        %v527 = vld [vmem:[#allocation2 + $0xc8] sm:$0xff]
        %v528 = vld [vmem:[#allocation2 + $0xd0] sm:$0xff]
        %v529 = vld [vmem:[#allocation2 + $0xe8] sm:$0xff]
        %v530 = vld [vmem:[#allocation2 + $0xf0] sm:$0xff]
        %v531 = vld [vmem:[#allocation2 + $0x108] sm:$0xff]
        %v532 = vld [vmem:[#allocation2 + $0x110] sm:$0xff]
        %v533 = vld [vmem:[#allocation2 + $0x128] sm:$0xff]
        %v534 = vld [vmem:[#allocation2 + $0x130] sm:$0xff]
        %v535 = vld [vmem:[#allocation2 + $0x148] sm:$0xff]
        %v536 = vld [vmem:[#allocation2 + $0x150] sm:$0xff]
        %v537 = vld [vmem:[#allocation2 + $0x168] sm:$0xff]
        %v538 = vld [vmem:[#allocation2 + $0x170] sm:$0xff]
        %v539 = vld [vmem:[#allocation2 + $0x188] sm:$0xff]
        %v540 = vld [vmem:[#allocation2 + $0x190] sm:$0xff]
        %v541 = vld [vmem:[#allocation2 + $0x1a8] sm:$0xff]
        %v542 = vld [vmem:[#allocation2 + $0x1b0] sm:$0xff]
        %v543 = vld [vmem:[#allocation2 + $0x1c8] sm:$0xff]
        %v544 = vld [vmem:[#allocation2 + $0x1d0] sm:$0xff]
        %v545 = vld [vmem:[#allocation2 + $0x1e8] sm:$0xff]
        %v546 = vld [vmem:[#allocation2 + $0x1f0] sm:$0xff]
        %v547 = vld [vmem:[#allocation2 + $0x208] sm:$0xff]
        %v548 = vld [vmem:[#allocation2 + $0x210] sm:$0xff]
        %v549 = vld [vmem:[#allocation2 + $0x228] sm:$0xff]
        %v550 = vld [vmem:[#allocation2 + $0x230] sm:$0xff]
        %v551 = vld [vmem:[#allocation2 + $0x9] sm:$0xff]
        %v552 = vld [vmem:[#allocation2 + $0x11] sm:$0xff]
        %v553 = vld [vmem:[#allocation2 + $0x29] sm:$0xff]
        %v554 = vld [vmem:[#allocation2 + $0x31] sm:$0xff]
        %v555 = vld [vmem:[#allocation2 + $0x49] sm:$0xff]
        %v556 = vld [vmem:[#allocation2 + $0x51] sm:$0xff]
        %v557 = vld [vmem:[#allocation2 + $0x69] sm:$0xff]
        %v558 = vld [vmem:[#allocation2 + $0x71] sm:$0xff]
        %v559 = vld [vmem:[#allocation2 + $0x89] sm:$0xff]
        %v560 = vld [vmem:[#allocation2 + $0x91] sm:$0xff]
        %v561 = vld [vmem:[#allocation2 + $0xa9] sm:$0xff]
        %v562 = vld [vmem:[#allocation2 + $0xb1] sm:$0xff]
        %v563 = vld [vmem:[#allocation2 + $0xc9] sm:$0xff]
        %v564 = vld [vmem:[#allocation2 + $0xd1] sm:$0xff]
        %v565 = vld [vmem:[#allocation2 + $0xe9] sm:$0xff]
        %v566 = vld [vmem:[#allocation2 + $0xf1] sm:$0xff]
        %v567 = vld [vmem:[#allocation2 + $0x109] sm:$0xff]
        %v568 = vld [vmem:[#allocation2 + $0x111] sm:$0xff]
        %v569 = vld [vmem:[#allocation2 + $0x129] sm:$0xff]
        %v570 = vld [vmem:[#allocation2 + $0x131] sm:$0xff]
        %v571 = vld [vmem:[#allocation2 + $0x149] sm:$0xff]
        %v572 = vld [vmem:[#allocation2 + $0x151] sm:$0xff]
        %v573 = vld [vmem:[#allocation2 + $0x169] sm:$0xff]
        %v574 = vld [vmem:[#allocation2 + $0x171] sm:$0xff]
        %v575 = vld [vmem:[#allocation2 + $0x189] sm:$0xff]
        %v576 = vld [vmem:[#allocation2 + $0x191] sm:$0xff]
        %v577 = vld [vmem:[#allocation2 + $0x1a9] sm:$0xff]
        %v578 = vld [vmem:[#allocation2 + $0x1b1] sm:$0xff]
        %v579 = vld [vmem:[#allocation2 + $0x1c9] sm:$0xff]
        %v580 = vld [vmem:[#allocation2 + $0x1d1] sm:$0xff]
        %v581 = vld [vmem:[#allocation2 + $0x1e9] sm:$0xff]
        %v582 = vld [vmem:[#allocation2 + $0x1f1] sm:$0xff]
        %v583 = vld [vmem:[#allocation2 + $0x209] sm:$0xff]
        %v584 = vld [vmem:[#allocation2 + $0x211] sm:$0xff]
        %v585 = vld [vmem:[#allocation2 + $0x229] sm:$0xff]
        %v586 = vld [vmem:[#allocation2 + $0x231] sm:$0xff]
        %623 = vrot.lane.b32.xlu0 %v515, 4
        %v624 = vpop.permute.xlu0 %623
        %625 = vrot.lane.b32.xlu0 %v516, 4
        %v626 = vpop.permute.xlu0 %625
        %627 = vrot.lane.b32.xlu0 %v517, 4
        %v628 = vpop.permute.xlu0 %627
        %629 = vrot.lane.b32.xlu0 %v518, 4
        %v630 = vpop.permute.xlu0 %629
        %631 = vrot.lane.b32.xlu0 %v519, 4
        %v632 = vpop.permute.xlu0 %631
        %633 = vrot.lane.b32.xlu0 %v520, 4
        %v634 = vpop.permute.xlu0 %633
        %635 = vrot.lane.b32.xlu0 %v521, 4
        %v636 = vpop.permute.xlu0 %635
        %637 = vrot.lane.b32.xlu0 %v522, 4
        %v638 = vpop.permute.xlu0 %637
        %639 = vrot.lane.b32.xlu0 %v523, 4
        %v640 = vpop.permute.xlu0 %639
        %641 = vrot.lane.b32.xlu0 %v524, 4
        %v642 = vpop.permute.xlu0 %641
        %643 = vrot.lane.b32.xlu0 %v525, 4
        %v644 = vpop.permute.xlu0 %643
        %645 = vrot.lane.b32.xlu0 %v526, 4
        %v646 = vpop.permute.xlu0 %645
        %647 = vrot.lane.b32.xlu0 %v527, 4
        %v648 = vpop.permute.xlu0 %647
        %649 = vrot.lane.b32.xlu0 %v528, 4
        %v650 = vpop.permute.xlu0 %649
        %651 = vrot.lane.b32.xlu0 %v529, 4
        %v652 = vpop.permute.xlu0 %651
        %653 = vrot.lane.b32.xlu0 %v530, 4
        %v654 = vpop.permute.xlu0 %653
        %655 = vrot.lane.b32.xlu0 %v531, 4
        %v656 = vpop.permute.xlu0 %655
        %657 = vrot.lane.b32.xlu0 %v532, 4
        %v658 = vpop.permute.xlu0 %657
        %659 = vrot.lane.b32.xlu0 %v533, 4
        %v660 = vpop.permute.xlu0 %659
        %661 = vrot.lane.b32.xlu0 %v534, 4
        %v662 = vpop.permute.xlu0 %661
        %663 = vrot.lane.b32.xlu0 %v535, 4
        %v664 = vpop.permute.xlu0 %663
        %665 = vrot.lane.b32.xlu0 %v536, 4
        %v666 = vpop.permute.xlu0 %665
        %667 = vrot.lane.b32.xlu0 %v537, 4
        %v668 = vpop.permute.xlu0 %667
        %669 = vrot.lane.b32.xlu0 %v538, 4
        %v670 = vpop.permute.xlu0 %669
        %671 = vrot.lane.b32.xlu0 %v539, 4
        %v672 = vpop.permute.xlu0 %671
        %673 = vrot.lane.b32.xlu0 %v540, 4
        %v674 = vpop.permute.xlu0 %673
        %675 = vrot.lane.b32.xlu0 %v541, 4
        %v676 = vpop.permute.xlu0 %675
        %677 = vrot.lane.b32.xlu0 %v542, 4
        %v678 = vpop.permute.xlu0 %677
        %679 = vrot.lane.b32.xlu0 %v543, 4
        %v680 = vpop.permute.xlu0 %679
        %681 = vrot.lane.b32.xlu0 %v544, 4
        %v682 = vpop.permute.xlu0 %681
        %683 = vrot.lane.b32.xlu0 %v545, 4
        %v684 = vpop.permute.xlu0 %683
        %685 = vrot.lane.b32.xlu0 %v546, 4
        %v686 = vpop.permute.xlu0 %685
        %687 = vrot.lane.b32.xlu0 %v547, 4
        %v688 = vpop.permute.xlu0 %687
        %689 = vrot.lane.b32.xlu0 %v548, 4
        %v690 = vpop.permute.xlu0 %689
        %691 = vrot.lane.b32.xlu0 %v549, 4
        %v692 = vpop.permute.xlu0 %691
        %693 = vrot.lane.b32.xlu0 %v550, 4
        %v694 = vpop.permute.xlu0 %693
        %767 = vrot.lane.b32.xlu0 %v551, 8
        %v768 = vpop.permute.xlu0 %767
        %769 = vrot.lane.b32.xlu0 %v552, 8
        %v770 = vpop.permute.xlu0 %769
        %771 = vrot.lane.b32.xlu0 %v553, 8
        %v772 = vpop.permute.xlu0 %771
        %773 = vrot.lane.b32.xlu0 %v554, 8
        %v774 = vpop.permute.xlu0 %773
        %775 = vrot.lane.b32.xlu0 %v555, 8
        %v776 = vpop.permute.xlu0 %775
        %777 = vrot.lane.b32.xlu0 %v556, 8
        %v778 = vpop.permute.xlu0 %777
        %779 = vrot.lane.b32.xlu0 %v557, 8
        %v780 = vpop.permute.xlu0 %779
        %781 = vrot.lane.b32.xlu0 %v558, 8
        %v782 = vpop.permute.xlu0 %781
        %783 = vrot.lane.b32.xlu0 %v559, 8
        %v784 = vpop.permute.xlu0 %783
        %785 = vrot.lane.b32.xlu0 %v560, 8
        %v786 = vpop.permute.xlu0 %785
        %787 = vrot.lane.b32.xlu0 %v561, 8
        %v788 = vpop.permute.xlu0 %787
        %789 = vrot.lane.b32.xlu0 %v562, 8
        %v790 = vpop.permute.xlu0 %789
        %791 = vrot.lane.b32.xlu0 %v563, 8
        %v792 = vpop.permute.xlu0 %791
        %793 = vrot.lane.b32.xlu0 %v564, 8
        %v794 = vpop.permute.xlu0 %793
        %795 = vrot.lane.b32.xlu0 %v565, 8
        %v796 = vpop.permute.xlu0 %795
        %797 = vrot.lane.b32.xlu0 %v566, 8
        %v798 = vpop.permute.xlu0 %797
        %799 = vrot.lane.b32.xlu0 %v567, 8
        %v800 = vpop.permute.xlu0 %799
        %801 = vrot.lane.b32.xlu0 %v568, 8
        %v802 = vpop.permute.xlu0 %801
        %803 = vrot.lane.b32.xlu0 %v569, 8
        %v804 = vpop.permute.xlu0 %803
        %805 = vrot.lane.b32.xlu0 %v570, 8
        %v806 = vpop.permute.xlu0 %805
        %807 = vrot.lane.b32.xlu0 %v571, 8
        %v808 = vpop.permute.xlu0 %807
        %809 = vrot.lane.b32.xlu0 %v572, 8
        %v810 = vpop.permute.xlu0 %809
        %811 = vrot.lane.b32.xlu0 %v573, 8
        %v812 = vpop.permute.xlu0 %811
        %813 = vrot.lane.b32.xlu0 %v574, 8
        %v814 = vpop.permute.xlu0 %813
        %815 = vrot.lane.b32.xlu0 %v575, 8
        %v816 = vpop.permute.xlu0 %815
        %817 = vrot.lane.b32.xlu0 %v576, 8
        %v818 = vpop.permute.xlu0 %817
        %819 = vrot.lane.b32.xlu0 %v577, 8
        %v820 = vpop.permute.xlu0 %819
        %821 = vrot.lane.b32.xlu0 %v578, 8
        %v822 = vpop.permute.xlu0 %821
        %823 = vrot.lane.b32.xlu0 %v579, 8
        %v824 = vpop.permute.xlu0 %823
        %825 = vrot.lane.b32.xlu0 %v580, 8
        %v826 = vpop.permute.xlu0 %825
        %827 = vrot.lane.b32.xlu0 %v581, 8
        %v828 = vpop.permute.xlu0 %827
        %829 = vrot.lane.b32.xlu0 %v582, 8
        %v830 = vpop.permute.xlu0 %829
        %831 = vrot.lane.b32.xlu0 %v583, 8
        %v832 = vpop.permute.xlu0 %831
        %833 = vrot.lane.b32.xlu0 %v584, 8
        %v834 = vpop.permute.xlu0 %833
        %835 = vrot.lane.b32.xlu0 %v585, 8
        %v836 = vpop.permute.xlu0 %835
        %837 = vrot.lane.b32.xlu0 %v586, 8
        %v838 = vpop.permute.xlu0 %837
        %v875 = vsel %vm446, %v479, %v624
        %v876 = vsel %vm446, %v480, %v626
        %v877 = vsel %vm446, %v481, %v628
        %v878 = vsel %vm446, %v482, %v630
        %v879 = vsel %vm446, %v483, %v632
        %v880 = vsel %vm446, %v484, %v634
        %v881 = vsel %vm446, %v485, %v636
        %v882 = vsel %vm446, %v486, %v638
        %v883 = vsel %vm446, %v487, %v640
        %v884 = vsel %vm446, %v488, %v642
        %v885 = vsel %vm446, %v489, %v644
        %v886 = vsel %vm446, %v490, %v646
        %v887 = vsel %vm446, %v491, %v648
        %v888 = vsel %vm446, %v492, %v650
        %v889 = vsel %vm446, %v493, %v652
        %v890 = vsel %vm446, %v494, %v654
        %v891 = vsel %vm446, %v495, %v656
        %v892 = vsel %vm446, %v496, %v658
        %v893 = vsel %vm446, %v497, %v660
        %v894 = vsel %vm446, %v498, %v662
        %v895 = vsel %vm446, %v499, %v664
        %v896 = vsel %vm446, %v500, %v666
        %v897 = vsel %vm446, %v501, %v668
        %v898 = vsel %vm446, %v502, %v670
        %v899 = vsel %vm446, %v503, %v672
        %v900 = vsel %vm446, %v504, %v674
        %v901 = vsel %vm446, %v505, %v676
        %v902 = vsel %vm446, %v506, %v678
        %v903 = vsel %vm446, %v507, %v680
        %v904 = vsel %vm446, %v508, %v682
        %v905 = vsel %vm446, %v509, %v684
        %v906 = vsel %vm446, %v510, %v686
        %v907 = vsel %vm446, %v511, %v688
        %v908 = vsel %vm446, %v512, %v690
        %v909 = vsel %vm446, %v513, %v692
        %v910 = vsel %vm446, %v514, %v694
        %v911 = vsel %vm407, %v875, %v768
        %v912 = vsel %vm407, %v876, %v770
        %v913 = vsel %vm407, %v877, %v772
        %v914 = vsel %vm407, %v878, %v774
        %v915 = vsel %vm407, %v879, %v776
        %v916 = vsel %vm407, %v880, %v778
        %v917 = vsel %vm407, %v881, %v780
        %v918 = vsel %vm407, %v882, %v782
        %v919 = vsel %vm407, %v883, %v784
        %v920 = vsel %vm407, %v884, %v786
        %v921 = vsel %vm407, %v885, %v788
        %v922 = vsel %vm407, %v886, %v790
        %v923 = vsel %vm407, %v887, %v792
        %v924 = vsel %vm407, %v888, %v794
        %v925 = vsel %vm407, %v889, %v796
        %v926 = vsel %vm407, %v890, %v798
        %v927 = vsel %vm407, %v891, %v800
        %v928 = vsel %vm407, %v892, %v802
        %v929 = vsel %vm407, %v893, %v804
        %v930 = vsel %vm407, %v894, %v806
        %v931 = vsel %vm407, %v895, %v808
        %v932 = vsel %vm407, %v896, %v810
        %v933 = vsel %vm407, %v897, %v812
        %v934 = vsel %vm407, %v898, %v814
        %v935 = vsel %vm407, %v899, %v816
        %v936 = vsel %vm407, %v900, %v818
        %v937 = vsel %vm407, %v901, %v820
        %v938 = vsel %vm407, %v902, %v822
        %v939 = vsel %vm407, %v903, %v824
        %v940 = vsel %vm407, %v904, %v826
        %v941 = vsel %vm407, %v905, %v828
        %v942 = vsel %vm407, %v906, %v830
        %v943 = vsel %vm407, %v907, %v832
        %v944 = vsel %vm407, %v908, %v834
        %v945 = vsel %vm407, %v909, %v836
        %v946 = vsel %vm407, %v910, %v838
        %979 = vrot.lane.b32.xlu0 %v913, 12
        %v980 = vpop.permute.xlu0 %979
        %981 = vrot.lane.b32.xlu0 %v914, 12
        %v982 = vpop.permute.xlu0 %981
        %983 = vrot.lane.b32.xlu0 %v915, 12
        %v984 = vpop.permute.xlu0 %983
        %985 = vrot.lane.b32.xlu0 %v916, 12
        %v986 = vpop.permute.xlu0 %985
        %987 = vrot.lane.b32.xlu0 %v917, 12
        %v988 = vpop.permute.xlu0 %987
        %989 = vrot.lane.b32.xlu0 %v918, 12
        %v990 = vpop.permute.xlu0 %989
        %991 = vrot.lane.b32.xlu0 %v919, 12
        %v992 = vpop.permute.xlu0 %991
        %993 = vrot.lane.b32.xlu0 %v920, 12
        %v994 = vpop.permute.xlu0 %993
        %995 = vrot.lane.b32.xlu0 %v921, 12
        %v996 = vpop.permute.xlu0 %995
        %997 = vrot.lane.b32.xlu0 %v922, 12
        %v998 = vpop.permute.xlu0 %997
        %999 = vrot.lane.b32.xlu0 %v923, 12
        %v1000 = vpop.permute.xlu0 %999
        %1001 = vrot.lane.b32.xlu0 %v924, 12
        %v1002 = vpop.permute.xlu0 %1001
        %1003 = vrot.lane.b32.xlu0 %v925, 12
        %v1004 = vpop.permute.xlu0 %1003
        %1005 = vrot.lane.b32.xlu0 %v926, 12
        %v1006 = vpop.permute.xlu0 %1005
        %1007 = vrot.lane.b32.xlu0 %v927, 12
        %v1008 = vpop.permute.xlu0 %1007
        %1009 = vrot.lane.b32.xlu0 %v928, 12
        %v1010 = vpop.permute.xlu0 %1009
        %1011 = vrot.lane.b32.xlu0 %v929, 12
        %v1012 = vpop.permute.xlu0 %1011
        %1013 = vrot.lane.b32.xlu0 %v930, 12
        %v1014 = vpop.permute.xlu0 %1013
        %1015 = vrot.lane.b32.xlu0 %v931, 12
        %v1016 = vpop.permute.xlu0 %1015
        %1017 = vrot.lane.b32.xlu0 %v932, 12
        %v1018 = vpop.permute.xlu0 %1017
        %1019 = vrot.lane.b32.xlu0 %v933, 12
        %v1020 = vpop.permute.xlu0 %1019
        %1021 = vrot.lane.b32.xlu0 %v934, 12
        %v1022 = vpop.permute.xlu0 %1021
        %1023 = vrot.lane.b32.xlu0 %v935, 12
        %v1024 = vpop.permute.xlu0 %1023
        %1025 = vrot.lane.b32.xlu0 %v936, 12
        %v1026 = vpop.permute.xlu0 %1025
        %1027 = vrot.lane.b32.xlu0 %v937, 12
        %v1028 = vpop.permute.xlu0 %1027
        %1029 = vrot.lane.b32.xlu0 %v938, 12
        %v1030 = vpop.permute.xlu0 %1029
        %1031 = vrot.lane.b32.xlu0 %v939, 12
        %v1032 = vpop.permute.xlu0 %1031
        %1033 = vrot.lane.b32.xlu0 %v940, 12
        %v1034 = vpop.permute.xlu0 %1033
        %1035 = vrot.lane.b32.xlu0 %v941, 12
        %v1036 = vpop.permute.xlu0 %1035
        %1037 = vrot.lane.b32.xlu0 %v942, 12
        %v1038 = vpop.permute.xlu0 %1037
        %1039 = vrot.lane.b32.xlu0 %v943, 12
        %v1040 = vpop.permute.xlu0 %1039
        %1041 = vrot.lane.b32.xlu0 %v944, 12
        %v1042 = vpop.permute.xlu0 %1041
        %1077 = vrot.lane.b32.xlu0 %v915, 24
        %v1078 = vpop.permute.xlu0 %1077
        %1079 = vrot.lane.b32.xlu0 %v916, 24
        %v1080 = vpop.permute.xlu0 %1079
        %1081 = vrot.lane.b32.xlu0 %v917, 24
        %v1082 = vpop.permute.xlu0 %1081
        %1083 = vrot.lane.b32.xlu0 %v918, 24
        %v1084 = vpop.permute.xlu0 %1083
        %1085 = vrot.lane.b32.xlu0 %v919, 24
        %v1086 = vpop.permute.xlu0 %1085
        %1087 = vrot.lane.b32.xlu0 %v920, 24
        %v1088 = vpop.permute.xlu0 %1087
        %1089 = vrot.lane.b32.xlu0 %v921, 24
        %v1090 = vpop.permute.xlu0 %1089
        %1091 = vrot.lane.b32.xlu0 %v922, 24
        %v1092 = vpop.permute.xlu0 %1091
        %1093 = vrot.lane.b32.xlu0 %v923, 24
        %v1094 = vpop.permute.xlu0 %1093
        %1095 = vrot.lane.b32.xlu0 %v924, 24
        %v1096 = vpop.permute.xlu0 %1095
        %1097 = vrot.lane.b32.xlu0 %v925, 24
        %v1098 = vpop.permute.xlu0 %1097
        %1099 = vrot.lane.b32.xlu0 %v926, 24
        %v1100 = vpop.permute.xlu0 %1099
        %1101 = vrot.lane.b32.xlu0 %v927, 24
        %v1102 = vpop.permute.xlu0 %1101
        %1103 = vrot.lane.b32.xlu0 %v928, 24
        %v1104 = vpop.permute.xlu0 %1103
        %1105 = vrot.lane.b32.xlu0 %v929, 24
        %v1106 = vpop.permute.xlu0 %1105
        %1107 = vrot.lane.b32.xlu0 %v930, 24
        %v1108 = vpop.permute.xlu0 %1107
        %1109 = vrot.lane.b32.xlu0 %v931, 24
        %v1110 = vpop.permute.xlu0 %1109
        %1111 = vrot.lane.b32.xlu0 %v932, 24
        %v1112 = vpop.permute.xlu0 %1111
        %1113 = vrot.lane.b32.xlu0 %v933, 24
        %v1114 = vpop.permute.xlu0 %1113
        %1115 = vrot.lane.b32.xlu0 %v934, 24
        %v1116 = vpop.permute.xlu0 %1115
        %1117 = vrot.lane.b32.xlu0 %v935, 24
        %v1118 = vpop.permute.xlu0 %1117
        %1119 = vrot.lane.b32.xlu0 %v936, 24
        %v1120 = vpop.permute.xlu0 %1119
        %1121 = vrot.lane.b32.xlu0 %v937, 24
        %v1122 = vpop.permute.xlu0 %1121
        %1123 = vrot.lane.b32.xlu0 %v938, 24
        %v1124 = vpop.permute.xlu0 %1123
        %1125 = vrot.lane.b32.xlu0 %v939, 24
        %v1126 = vpop.permute.xlu0 %1125
        %1127 = vrot.lane.b32.xlu0 %v940, 24
        %v1128 = vpop.permute.xlu0 %1127
        %1129 = vrot.lane.b32.xlu0 %v941, 24
        %v1130 = vpop.permute.xlu0 %1129
        %1131 = vrot.lane.b32.xlu0 %v942, 24
        %v1132 = vpop.permute.xlu0 %1131
        %1133 = vrot.lane.b32.xlu0 %v943, 24
        %v1134 = vpop.permute.xlu0 %1133
        %1135 = vrot.lane.b32.xlu0 %v944, 24
        %v1136 = vpop.permute.xlu0 %1135
        %1137 = vrot.lane.b32.xlu0 %v945, 24
        %v1138 = vpop.permute.xlu0 %1137
        %1139 = vrot.lane.b32.xlu0 %v946, 24
        %v1140 = vpop.permute.xlu0 %1139
        %vm1173 = vcmask 97280
        %v1174 = vsel %vm1173, %v911, %v980
        %v1175 = vsel %vm1173, %v912, %v982
        %v1176 = vsel %vm1173, %v913, %v984
        %v1177 = vsel %vm1173, %v914, %v986
        %v1178 = vsel %vm1173, %v915, %v988
        %v1179 = vsel %vm1173, %v916, %v990
        %v1180 = vsel %vm1173, %v917, %v992
        %v1181 = vsel %vm1173, %v918, %v994
        %v1182 = vsel %vm1173, %v919, %v996
        %v1183 = vsel %vm1173, %v920, %v998
        %v1184 = vsel %vm1173, %v921, %v1000
        %v1185 = vsel %vm1173, %v922, %v1002
        %v1186 = vsel %vm1173, %v923, %v1004
        %v1187 = vsel %vm1173, %v924, %v1006
        %v1188 = vsel %vm1173, %v925, %v1008
        %v1189 = vsel %vm1173, %v926, %v1010
        %v1190 = vsel %vm1173, %v927, %v1012
        %v1191 = vsel %vm1173, %v928, %v1014
        %v1192 = vsel %vm1173, %v929, %v1016
        %v1193 = vsel %vm1173, %v930, %v1018
        %v1194 = vsel %vm1173, %v931, %v1020
        %v1195 = vsel %vm1173, %v932, %v1022
        %v1196 = vsel %vm1173, %v933, %v1024
        %v1197 = vsel %vm1173, %v934, %v1026
        %v1198 = vsel %vm1173, %v935, %v1028
        %v1199 = vsel %vm1173, %v936, %v1030
        %v1200 = vsel %vm1173, %v937, %v1032
        %v1201 = vsel %vm1173, %v938, %v1034
        %v1202 = vsel %vm1173, %v939, %v1036
        %v1203 = vsel %vm1173, %v940, %v1038
        %v1204 = vsel %vm1173, %v941, %v1040
        %v1205 = vsel %vm1173, %v942, %v1042
        %vm1206 = vcmask 195584
        %v1207 = vsel %vm1206, %v1174, %v1078
        %v1208 = vsel %vm1206, %v1175, %v1080
        %v1209 = vsel %vm1206, %v1176, %v1082
        %v1210 = vsel %vm1206, %v1177, %v1084
        %v1211 = vsel %vm1206, %v1178, %v1086
        %v1212 = vsel %vm1206, %v1179, %v1088
        %v1213 = vsel %vm1206, %v1180, %v1090
        %v1214 = vsel %vm1206, %v1181, %v1092
        %v1215 = vsel %vm1206, %v1182, %v1094
        %v1216 = vsel %vm1206, %v1183, %v1096
        %v1217 = vsel %vm1206, %v1184, %v1098
        %v1218 = vsel %vm1206, %v1185, %v1100
        %v1219 = vsel %vm1206, %v1186, %v1102
        %v1220 = vsel %vm1206, %v1187, %v1104
        %v1221 = vsel %vm1206, %v1188, %v1106
        %v1222 = vsel %vm1206, %v1189, %v1108
        %v1223 = vsel %vm1206, %v1190, %v1110
        %v1224 = vsel %vm1206, %v1191, %v1112
        %v1225 = vsel %vm1206, %v1192, %v1114
        %v1226 = vsel %vm1206, %v1193, %v1116
        %v1227 = vsel %vm1206, %v1194, %v1118
        %v1228 = vsel %vm1206, %v1195, %v1120
        %v1229 = vsel %vm1206, %v1196, %v1122
        %v1230 = vsel %vm1206, %v1197, %v1124
        %v1231 = vsel %vm1206, %v1198, %v1126
        %v1232 = vsel %vm1206, %v1199, %v1128
        %v1233 = vsel %vm1206, %v1200, %v1130
        %v1234 = vsel %vm1206, %v1201, %v1132
        %v1235 = vsel %vm1206, %v1202, %v1134
        %v1236 = vsel %vm1206, %v1203, %v1136
        %v1237 = vsel %vm1206, %v1204, %v1138
        %v1238 = vsel %vm1206, %v1205, %v1140
        %v1239 = vpack.c.bf16 %v1208, %v1207
        %v1240 = vpack.c.bf16 %v1210, %v1209
        %v1241 = vpack.c.bf16 %v1212, %v1211
        %v1242 = vpack.c.bf16 %v1214, %v1213
        %v1243 = vpack.c.bf16 %v1216, %v1215
        %v1244 = vpack.c.bf16 %v1218, %v1217
        %v1245 = vpack.c.bf16 %v1220, %v1219
        %v1246 = vpack.c.bf16 %v1222, %v1221
        %v1247 = vpack.c.bf16 %v1224, %v1223
        %v1248 = vpack.c.bf16 %v1226, %v1225
        %v1249 = vpack.c.bf16 %v1228, %v1227
        %v1250 = vpack.c.bf16 %v1230, %v1229
        %v1251 = vpack.c.bf16 %v1232, %v1231
        %v1252 = vpack.c.bf16 %v1234, %v1233
        %v1253 = vpack.c.bf16 %v1236, %v1235
        %v1254 = vpack.c.bf16 %v1238, %v1237
        %v1255 = vld [vmem:[%s1] sm:$0xf]
        %v1256 = vld [vmem:[%s1 + $0x4] sm:$0xf]
        %v1257 = vld [vmem:[%s1 + $0x8] sm:$0xf]
        %v1258 = vld [vmem:[%s1 + $0xc] sm:$0xf]
        %v1259 = vld [vmem:[%s1 + $0x10] sm:$0x3]
        %v1260 = vld [vmem:[%s2] sm:$0x1]
        %v1262 = vlaneseq
        %v1263 = vshrl.u32 %v1262, 7
        %v1264 = vsub.s32 0, %v1263
        %v1265 = vrot.slane %v1260, %v1264
        %v1272 = vunpack.c.l.b16 %v1255
        %v1273 = vunpack.c.l.b16 %v1256
        %v1274 = vunpack.c.l.b16 %v1257
        %v1275 = vunpack.c.l.b16 %v1258
        %v1276 = vunpack.c.l.b16 %v1259
        %v1277 = vpack.c.b16 %v1273, %v1272
        %v1278 = vpack.c.b16 %v1275, %v1274
        %v1279 = vpack.c.b16 %v1276, %v1276
        %vm1282 = vcmask 293888
        %v1284 = vsel %vm1282, %v1239, 0
        %v1287 = vsel %vm1282, %v1240, 0
        %v1290 = vsel %vm1282, %v1241, 0
        %v1293 = vsel %vm1282, %v1242, 0
        %v1296 = vsel %vm1282, %v1243, 0
        %v1299 = vsel %vm1282, %v1244, 0
        %v1302 = vsel %vm1282, %v1245, 0
        %v1305 = vsel %vm1282, %v1246, 0
        %v1308 = vsel %vm1282, %v1247, 0
        %v1311 = vsel %vm1282, %v1248, 0
        %v1314 = vsel %vm1282, %v1249, 0
        %v1317 = vsel %vm1282, %v1250, 0
        %v1320 = vsel %vm1282, %v1251, 0
        %v1323 = vsel %vm1282, %v1252, 0
        %v1326 = vsel %vm1282, %v1253, 0
        %v1329 = vsel %vm1282, %v1254, 0
        %vm1331 = vcmask 1041408
        %v1333 = vsel %vm1331, %v1279, 0
        %1335 = vmatprep.subr.bf16.mxu0 0
        %1336 = vmatpush1.bf16.msra.mxu0 %v1277
        %1337 = vmatprep.subr.bf16.mxu0 0
        %1338 = vmatpush1.bf16.msra.mxu0 %v1278
        %1339 = vmatprep.subr.bf16.mxu0 0
        %1340 = vmatpush1.bf16.msra.mxu0 %v1333
        %1341 = vmatprep.subr.bf16.mxu0 0
        %1342 = vmatpush1.bf16.msra.mxu0 0
        %1343 = vmatprep.subr.bf16.mxu0 0
        %1344 = vmatpush1.bf16.msra.mxu0 0
        %1345 = vmatprep.subr.bf16.mxu0 0
        %1346 = vmatpush1.bf16.msra.mxu0 0
        %1347 = vmatprep.subr.bf16.mxu0 0
        %1348 = vmatpush1.bf16.msra.mxu0 0
        %1349 = vmatprep.subr.bf16.mxu0 0
        %1350 = vmatpush1.bf16.msra.mxu0 0
        %1351 = vmatprep.subr.bf16.mxu0 0
        %1352 = vmatpush1.bf16.msra.mxu0 0
        %1353 = vmatprep.subr.bf16.mxu0 0
        %1354 = vmatpush1.bf16.msra.mxu0 0
        %1355 = vmatprep.subr.bf16.mxu0 0
        %1356 = vmatpush1.bf16.msra.mxu0 0
        %1357 = vmatprep.subr.bf16.mxu0 0
        %1358 = vmatpush1.bf16.msra.mxu0 0
        %1359 = vmatprep.subr.bf16.mxu0 0
        %1360 = vmatpush1.bf16.msra.mxu0 0
        %1361 = vmatprep.subr.bf16.mxu0 0
        %1362 = vmatpush1.bf16.msra.mxu0 0
        %1363 = vmatprep.subr.bf16.mxu0 0
        %1364 = vmatpush1.bf16.msra.mxu0 0
        %1365 = vmatprep.subr.bf16.mxu0 0
        %1366 = vmatpush1.bf16.msra.mxu0 0
        %1367 = vmatprep.mubr.bf16.mxu0 0
        %1368 = vmatmul.mubr.bf16.gmra.mrb[0].mxu0 %v1284
        %v1369 = vpop.f32.mrb[0].mxu0
        %v1370 = vadd.f32 %v1265, %v1369
        %v1371 = vpop.f32.mrb[0].mxu0
        %v1372 = vpop.f32.mrb[0].mxu0
        %v1373 = vadd.f32 %v1265, %v1372
        %v1374 = vpop.f32.mrb[0].mxu0
        %1375 = vmatprep.mubr.bf16.mxu0 0
        %1376 = vmatmul.mubr.bf16.gmra.mrb[0].mxu0 %v1287
        %v1377 = vpop.f32.mrb[0].mxu0
        %v1378 = vadd.f32 %v1265, %v1377
        %v1379 = vpop.f32.mrb[0].mxu0
        %v1380 = vpop.f32.mrb[0].mxu0
        %v1381 = vadd.f32 %v1265, %v1380
        %v1382 = vpop.f32.mrb[0].mxu0
        %1383 = vmatprep.mubr.bf16.mxu0 0
        %1384 = vmatmul.mubr.bf16.gmra.mrb[0].mxu0 %v1290
        %v1385 = vpop.f32.mrb[0].mxu0
        %v1386 = vadd.f32 %v1265, %v1385
        %v1387 = vpop.f32.mrb[0].mxu0
        %v1388 = vpop.f32.mrb[0].mxu0
        %v1389 = vadd.f32 %v1265, %v1388
        %v1390 = vpop.f32.mrb[0].mxu0
        %1391 = vmatprep.mubr.bf16.mxu0 0
        %1392 = vmatmul.mubr.bf16.gmra.mrb[0].mxu0 %v1293
        %v1393 = vpop.f32.mrb[0].mxu0
        %v1394 = vadd.f32 %v1265, %v1393
        %v1395 = vpop.f32.mrb[0].mxu0
        %v1396 = vpop.f32.mrb[0].mxu0
        %v1397 = vadd.f32 %v1265, %v1396
        %v1398 = vpop.f32.mrb[0].mxu0
        %1399 = vmatprep.mubr.bf16.mxu0 0
        %1400 = vmatmul.mubr.bf16.gmra.mrb[0].mxu0 %v1296
        %v1401 = vpop.f32.mrb[0].mxu0
        %v1402 = vadd.f32 %v1265, %v1401
        %v1403 = vpop.f32.mrb[0].mxu0
        %v1404 = vpop.f32.mrb[0].mxu0
        %v1405 = vadd.f32 %v1265, %v1404
        %v1406 = vpop.f32.mrb[0].mxu0
        %1407 = vmatprep.mubr.bf16.mxu0 0
        %1408 = vmatmul.mubr.bf16.gmra.mrb[0].mxu0 %v1299
        %v1409 = vpop.f32.mrb[0].mxu0
        %v1410 = vadd.f32 %v1265, %v1409
        %v1411 = vpop.f32.mrb[0].mxu0
        %v1412 = vpop.f32.mrb[0].mxu0
        %v1413 = vadd.f32 %v1265, %v1412
        %v1414 = vpop.f32.mrb[0].mxu0
        %1415 = vmatprep.mubr.bf16.mxu0 0
        %1416 = vmatmul.mubr.bf16.gmra.mrb[0].mxu0 %v1302
        %v1417 = vpop.f32.mrb[0].mxu0
        %v1418 = vadd.f32 %v1265, %v1417
        %v1419 = vpop.f32.mrb[0].mxu0
        %v1420 = vpop.f32.mrb[0].mxu0
        %v1421 = vadd.f32 %v1265, %v1420
        %v1422 = vpop.f32.mrb[0].mxu0
        %1423 = vmatprep.mubr.bf16.mxu0 0
        %1424 = vmatmul.mubr.bf16.gmra.mrb[0].mxu0 %v1305
        %v1425 = vpop.f32.mrb[0].mxu0
        %v1426 = vadd.f32 %v1265, %v1425
        %v1427 = vpop.f32.mrb[0].mxu0
        %v1428 = vpop.f32.mrb[0].mxu0
        %v1429 = vadd.f32 %v1265, %v1428
        %v1430 = vpop.f32.mrb[0].mxu0
        %1431 = vmatprep.mubr.bf16.mxu0 0
        %1432 = vmatmul.mubr.bf16.gmra.mrb[0].mxu0 %v1308
        %v1433 = vpop.f32.mrb[0].mxu0
        %v1434 = vadd.f32 %v1265, %v1433
        %v1435 = vpop.f32.mrb[0].mxu0
        %v1436 = vpop.f32.mrb[0].mxu0
        %v1437 = vadd.f32 %v1265, %v1436
        %v1438 = vpop.f32.mrb[0].mxu0
        %1439 = vmatprep.mubr.bf16.mxu0 0
        %1440 = vmatmul.mubr.bf16.gmra.mrb[0].mxu0 %v1311
        %v1441 = vpop.f32.mrb[0].mxu0
        %v1442 = vadd.f32 %v1265, %v1441
        %v1443 = vpop.f32.mrb[0].mxu0
        %v1444 = vpop.f32.mrb[0].mxu0
        %v1445 = vadd.f32 %v1265, %v1444
        %v1446 = vpop.f32.mrb[0].mxu0
        %1447 = vmatprep.mubr.bf16.mxu0 0
        %1448 = vmatmul.mubr.bf16.gmra.mrb[0].mxu0 %v1314
        %v1449 = vpop.f32.mrb[0].mxu0
        %v1450 = vadd.f32 %v1265, %v1449
        %v1451 = vpop.f32.mrb[0].mxu0
        %v1452 = vpop.f32.mrb[0].mxu0
        %v1453 = vadd.f32 %v1265, %v1452
        %v1454 = vpop.f32.mrb[0].mxu0
        %1455 = vmatprep.mubr.bf16.mxu0 0
        %1456 = vmatmul.mubr.bf16.gmra.mrb[0].mxu0 %v1317
        %v1457 = vpop.f32.mrb[0].mxu0
        %v1458 = vadd.f32 %v1265, %v1457
        %v1459 = vpop.f32.mrb[0].mxu0
        %v1460 = vpop.f32.mrb[0].mxu0
        %v1461 = vadd.f32 %v1265, %v1460
        %v1462 = vpop.f32.mrb[0].mxu0
        %1463 = vmatprep.mubr.bf16.mxu0 0
        %1464 = vmatmul.mubr.bf16.gmra.mrb[0].mxu0 %v1320
        %v1465 = vpop.f32.mrb[0].mxu0
        %v1466 = vadd.f32 %v1265, %v1465
        %v1467 = vpop.f32.mrb[0].mxu0
        %v1468 = vpop.f32.mrb[0].mxu0
        %v1469 = vadd.f32 %v1265, %v1468
        %v1470 = vpop.f32.mrb[0].mxu0
        %1471 = vmatprep.mubr.bf16.mxu0 0
        %1472 = vmatmul.mubr.bf16.gmra.mrb[0].mxu0 %v1323
        %v1473 = vpop.f32.mrb[0].mxu0
        %v1474 = vadd.f32 %v1265, %v1473
        %v1475 = vpop.f32.mrb[0].mxu0
        %v1476 = vpop.f32.mrb[0].mxu0
        %v1477 = vadd.f32 %v1265, %v1476
        %v1478 = vpop.f32.mrb[0].mxu0
        %1479 = vmatprep.mubr.bf16.mxu0 0
        %1480 = vmatmul.mubr.bf16.gmra.mrb[0].mxu0 %v1326
        %v1481 = vpop.f32.mrb[0].mxu0
        %v1482 = vadd.f32 %v1265, %v1481
        %v1483 = vpop.f32.mrb[0].mxu0
        %v1484 = vpop.f32.mrb[0].mxu0
        %v1485 = vadd.f32 %v1265, %v1484
        %v1486 = vpop.f32.mrb[0].mxu0
        %1487 = vmatprep.mubr.bf16.mxu0 0
        %1488 = vmatmul.mubr.bf16.gmra.mrb[0].mxu0 %v1329
        %v1489 = vpop.f32.mrb[0].mxu0
        %v1490 = vadd.f32 %v1265, %v1489
        %v1491 = vpop.f32.mrb[0].mxu0
        %v1492 = vpop.f32.mrb[0].mxu0
        %v1493 = vadd.f32 %v1265, %v1492
        %v1494 = vpop.f32.mrb[0].mxu0
        %1495 = vdwg.mxu0
        %v1496 = vmax.f32 %v1370, 0.0
        %v1497 = vmax.f32 %v1373, 0.0
        %v1498 = vmax.f32 %v1378, 0.0
        %v1499 = vmax.f32 %v1381, 0.0
        %v1500 = vmax.f32 %v1386, 0.0
        %v1501 = vmax.f32 %v1389, 0.0
        %v1502 = vmax.f32 %v1394, 0.0
        %v1503 = vmax.f32 %v1397, 0.0
        %v1504 = vmax.f32 %v1402, 0.0
        %v1505 = vmax.f32 %v1405, 0.0
        %v1506 = vmax.f32 %v1410, 0.0
        %v1507 = vmax.f32 %v1413, 0.0
        %v1508 = vmax.f32 %v1418, 0.0
        %v1509 = vmax.f32 %v1421, 0.0
        %v1510 = vmax.f32 %v1426, 0.0
        %v1511 = vmax.f32 %v1429, 0.0
        %v1512 = vmax.f32 %v1434, 0.0
        %v1513 = vmax.f32 %v1437, 0.0
        %v1514 = vmax.f32 %v1442, 0.0
        %v1515 = vmax.f32 %v1445, 0.0
        %v1516 = vmax.f32 %v1450, 0.0
        %v1517 = vmax.f32 %v1453, 0.0
        %v1518 = vmax.f32 %v1458, 0.0
        %v1519 = vmax.f32 %v1461, 0.0
        %v1520 = vmax.f32 %v1466, 0.0
        %v1521 = vmax.f32 %v1469, 0.0
        %v1522 = vmax.f32 %v1474, 0.0
        %v1523 = vmax.f32 %v1477, 0.0
        %v1524 = vmax.f32 %v1482, 0.0
        %v1525 = vmax.f32 %v1485, 0.0
        %v1526 = vmax.f32 %v1490, 0.0
        %v1527 = vmax.f32 %v1493, 0.0
        %1528 = vst.msk [vmem:[%s445 + $0x8] sm:$0xff] %vm407, %v1496
        %1529 = vst.msk [vmem:[%s445 + $0x10] sm:$0xff] %vm407, %v1497
        %1530 = vst.msk [vmem:[%s445 + $0x28] sm:$0xff] %vm407, %v1498
        %1531 = vst.msk [vmem:[%s445 + $0x30] sm:$0xff] %vm407, %v1499
        %1532 = vst.msk [vmem:[%s445 + $0x48] sm:$0xff] %vm407, %v1500
        %1533 = vst.msk [vmem:[%s445 + $0x50] sm:$0xff] %vm407, %v1501
        %1534 = vst.msk [vmem:[%s445 + $0x68] sm:$0xff] %vm407, %v1502
        %1535 = vst.msk [vmem:[%s445 + $0x70] sm:$0xff] %vm407, %v1503
        %1536 = vst.msk [vmem:[%s445 + $0x88] sm:$0xff] %vm407, %v1504
        %1537 = vst.msk [vmem:[%s445 + $0x90] sm:$0xff] %vm407, %v1505
        %1538 = vst.msk [vmem:[%s445 + $0xa8] sm:$0xff] %vm407, %v1506
        %1539 = vst.msk [vmem:[%s445 + $0xb0] sm:$0xff] %vm407, %v1507
        %1540 = vst.msk [vmem:[%s445 + $0xc8] sm:$0xff] %vm407, %v1508
        %1541 = vst.msk [vmem:[%s445 + $0xd0] sm:$0xff] %vm407, %v1509
        %1542 = vst.msk [vmem:[%s445 + $0xe8] sm:$0xff] %vm407, %v1510
        %1543 = vst.msk [vmem:[%s445 + $0xf0] sm:$0xff] %vm407, %v1511
        %1544 = vst.msk [vmem:[%s445 + $0x108] sm:$0xff] %vm407, %v1512
        %1545 = vst.msk [vmem:[%s445 + $0x110] sm:$0xff] %vm407, %v1513
        %1546 = vst.msk [vmem:[%s445 + $0x128] sm:$0xff] %vm407, %v1514
        %1547 = vst.msk [vmem:[%s445 + $0x130] sm:$0xff] %vm407, %v1515
        %1548 = vst.msk [vmem:[%s445 + $0x148] sm:$0xff] %vm407, %v1516
        %1549 = vst.msk [vmem:[%s445 + $0x150] sm:$0xff] %vm407, %v1517
        %1550 = vst.msk [vmem:[%s445 + $0x168] sm:$0xff] %vm407, %v1518
        %1551 = vst.msk [vmem:[%s445 + $0x170] sm:$0xff] %vm407, %v1519
        %1552 = vst.msk [vmem:[%s445 + $0x188] sm:$0xff] %vm407, %v1520
        %1553 = vst.msk [vmem:[%s445 + $0x190] sm:$0xff] %vm407, %v1521
        %1554 = vst.msk [vmem:[%s445 + $0x1a8] sm:$0xff] %vm407, %v1522
        %1555 = vst.msk [vmem:[%s445 + $0x1b0] sm:$0xff] %vm407, %v1523
        %1556 = vst.msk [vmem:[%s445 + $0x1c8] sm:$0xff] %vm407, %v1524
        %1557 = vst.msk [vmem:[%s445 + $0x1d0] sm:$0xff] %vm407, %v1525
        %1558 = vst.msk [vmem:[%s445 + $0x1e8] sm:$0xff] %vm407, %v1526
        %1559 = vst.msk [vmem:[%s445 + $0x1f0] sm:$0xff] %vm407, %v1527
        %v1560 = vld [vmem:[#allocation2 + $0x7] sm:$0xff]
        %v1561 = vld [vmem:[#allocation2 + $0xf] sm:$0xff]
        %v1562 = vld [vmem:[#allocation2 + $0x27] sm:$0xff]
        %v1563 = vld [vmem:[#allocation2 + $0x2f] sm:$0xff]
        %v1564 = vld [vmem:[#allocation2 + $0x47] sm:$0xff]
        %v1565 = vld [vmem:[#allocation2 + $0x4f] sm:$0xff]
        %v1566 = vld [vmem:[#allocation2 + $0x67] sm:$0xff]
        %v1567 = vld [vmem:[#allocation2 + $0x6f] sm:$0xff]
        %v1568 = vld [vmem:[#allocation2 + $0x87] sm:$0xff]
        %v1569 = vld [vmem:[#allocation2 + $0x8f] sm:$0xff]
        %v1570 = vld [vmem:[#allocation2 + $0xa7] sm:$0xff]
        %v1571 = vld [vmem:[#allocation2 + $0xaf] sm:$0xff]
        %v1572 = vld [vmem:[#allocation2 + $0xc7] sm:$0xff]
        %v1573 = vld [vmem:[#allocation2 + $0xcf] sm:$0xff]
        %v1574 = vld [vmem:[#allocation2 + $0xe7] sm:$0xff]
        %v1575 = vld [vmem:[#allocation2 + $0xef] sm:$0xff]
        %v1576 = vld [vmem:[#allocation2 + $0x107] sm:$0xff]
        %v1577 = vld [vmem:[#allocation2 + $0x10f] sm:$0xff]
        %v1578 = vld [vmem:[#allocation2 + $0x127] sm:$0xff]
        %v1579 = vld [vmem:[#allocation2 + $0x12f] sm:$0xff]
        %v1580 = vld [vmem:[#allocation2 + $0x147] sm:$0xff]
        %v1581 = vld [vmem:[#allocation2 + $0x14f] sm:$0xff]
        %v1582 = vld [vmem:[#allocation2 + $0x167] sm:$0xff]
        %v1583 = vld [vmem:[#allocation2 + $0x16f] sm:$0xff]
        %v1584 = vld [vmem:[#allocation2 + $0x187] sm:$0xff]
        %v1585 = vld [vmem:[#allocation2 + $0x18f] sm:$0xff]
        %v1586 = vld [vmem:[#allocation2 + $0x1a7] sm:$0xff]
        %v1587 = vld [vmem:[#allocation2 + $0x1af] sm:$0xff]
        %v1588 = vld [vmem:[#allocation2 + $0x1c7] sm:$0xff]
        %v1589 = vld [vmem:[#allocation2 + $0x1cf] sm:$0xff]
        %v1590 = vld [vmem:[#allocation2 + $0x1e7] sm:$0xff]
        %v1591 = vld [vmem:[#allocation2 + $0x1ef] sm:$0xff]
        %v1592 = vld [vmem:[#allocation2 + $0x207] sm:$0xff]
        %v1593 = vld [vmem:[#allocation2 + $0x20f] sm:$0xff]
        %v1594 = vld [vmem:[#allocation2 + $0x227] sm:$0xff]
        %v1595 = vld [vmem:[#allocation2 + $0x22f] sm:$0xff]
        %v1596 = vld [vmem:[#allocation2 + $0x8] sm:$0xff]
        %v1597 = vld [vmem:[#allocation2 + $0x10] sm:$0xff]
        %v1598 = vld [vmem:[#allocation2 + $0x28] sm:$0xff]
        %v1599 = vld [vmem:[#allocation2 + $0x30] sm:$0xff]
        %v1600 = vld [vmem:[#allocation2 + $0x48] sm:$0xff]
        %v1601 = vld [vmem:[#allocation2 + $0x50] sm:$0xff]
        %v1602 = vld [vmem:[#allocation2 + $0x68] sm:$0xff]
        %v1603 = vld [vmem:[#allocation2 + $0x70] sm:$0xff]
        %v1604 = vld [vmem:[#allocation2 + $0x88] sm:$0xff]
        %v1605 = vld [vmem:[#allocation2 + $0x90] sm:$0xff]
        %v1606 = vld [vmem:[#allocation2 + $0xa8] sm:$0xff]
        %v1607 = vld [vmem:[#allocation2 + $0xb0] sm:$0xff]
        %v1608 = vld [vmem:[#allocation2 + $0xc8] sm:$0xff]
        %v1609 = vld [vmem:[#allocation2 + $0xd0] sm:$0xff]
        %v1610 = vld [vmem:[#allocation2 + $0xe8] sm:$0xff]
        %v1611 = vld [vmem:[#allocation2 + $0xf0] sm:$0xff]
        %v1612 = vld [vmem:[#allocation2 + $0x108] sm:$0xff]
        %v1613 = vld [vmem:[#allocation2 + $0x110] sm:$0xff]
        %v1614 = vld [vmem:[#allocation2 + $0x128] sm:$0xff]
        %v1615 = vld [vmem:[#allocation2 + $0x130] sm:$0xff]
        %v1616 = vld [vmem:[#allocation2 + $0x148] sm:$0xff]
        %v1617 = vld [vmem:[#allocation2 + $0x150] sm:$0xff]
        %v1618 = vld [vmem:[#allocation2 + $0x168] sm:$0xff]
        %v1619 = vld [vmem:[#allocation2 + $0x170] sm:$0xff]
        %v1620 = vld [vmem:[#allocation2 + $0x188] sm:$0xff]
        %v1621 = vld [vmem:[#allocation2 + $0x190] sm:$0xff]
        %v1622 = vld [vmem:[#allocation2 + $0x1a8] sm:$0xff]
        %v1623 = vld [vmem:[#allocation2 + $0x1b0] sm:$0xff]
        %v1624 = vld [vmem:[#allocation2 + $0x1c8] sm:$0xff]
        %v1625 = vld [vmem:[#allocation2 + $0x1d0] sm:$0xff]
        %v1626 = vld [vmem:[#allocation2 + $0x1e8] sm:$0xff]
        %v1627 = vld [vmem:[#allocation2 + $0x1f0] sm:$0xff]
        %v1628 = vld [vmem:[#allocation2 + $0x208] sm:$0xff]
        %v1629 = vld [vmem:[#allocation2 + $0x210] sm:$0xff]
        %v1630 = vld [vmem:[#allocation2 + $0x228] sm:$0xff]
        %v1631 = vld [vmem:[#allocation2 + $0x230] sm:$0xff]
        %v1632 = vld [vmem:[#allocation2 + $0x9] sm:$0xff]
        %v1633 = vld [vmem:[#allocation2 + $0x11] sm:$0xff]
        %v1634 = vld [vmem:[#allocation2 + $0x29] sm:$0xff]
        %v1635 = vld [vmem:[#allocation2 + $0x31] sm:$0xff]
        %v1636 = vld [vmem:[#allocation2 + $0x49] sm:$0xff]
        %v1637 = vld [vmem:[#allocation2 + $0x51] sm:$0xff]
        %v1638 = vld [vmem:[#allocation2 + $0x69] sm:$0xff]
        %v1639 = vld [vmem:[#allocation2 + $0x71] sm:$0xff]
        %v1640 = vld [vmem:[#allocation2 + $0x89] sm:$0xff]
        %v1641 = vld [vmem:[#allocation2 + $0x91] sm:$0xff]
        %v1642 = vld [vmem:[#allocation2 + $0xa9] sm:$0xff]
        %v1643 = vld [vmem:[#allocation2 + $0xb1] sm:$0xff]
        %v1644 = vld [vmem:[#allocation2 + $0xc9] sm:$0xff]
        %v1645 = vld [vmem:[#allocation2 + $0xd1] sm:$0xff]
        %v1646 = vld [vmem:[#allocation2 + $0xe9] sm:$0xff]
        %v1647 = vld [vmem:[#allocation2 + $0xf1] sm:$0xff]
        %v1648 = vld [vmem:[#allocation2 + $0x109] sm:$0xff]
        %v1649 = vld [vmem:[#allocation2 + $0x111] sm:$0xff]
        %v1650 = vld [vmem:[#allocation2 + $0x129] sm:$0xff]
        %v1651 = vld [vmem:[#allocation2 + $0x131] sm:$0xff]
        %v1652 = vld [vmem:[#allocation2 + $0x149] sm:$0xff]
        %v1653 = vld [vmem:[#allocation2 + $0x151] sm:$0xff]
        %v1654 = vld [vmem:[#allocation2 + $0x169] sm:$0xff]
        %v1655 = vld [vmem:[#allocation2 + $0x171] sm:$0xff]
        %v1656 = vld [vmem:[#allocation2 + $0x189] sm:$0xff]
        %v1657 = vld [vmem:[#allocation2 + $0x191] sm:$0xff]
        %v1658 = vld [vmem:[#allocation2 + $0x1a9] sm:$0xff]
        %v1659 = vld [vmem:[#allocation2 + $0x1b1] sm:$0xff]
        %v1660 = vld [vmem:[#allocation2 + $0x1c9] sm:$0xff]
        %v1661 = vld [vmem:[#allocation2 + $0x1d1] sm:$0xff]
        %v1662 = vld [vmem:[#allocation2 + $0x1e9] sm:$0xff]
        %v1663 = vld [vmem:[#allocation2 + $0x1f1] sm:$0xff]
        %v1664 = vld [vmem:[#allocation2 + $0x209] sm:$0xff]
        %v1665 = vld [vmem:[#allocation2 + $0x211] sm:$0xff]
        %v1666 = vld [vmem:[#allocation2 + $0x229] sm:$0xff]
        %v1667 = vld [vmem:[#allocation2 + $0x231] sm:$0xff]
        %1704 = vrot.lane.b32.xlu0 %v1596, 8
        %v1705 = vpop.permute.xlu0 %1704
        %1706 = vrot.lane.b32.xlu0 %v1597, 8
        %v1707 = vpop.permute.xlu0 %1706
        %1708 = vrot.lane.b32.xlu0 %v1598, 8
        %v1709 = vpop.permute.xlu0 %1708
        %1710 = vrot.lane.b32.xlu0 %v1599, 8
        %v1711 = vpop.permute.xlu0 %1710
        %1712 = vrot.lane.b32.xlu0 %v1600, 8
        %v1713 = vpop.permute.xlu0 %1712
        %1714 = vrot.lane.b32.xlu0 %v1601, 8
        %v1715 = vpop.permute.xlu0 %1714
        %1716 = vrot.lane.b32.xlu0 %v1602, 8
        %v1717 = vpop.permute.xlu0 %1716
        %1718 = vrot.lane.b32.xlu0 %v1603, 8
        %v1719 = vpop.permute.xlu0 %1718
        %1720 = vrot.lane.b32.xlu0 %v1604, 8
        %v1721 = vpop.permute.xlu0 %1720
        %1722 = vrot.lane.b32.xlu0 %v1605, 8
        %v1723 = vpop.permute.xlu0 %1722
        %1724 = vrot.lane.b32.xlu0 %v1606, 8
        %v1725 = vpop.permute.xlu0 %1724
        %1726 = vrot.lane.b32.xlu0 %v1607, 8
        %v1727 = vpop.permute.xlu0 %1726
        %1728 = vrot.lane.b32.xlu0 %v1608, 8
        %v1729 = vpop.permute.xlu0 %1728
        %1730 = vrot.lane.b32.xlu0 %v1609, 8
        %v1731 = vpop.permute.xlu0 %1730
        %1732 = vrot.lane.b32.xlu0 %v1610, 8
        %v1733 = vpop.permute.xlu0 %1732
        %1734 = vrot.lane.b32.xlu0 %v1611, 8
        %v1735 = vpop.permute.xlu0 %1734
        %1736 = vrot.lane.b32.xlu0 %v1612, 8
        %v1737 = vpop.permute.xlu0 %1736
        %1738 = vrot.lane.b32.xlu0 %v1613, 8
        %v1739 = vpop.permute.xlu0 %1738
        %1740 = vrot.lane.b32.xlu0 %v1614, 8
        %v1741 = vpop.permute.xlu0 %1740
        %1742 = vrot.lane.b32.xlu0 %v1615, 8
        %v1743 = vpop.permute.xlu0 %1742
        %1744 = vrot.lane.b32.xlu0 %v1616, 8
        %v1745 = vpop.permute.xlu0 %1744
        %1746 = vrot.lane.b32.xlu0 %v1617, 8
        %v1747 = vpop.permute.xlu0 %1746
        %1748 = vrot.lane.b32.xlu0 %v1618, 8
        %v1749 = vpop.permute.xlu0 %1748
        %1750 = vrot.lane.b32.xlu0 %v1619, 8
        %v1751 = vpop.permute.xlu0 %1750
        %1752 = vrot.lane.b32.xlu0 %v1620, 8
        %v1753 = vpop.permute.xlu0 %1752
        %1754 = vrot.lane.b32.xlu0 %v1621, 8
        %v1755 = vpop.permute.xlu0 %1754
        %1756 = vrot.lane.b32.xlu0 %v1622, 8
        %v1757 = vpop.permute.xlu0 %1756
        %1758 = vrot.lane.b32.xlu0 %v1623, 8
        %v1759 = vpop.permute.xlu0 %1758
        %1760 = vrot.lane.b32.xlu0 %v1624, 8
        %v1761 = vpop.permute.xlu0 %1760
        %1762 = vrot.lane.b32.xlu0 %v1625, 8
        %v1763 = vpop.permute.xlu0 %1762
        %1764 = vrot.lane.b32.xlu0 %v1626, 8
        %v1765 = vpop.permute.xlu0 %1764
        %1766 = vrot.lane.b32.xlu0 %v1627, 8
        %v1767 = vpop.permute.xlu0 %1766
        %1768 = vrot.lane.b32.xlu0 %v1628, 8
        %v1769 = vpop.permute.xlu0 %1768
        %1770 = vrot.lane.b32.xlu0 %v1629, 8
        %v1771 = vpop.permute.xlu0 %1770
        %1772 = vrot.lane.b32.xlu0 %v1630, 8
        %v1773 = vpop.permute.xlu0 %1772
        %1774 = vrot.lane.b32.xlu0 %v1631, 8
        %v1775 = vpop.permute.xlu0 %1774
        %1848 = vrot.lane.b32.xlu0 %v1632, 16
        %v1849 = vpop.permute.xlu0 %1848
        %1850 = vrot.lane.b32.xlu0 %v1633, 16
        %v1851 = vpop.permute.xlu0 %1850
        %1852 = vrot.lane.b32.xlu0 %v1634, 16
        %v1853 = vpop.permute.xlu0 %1852
        %1854 = vrot.lane.b32.xlu0 %v1635, 16
        %v1855 = vpop.permute.xlu0 %1854
        %1856 = vrot.lane.b32.xlu0 %v1636, 16
        %v1857 = vpop.permute.xlu0 %1856
        %1858 = vrot.lane.b32.xlu0 %v1637, 16
        %v1859 = vpop.permute.xlu0 %1858
        %1860 = vrot.lane.b32.xlu0 %v1638, 16
        %v1861 = vpop.permute.xlu0 %1860
        %1862 = vrot.lane.b32.xlu0 %v1639, 16
        %v1863 = vpop.permute.xlu0 %1862
        %1864 = vrot.lane.b32.xlu0 %v1640, 16
        %v1865 = vpop.permute.xlu0 %1864
        %1866 = vrot.lane.b32.xlu0 %v1641, 16
        %v1867 = vpop.permute.xlu0 %1866
        %1868 = vrot.lane.b32.xlu0 %v1642, 16
        %v1869 = vpop.permute.xlu0 %1868
        %1870 = vrot.lane.b32.xlu0 %v1643, 16
        %v1871 = vpop.permute.xlu0 %1870
        %1872 = vrot.lane.b32.xlu0 %v1644, 16
        %v1873 = vpop.permute.xlu0 %1872
        %1874 = vrot.lane.b32.xlu0 %v1645, 16
        %v1875 = vpop.permute.xlu0 %1874
        %1876 = vrot.lane.b32.xlu0 %v1646, 16
        %v1877 = vpop.permute.xlu0 %1876
        %1878 = vrot.lane.b32.xlu0 %v1647, 16
        %v1879 = vpop.permute.xlu0 %1878
        %1880 = vrot.lane.b32.xlu0 %v1648, 16
        %v1881 = vpop.permute.xlu0 %1880
        %1882 = vrot.lane.b32.xlu0 %v1649, 16
        %v1883 = vpop.permute.xlu0 %1882
        %1884 = vrot.lane.b32.xlu0 %v1650, 16
        %v1885 = vpop.permute.xlu0 %1884
        %1886 = vrot.lane.b32.xlu0 %v1651, 16
        %v1887 = vpop.permute.xlu0 %1886
        %1888 = vrot.lane.b32.xlu0 %v1652, 16
        %v1889 = vpop.permute.xlu0 %1888
        %1890 = vrot.lane.b32.xlu0 %v1653, 16
        %v1891 = vpop.permute.xlu0 %1890
        %1892 = vrot.lane.b32.xlu0 %v1654, 16
        %v1893 = vpop.permute.xlu0 %1892
        %1894 = vrot.lane.b32.xlu0 %v1655, 16
        %v1895 = vpop.permute.xlu0 %1894
        %1896 = vrot.lane.b32.xlu0 %v1656, 16
        %v1897 = vpop.permute.xlu0 %1896
        %1898 = vrot.lane.b32.xlu0 %v1657, 16
        %v1899 = vpop.permute.xlu0 %1898
        %1900 = vrot.lane.b32.xlu0 %v1658, 16
        %v1901 = vpop.permute.xlu0 %1900
        %1902 = vrot.lane.b32.xlu0 %v1659, 16
        %v1903 = vpop.permute.xlu0 %1902
        %1904 = vrot.lane.b32.xlu0 %v1660, 16
        %v1905 = vpop.permute.xlu0 %1904
        %1906 = vrot.lane.b32.xlu0 %v1661, 16
        %v1907 = vpop.permute.xlu0 %1906
        %1908 = vrot.lane.b32.xlu0 %v1662, 16
        %v1909 = vpop.permute.xlu0 %1908
        %1910 = vrot.lane.b32.xlu0 %v1663, 16
        %v1911 = vpop.permute.xlu0 %1910
        %1912 = vrot.lane.b32.xlu0 %v1664, 16
        %v1913 = vpop.permute.xlu0 %1912
        %1914 = vrot.lane.b32.xlu0 %v1665, 16
        %v1915 = vpop.permute.xlu0 %1914
        %1916 = vrot.lane.b32.xlu0 %v1666, 16
        %v1917 = vpop.permute.xlu0 %1916
        %1918 = vrot.lane.b32.xlu0 %v1667, 16
        %v1919 = vpop.permute.xlu0 %1918
        %v1956 = vsel %vm407, %v1560, %v1705
        %v1957 = vsel %vm407, %v1561, %v1707
        %v1958 = vsel %vm407, %v1562, %v1709
        %v1959 = vsel %vm407, %v1563, %v1711
        %v1960 = vsel %vm407, %v1564, %v1713
        %v1961 = vsel %vm407, %v1565, %v1715
        %v1962 = vsel %vm407, %v1566, %v1717
        %v1963 = vsel %vm407, %v1567, %v1719
        %v1964 = vsel %vm407, %v1568, %v1721
        %v1965 = vsel %vm407, %v1569, %v1723
        %v1966 = vsel %vm407, %v1570, %v1725
        %v1967 = vsel %vm407, %v1571, %v1727
        %v1968 = vsel %vm407, %v1572, %v1729
        %v1969 = vsel %vm407, %v1573, %v1731
        %v1970 = vsel %vm407, %v1574, %v1733
        %v1971 = vsel %vm407, %v1575, %v1735
        %v1972 = vsel %vm407, %v1576, %v1737
        %v1973 = vsel %vm407, %v1577, %v1739
        %v1974 = vsel %vm407, %v1578, %v1741
        %v1975 = vsel %vm407, %v1579, %v1743
        %v1976 = vsel %vm407, %v1580, %v1745
        %v1977 = vsel %vm407, %v1581, %v1747
        %v1978 = vsel %vm407, %v1582, %v1749
        %v1979 = vsel %vm407, %v1583, %v1751
        %v1980 = vsel %vm407, %v1584, %v1753
        %v1981 = vsel %vm407, %v1585, %v1755
        %v1982 = vsel %vm407, %v1586, %v1757
        %v1983 = vsel %vm407, %v1587, %v1759
        %v1984 = vsel %vm407, %v1588, %v1761
        %v1985 = vsel %vm407, %v1589, %v1763
        %v1986 = vsel %vm407, %v1590, %v1765
        %v1987 = vsel %vm407, %v1591, %v1767
        %v1988 = vsel %vm407, %v1592, %v1769
        %v1989 = vsel %vm407, %v1593, %v1771
        %v1990 = vsel %vm407, %v1594, %v1773
        %v1991 = vsel %vm407, %v1595, %v1775
        %vm1992 = vcmask 130048
        %v1993 = vsel %vm1992, %v1956, %v1849
        %v1994 = vsel %vm1992, %v1957, %v1851
        %v1995 = vsel %vm1992, %v1958, %v1853
        %v1996 = vsel %vm1992, %v1959, %v1855
        %v1997 = vsel %vm1992, %v1960, %v1857
        %v1998 = vsel %vm1992, %v1961, %v1859
        %v1999 = vsel %vm1992, %v1962, %v1861
        %v2000 = vsel %vm1992, %v1963, %v1863
        %v2001 = vsel %vm1992, %v1964, %v1865
        %v2002 = vsel %vm1992, %v1965, %v1867
        %v2003 = vsel %vm1992, %v1966, %v1869
        %v2004 = vsel %vm1992, %v1967, %v1871
        %v2005 = vsel %vm1992, %v1968, %v1873
        %v2006 = vsel %vm1992, %v1969, %v1875
        %v2007 = vsel %vm1992, %v1970, %v1877
        %v2008 = vsel %vm1992, %v1971, %v1879
        %v2009 = vsel %vm1992, %v1972, %v1881
        %v2010 = vsel %vm1992, %v1973, %v1883
        %v2011 = vsel %vm1992, %v1974, %v1885
        %v2012 = vsel %vm1992, %v1975, %v1887
        %v2013 = vsel %vm1992, %v1976, %v1889
        %v2014 = vsel %vm1992, %v1977, %v1891
        %v2015 = vsel %vm1992, %v1978, %v1893
        %v2016 = vsel %vm1992, %v1979, %v1895
        %v2017 = vsel %vm1992, %v1980, %v1897
        %v2018 = vsel %vm1992, %v1981, %v1899
        %v2019 = vsel %vm1992, %v1982, %v1901
        %v2020 = vsel %vm1992, %v1983, %v1903
        %v2021 = vsel %vm1992, %v1984, %v1905
        %v2022 = vsel %vm1992, %v1985, %v1907
        %v2023 = vsel %vm1992, %v1986, %v1909
        %v2024 = vsel %vm1992, %v1987, %v1911
        %v2025 = vsel %vm1992, %v1988, %v1913
        %v2026 = vsel %vm1992, %v1989, %v1915
        %v2027 = vsel %vm1992, %v1990, %v1917
        %v2028 = vsel %vm1992, %v1991, %v1919
        %2061 = vrot.lane.b32.xlu0 %v1995, 24
        %v2062 = vpop.permute.xlu0 %2061
        %2063 = vrot.lane.b32.xlu0 %v1996, 24
        %v2064 = vpop.permute.xlu0 %2063
        %2065 = vrot.lane.b32.xlu0 %v1997, 24
        %v2066 = vpop.permute.xlu0 %2065
        %2067 = vrot.lane.b32.xlu0 %v1998, 24
        %v2068 = vpop.permute.xlu0 %2067
        %2069 = vrot.lane.b32.xlu0 %v1999, 24
        %v2070 = vpop.permute.xlu0 %2069
        %2071 = vrot.lane.b32.xlu0 %v2000, 24
        %v2072 = vpop.permute.xlu0 %2071
        %2073 = vrot.lane.b32.xlu0 %v2001, 24
        %v2074 = vpop.permute.xlu0 %2073
        %2075 = vrot.lane.b32.xlu0 %v2002, 24
        %v2076 = vpop.permute.xlu0 %2075
        %2077 = vrot.lane.b32.xlu0 %v2003, 24
        %v2078 = vpop.permute.xlu0 %2077
        %2079 = vrot.lane.b32.xlu0 %v2004, 24
        %v2080 = vpop.permute.xlu0 %2079
        %2081 = vrot.lane.b32.xlu0 %v2005, 24
        %v2082 = vpop.permute.xlu0 %2081
        %2083 = vrot.lane.b32.xlu0 %v2006, 24
        %v2084 = vpop.permute.xlu0 %2083
        %2085 = vrot.lane.b32.xlu0 %v2007, 24
        %v2086 = vpop.permute.xlu0 %2085
        %2087 = vrot.lane.b32.xlu0 %v2008, 24
        %v2088 = vpop.permute.xlu0 %2087
        %2089 = vrot.lane.b32.xlu0 %v2009, 24
        %v2090 = vpop.permute.xlu0 %2089
        %2091 = vrot.lane.b32.xlu0 %v2010, 24
        %v2092 = vpop.permute.xlu0 %2091
        %2093 = vrot.lane.b32.xlu0 %v2011, 24
        %v2094 = vpop.permute.xlu0 %2093
        %2095 = vrot.lane.b32.xlu0 %v2012, 24
        %v2096 = vpop.permute.xlu0 %2095
        %2097 = vrot.lane.b32.xlu0 %v2013, 24
        %v2098 = vpop.permute.xlu0 %2097
        %2099 = vrot.lane.b32.xlu0 %v2014, 24
        %v2100 = vpop.permute.xlu0 %2099
        %2101 = vrot.lane.b32.xlu0 %v2015, 24
        %v2102 = vpop.permute.xlu0 %2101
        %2103 = vrot.lane.b32.xlu0 %v2016, 24
        %v2104 = vpop.permute.xlu0 %2103
        %2105 = vrot.lane.b32.xlu0 %v2017, 24
        %v2106 = vpop.permute.xlu0 %2105
        %2107 = vrot.lane.b32.xlu0 %v2018, 24
        %v2108 = vpop.permute.xlu0 %2107
        %2109 = vrot.lane.b32.xlu0 %v2019, 24
        %v2110 = vpop.permute.xlu0 %2109
        %2111 = vrot.lane.b32.xlu0 %v2020, 24
        %v2112 = vpop.permute.xlu0 %2111
        %2113 = vrot.lane.b32.xlu0 %v2021, 24
        %v2114 = vpop.permute.xlu0 %2113
        %2115 = vrot.lane.b32.xlu0 %v2022, 24
        %v2116 = vpop.permute.xlu0 %2115
        %2117 = vrot.lane.b32.xlu0 %v2023, 24
        %v2118 = vpop.permute.xlu0 %2117
        %2119 = vrot.lane.b32.xlu0 %v2024, 24
        %v2120 = vpop.permute.xlu0 %2119
        %2121 = vrot.lane.b32.xlu0 %v2025, 24
        %v2122 = vpop.permute.xlu0 %2121
        %2123 = vrot.lane.b32.xlu0 %v2026, 24
        %v2124 = vpop.permute.xlu0 %2123
        %2159 = vrot.lane.b32.xlu0 %v1997, 48
        %v2160 = vpop.permute.xlu0 %2159
        %2161 = vrot.lane.b32.xlu0 %v1998, 48
        %v2162 = vpop.permute.xlu0 %2161
        %2163 = vrot.lane.b32.xlu0 %v1999, 48
        %v2164 = vpop.permute.xlu0 %2163
        %2165 = vrot.lane.b32.xlu0 %v2000, 48
        %v2166 = vpop.permute.xlu0 %2165
        %2167 = vrot.lane.b32.xlu0 %v2001, 48
        %v2168 = vpop.permute.xlu0 %2167
        %2169 = vrot.lane.b32.xlu0 %v2002, 48
        %v2170 = vpop.permute.xlu0 %2169
        %2171 = vrot.lane.b32.xlu0 %v2003, 48
        %v2172 = vpop.permute.xlu0 %2171
        %2173 = vrot.lane.b32.xlu0 %v2004, 48
        %v2174 = vpop.permute.xlu0 %2173
        %2175 = vrot.lane.b32.xlu0 %v2005, 48
        %v2176 = vpop.permute.xlu0 %2175
        %2177 = vrot.lane.b32.xlu0 %v2006, 48
        %v2178 = vpop.permute.xlu0 %2177
        %2179 = vrot.lane.b32.xlu0 %v2007, 48
        %v2180 = vpop.permute.xlu0 %2179
        %2181 = vrot.lane.b32.xlu0 %v2008, 48
        %v2182 = vpop.permute.xlu0 %2181
        %2183 = vrot.lane.b32.xlu0 %v2009, 48
        %v2184 = vpop.permute.xlu0 %2183
        %2185 = vrot.lane.b32.xlu0 %v2010, 48
        %v2186 = vpop.permute.xlu0 %2185
        %2187 = vrot.lane.b32.xlu0 %v2011, 48
        %v2188 = vpop.permute.xlu0 %2187
        %2189 = vrot.lane.b32.xlu0 %v2012, 48
        %v2190 = vpop.permute.xlu0 %2189
        %2191 = vrot.lane.b32.xlu0 %v2013, 48
        %v2192 = vpop.permute.xlu0 %2191
        %2193 = vrot.lane.b32.xlu0 %v2014, 48
        %v2194 = vpop.permute.xlu0 %2193
        %2195 = vrot.lane.b32.xlu0 %v2015, 48
        %v2196 = vpop.permute.xlu0 %2195
        %2197 = vrot.lane.b32.xlu0 %v2016, 48
        %v2198 = vpop.permute.xlu0 %2197
        %2199 = vrot.lane.b32.xlu0 %v2017, 48
        %v2200 = vpop.permute.xlu0 %2199
        %2201 = vrot.lane.b32.xlu0 %v2018, 48
        %v2202 = vpop.permute.xlu0 %2201
        %2203 = vrot.lane.b32.xlu0 %v2019, 48
        %v2204 = vpop.permute.xlu0 %2203
        %2205 = vrot.lane.b32.xlu0 %v2020, 48
        %v2206 = vpop.permute.xlu0 %2205
        %2207 = vrot.lane.b32.xlu0 %v2021, 48
        %v2208 = vpop.permute.xlu0 %2207
        %2209 = vrot.lane.b32.xlu0 %v2022, 48
        %v2210 = vpop.permute.xlu0 %2209
        %2211 = vrot.lane.b32.xlu0 %v2023, 48
        %v2212 = vpop.permute.xlu0 %2211
        %2213 = vrot.lane.b32.xlu0 %v2024, 48
        %v2214 = vpop.permute.xlu0 %2213
        %2215 = vrot.lane.b32.xlu0 %v2025, 48
        %v2216 = vpop.permute.xlu0 %2215
        %2217 = vrot.lane.b32.xlu0 %v2026, 48
        %v2218 = vpop.permute.xlu0 %2217
        %2219 = vrot.lane.b32.xlu0 %v2027, 48
        %v2220 = vpop.permute.xlu0 %2219
        %2221 = vrot.lane.b32.xlu0 %v2028, 48
        %v2222 = vpop.permute.xlu0 %2221
        %v2255 = vsel %vm1206, %v1993, %v2062
        %v2256 = vsel %vm1206, %v1994, %v2064
        %v2257 = vsel %vm1206, %v1995, %v2066
        %v2258 = vsel %vm1206, %v1996, %v2068
        %v2259 = vsel %vm1206, %v1997, %v2070
        %v2260 = vsel %vm1206, %v1998, %v2072
        %v2261 = vsel %vm1206, %v1999, %v2074
        %v2262 = vsel %vm1206, %v2000, %v2076
        %v2263 = vsel %vm1206, %v2001, %v2078
        %v2264 = vsel %vm1206, %v2002, %v2080
        %v2265 = vsel %vm1206, %v2003, %v2082
        %v2266 = vsel %vm1206, %v2004, %v2084
        %v2267 = vsel %vm1206, %v2005, %v2086
        %v2268 = vsel %vm1206, %v2006, %v2088
        %v2269 = vsel %vm1206, %v2007, %v2090
        %v2270 = vsel %vm1206, %v2008, %v2092
        %v2271 = vsel %vm1206, %v2009, %v2094
        %v2272 = vsel %vm1206, %v2010, %v2096
        %v2273 = vsel %vm1206, %v2011, %v2098
        %v2274 = vsel %vm1206, %v2012, %v2100
        %v2275 = vsel %vm1206, %v2013, %v2102
        %v2276 = vsel %vm1206, %v2014, %v2104
        %v2277 = vsel %vm1206, %v2015, %v2106
        %v2278 = vsel %vm1206, %v2016, %v2108
        %v2279 = vsel %vm1206, %v2017, %v2110
        %v2280 = vsel %vm1206, %v2018, %v2112
        %v2281 = vsel %vm1206, %v2019, %v2114
        %v2282 = vsel %vm1206, %v2020, %v2116
        %v2283 = vsel %vm1206, %v2021, %v2118
        %v2284 = vsel %vm1206, %v2022, %v2120
        %v2285 = vsel %vm1206, %v2023, %v2122
        %v2286 = vsel %vm1206, %v2024, %v2124
        %vm2287 = vcmask 392192
        %v2288 = vsel %vm2287, %v2255, %v2160
        %v2289 = vsel %vm2287, %v2256, %v2162
        %v2290 = vsel %vm2287, %v2257, %v2164
        %v2291 = vsel %vm2287, %v2258, %v2166
        %v2292 = vsel %vm2287, %v2259, %v2168
        %v2293 = vsel %vm2287, %v2260, %v2170
        %v2294 = vsel %vm2287, %v2261, %v2172
        %v2295 = vsel %vm2287, %v2262, %v2174
        %v2296 = vsel %vm2287, %v2263, %v2176
        %v2297 = vsel %vm2287, %v2264, %v2178
        %v2298 = vsel %vm2287, %v2265, %v2180
        %v2299 = vsel %vm2287, %v2266, %v2182
        %v2300 = vsel %vm2287, %v2267, %v2184
        %v2301 = vsel %vm2287, %v2268, %v2186
        %v2302 = vsel %vm2287, %v2269, %v2188
        %v2303 = vsel %vm2287, %v2270, %v2190
        %v2304 = vsel %vm2287, %v2271, %v2192
        %v2305 = vsel %vm2287, %v2272, %v2194
        %v2306 = vsel %vm2287, %v2273, %v2196
        %v2307 = vsel %vm2287, %v2274, %v2198
        %v2308 = vsel %vm2287, %v2275, %v2200
        %v2309 = vsel %vm2287, %v2276, %v2202
        %v2310 = vsel %vm2287, %v2277, %v2204
        %v2311 = vsel %vm2287, %v2278, %v2206
        %v2312 = vsel %vm2287, %v2279, %v2208
        %v2313 = vsel %vm2287, %v2280, %v2210
        %v2314 = vsel %vm2287, %v2281, %v2212
        %v2315 = vsel %vm2287, %v2282, %v2214
        %v2316 = vsel %vm2287, %v2283, %v2216
        %v2317 = vsel %vm2287, %v2284, %v2218
        %v2318 = vsel %vm2287, %v2285, %v2220
        %v2319 = vsel %vm2287, %v2286, %v2222
        %v2320 = vpack.c.bf16 %v2289, %v2288
        %v2321 = vpack.c.bf16 %v2291, %v2290
        %v2322 = vpack.c.bf16 %v2293, %v2292
        %v2323 = vpack.c.bf16 %v2295, %v2294
        %v2324 = vpack.c.bf16 %v2297, %v2296
        %v2325 = vpack.c.bf16 %v2299, %v2298
        %v2326 = vpack.c.bf16 %v2301, %v2300
        %v2327 = vpack.c.bf16 %v2303, %v2302
        %v2328 = vpack.c.bf16 %v2305, %v2304
        %v2329 = vpack.c.bf16 %v2307, %v2306
        %v2330 = vpack.c.bf16 %v2309, %v2308
        %v2331 = vpack.c.bf16 %v2311, %v2310
        %v2332 = vpack.c.bf16 %v2313, %v2312
        %v2333 = vpack.c.bf16 %v2315, %v2314
        %v2334 = vpack.c.bf16 %v2317, %v2316
        %v2335 = vpack.c.bf16 %v2319, %v2318
        %v2336 = vld [vmem:[%s3] sm:$0xf]
        %v2337 = vld [vmem:[%s3 + $0x4] sm:$0xf]
        %v2338 = vld [vmem:[%s3 + $0x8] sm:$0xf]
        %v2339 = vld [vmem:[%s3 + $0xc] sm:$0xf]
        %v2340 = vld [vmem:[%s3 + $0x10] sm:$0xf]
        %v2341 = vld [vmem:[%s3 + $0x14] sm:$0xf]
        %v2342 = vld [vmem:[%s3 + $0x18] sm:$0xf]
        %v2343 = vld [vmem:[%s3 + $0x1c] sm:$0xf]
        %v2344 = vld [vmem:[%s3 + $0x20] sm:$0xf]
        %v2345 = vld [vmem:[%s4] sm:$0x1]
        %v2347 = vlaneseq
        %v2348 = vshrl.u32 %v2347, 7
        %v2349 = vsub.s32 0, %v2348
        %v2350 = vrot.slane %v2345, %v2349
        %v2361 = vunpack.c.l.b16 %v2336
        %v2362 = vunpack.c.l.b16 %v2337
        %v2363 = vunpack.c.l.b16 %v2338
        %v2364 = vunpack.c.l.b16 %v2339
        %v2365 = vunpack.c.l.b16 %v2340
        %v2366 = vunpack.c.l.b16 %v2341
        %v2367 = vunpack.c.l.b16 %v2342
        %v2368 = vunpack.c.l.b16 %v2343
        %v2369 = vunpack.c.l.b16 %v2344
        %v2370 = vpack.c.b16 %v2362, %v2361
        %v2371 = vpack.c.b16 %v2364, %v2363
        %v2372 = vpack.c.b16 %v2366, %v2365
        %v2373 = vpack.c.b16 %v2368, %v2367
        %v2374 = vpack.c.b16 %v2369, %v2369
        %vm2379 = vcmask 588800
        %v2381 = vsel %vm2379, %v2320, 0
        %v2384 = vsel %vm2379, %v2321, 0
        %v2387 = vsel %vm2379, %v2322, 0
        %v2390 = vsel %vm2379, %v2323, 0
        %v2393 = vsel %vm2379, %v2324, 0
        %v2396 = vsel %vm2379, %v2325, 0
        %v2399 = vsel %vm2379, %v2326, 0
        %v2402 = vsel %vm2379, %v2327, 0
        %v2405 = vsel %vm2379, %v2328, 0
        %v2408 = vsel %vm2379, %v2329, 0
        %v2411 = vsel %vm2379, %v2330, 0
        %v2414 = vsel %vm2379, %v2331, 0
        %v2417 = vsel %vm2379, %v2332, 0
        %v2420 = vsel %vm2379, %v2333, 0
        %v2423 = vsel %vm2379, %v2334, 0
        %v2426 = vsel %vm2379, %v2335, 0
        %vm2428 = vcmask 1043456
        %v2430 = vsel %vm2428, %v2374, 0
        %2432 = vmatprep.subr.bf16.mxu0 0
        %2433 = vmatpush1.bf16.msra.mxu0 %v2370
        %2434 = vmatprep.subr.bf16.mxu0 0
        %2435 = vmatpush1.bf16.msra.mxu0 %v2371
        %2436 = vmatprep.subr.bf16.mxu0 0
        %2437 = vmatpush1.bf16.msra.mxu0 %v2372
        %2438 = vmatprep.subr.bf16.mxu0 0
        %2439 = vmatpush1.bf16.msra.mxu0 %v2373
        %2440 = vmatprep.subr.bf16.mxu0 0
        %2441 = vmatpush1.bf16.msra.mxu0 %v2430
        %2442 = vmatprep.subr.bf16.mxu0 0
        %2443 = vmatpush1.bf16.msra.mxu0 0
        %2444 = vmatprep.subr.bf16.mxu0 0
        %2445 = vmatpush1.bf16.msra.mxu0 0
        %2446 = vmatprep.subr.bf16.mxu0 0
        %2447 = vmatpush1.bf16.msra.mxu0 0
        %2448 = vmatprep.subr.bf16.mxu0 0
        %2449 = vmatpush1.bf16.msra.mxu0 0
        %2450 = vmatprep.subr.bf16.mxu0 0
        %2451 = vmatpush1.bf16.msra.mxu0 0
        %2452 = vmatprep.subr.bf16.mxu0 0
        %2453 = vmatpush1.bf16.msra.mxu0 0
        %2454 = vmatprep.subr.bf16.mxu0 0
        %2455 = vmatpush1.bf16.msra.mxu0 0
        %2456 = vmatprep.subr.bf16.mxu0 0
        %2457 = vmatpush1.bf16.msra.mxu0 0
        %2458 = vmatprep.subr.bf16.mxu0 0
        %2459 = vmatpush1.bf16.msra.mxu0 0
        %2460 = vmatprep.subr.bf16.mxu0 0
        %2461 = vmatpush1.bf16.msra.mxu0 0
        %2462 = vmatprep.subr.bf16.mxu0 0
        %2463 = vmatpush1.bf16.msra.mxu0 0
        %2464 = vmatprep.mubr.bf16.mxu0 0
        %2465 = vmatmul.mubr.bf16.gmra.mrb[0].mxu0 %v2381
        %v2466 = vpop.f32.mrb[0].mxu0
        %v2467 = vadd.f32 %v2350, %v2466
        %v2468 = vpop.f32.mrb[0].mxu0
        %v2469 = vpop.f32.mrb[0].mxu0
        %v2470 = vadd.f32 %v2350, %v2469
        %v2471 = vpop.f32.mrb[0].mxu0
        %2472 = vmatprep.mubr.bf16.mxu0 0
        %2473 = vmatmul.mubr.bf16.gmra.mrb[0].mxu0 %v2384
        %v2474 = vpop.f32.mrb[0].mxu0
        %v2475 = vadd.f32 %v2350, %v2474
        %v2476 = vpop.f32.mrb[0].mxu0
        %v2477 = vpop.f32.mrb[0].mxu0
        %v2478 = vadd.f32 %v2350, %v2477
        %v2479 = vpop.f32.mrb[0].mxu0
        %2480 = vmatprep.mubr.bf16.mxu0 0
        %2481 = vmatmul.mubr.bf16.gmra.mrb[0].mxu0 %v2387
        %v2482 = vpop.f32.mrb[0].mxu0
        %v2483 = vadd.f32 %v2350, %v2482
        %v2484 = vpop.f32.mrb[0].mxu0
        %v2485 = vpop.f32.mrb[0].mxu0
        %v2486 = vadd.f32 %v2350, %v2485
        %v2487 = vpop.f32.mrb[0].mxu0
        %2488 = vmatprep.mubr.bf16.mxu0 0
        %2489 = vmatmul.mubr.bf16.gmra.mrb[0].mxu0 %v2390
        %v2490 = vpop.f32.mrb[0].mxu0
        %v2491 = vadd.f32 %v2350, %v2490
        %v2492 = vpop.f32.mrb[0].mxu0
        %v2493 = vpop.f32.mrb[0].mxu0
        %v2494 = vadd.f32 %v2350, %v2493
        %v2495 = vpop.f32.mrb[0].mxu0
        %2496 = vmatprep.mubr.bf16.mxu0 0
        %2497 = vmatmul.mubr.bf16.gmra.mrb[0].mxu0 %v2393
        %v2498 = vpop.f32.mrb[0].mxu0
        %v2499 = vadd.f32 %v2350, %v2498
        %v2500 = vpop.f32.mrb[0].mxu0
        %v2501 = vpop.f32.mrb[0].mxu0
        %v2502 = vadd.f32 %v2350, %v2501
        %v2503 = vpop.f32.mrb[0].mxu0
        %2504 = vmatprep.mubr.bf16.mxu0 0
        %2505 = vmatmul.mubr.bf16.gmra.mrb[0].mxu0 %v2396
        %v2506 = vpop.f32.mrb[0].mxu0
        %v2507 = vadd.f32 %v2350, %v2506
        %v2508 = vpop.f32.mrb[0].mxu0
        %v2509 = vpop.f32.mrb[0].mxu0
        %v2510 = vadd.f32 %v2350, %v2509
        %v2511 = vpop.f32.mrb[0].mxu0
        %2512 = vmatprep.mubr.bf16.mxu0 0
        %2513 = vmatmul.mubr.bf16.gmra.mrb[0].mxu0 %v2399
        %v2514 = vpop.f32.mrb[0].mxu0
        %v2515 = vadd.f32 %v2350, %v2514
        %v2516 = vpop.f32.mrb[0].mxu0
        %v2517 = vpop.f32.mrb[0].mxu0
        %v2518 = vadd.f32 %v2350, %v2517
        %v2519 = vpop.f32.mrb[0].mxu0
        %2520 = vmatprep.mubr.bf16.mxu0 0
        %2521 = vmatmul.mubr.bf16.gmra.mrb[0].mxu0 %v2402
        %v2522 = vpop.f32.mrb[0].mxu0
        %v2523 = vadd.f32 %v2350, %v2522
        %v2524 = vpop.f32.mrb[0].mxu0
        %v2525 = vpop.f32.mrb[0].mxu0
        %v2526 = vadd.f32 %v2350, %v2525
        %v2527 = vpop.f32.mrb[0].mxu0
        %2528 = vmatprep.mubr.bf16.mxu0 0
        %2529 = vmatmul.mubr.bf16.gmra.mrb[0].mxu0 %v2405
        %v2530 = vpop.f32.mrb[0].mxu0
        %v2531 = vadd.f32 %v2350, %v2530
        %v2532 = vpop.f32.mrb[0].mxu0
        %v2533 = vpop.f32.mrb[0].mxu0
        %v2534 = vadd.f32 %v2350, %v2533
        %v2535 = vpop.f32.mrb[0].mxu0
        %2536 = vmatprep.mubr.bf16.mxu0 0
        %2537 = vmatmul.mubr.bf16.gmra.mrb[0].mxu0 %v2408
        %v2538 = vpop.f32.mrb[0].mxu0
        %v2539 = vadd.f32 %v2350, %v2538
        %v2540 = vpop.f32.mrb[0].mxu0
        %v2541 = vpop.f32.mrb[0].mxu0
        %v2542 = vadd.f32 %v2350, %v2541
        %v2543 = vpop.f32.mrb[0].mxu0
        %2544 = vmatprep.mubr.bf16.mxu0 0
        %2545 = vmatmul.mubr.bf16.gmra.mrb[0].mxu0 %v2411
        %v2546 = vpop.f32.mrb[0].mxu0
        %v2547 = vadd.f32 %v2350, %v2546
        %v2548 = vpop.f32.mrb[0].mxu0
        %v2549 = vpop.f32.mrb[0].mxu0
        %v2550 = vadd.f32 %v2350, %v2549
        %v2551 = vpop.f32.mrb[0].mxu0
        %2552 = vmatprep.mubr.bf16.mxu0 0
        %2553 = vmatmul.mubr.bf16.gmra.mrb[0].mxu0 %v2414
        %v2554 = vpop.f32.mrb[0].mxu0
        %v2555 = vadd.f32 %v2350, %v2554
        %v2556 = vpop.f32.mrb[0].mxu0
        %v2557 = vpop.f32.mrb[0].mxu0
        %v2558 = vadd.f32 %v2350, %v2557
        %v2559 = vpop.f32.mrb[0].mxu0
        %2560 = vmatprep.mubr.bf16.mxu0 0
        %2561 = vmatmul.mubr.bf16.gmra.mrb[0].mxu0 %v2417
        %v2562 = vpop.f32.mrb[0].mxu0
        %v2563 = vadd.f32 %v2350, %v2562
        %v2564 = vpop.f32.mrb[0].mxu0
        %v2565 = vpop.f32.mrb[0].mxu0
        %v2566 = vadd.f32 %v2350, %v2565
        %v2567 = vpop.f32.mrb[0].mxu0
        %2568 = vmatprep.mubr.bf16.mxu0 0
        %2569 = vmatmul.mubr.bf16.gmra.mrb[0].mxu0 %v2420
        %v2570 = vpop.f32.mrb[0].mxu0
        %v2571 = vadd.f32 %v2350, %v2570
        %v2572 = vpop.f32.mrb[0].mxu0
        %v2573 = vpop.f32.mrb[0].mxu0
        %v2574 = vadd.f32 %v2350, %v2573
        %v2575 = vpop.f32.mrb[0].mxu0
        %2576 = vmatprep.mubr.bf16.mxu0 0
        %2577 = vmatmul.mubr.bf16.gmra.mrb[0].mxu0 %v2423
        %v2578 = vpop.f32.mrb[0].mxu0
        %v2579 = vadd.f32 %v2350, %v2578
        %v2580 = vpop.f32.mrb[0].mxu0
        %v2581 = vpop.f32.mrb[0].mxu0
        %v2582 = vadd.f32 %v2350, %v2581
        %v2583 = vpop.f32.mrb[0].mxu0
        %2584 = vmatprep.mubr.bf16.mxu0 0
        %2585 = vmatmul.mubr.bf16.gmra.mrb[0].mxu0 %v2426
        %v2586 = vpop.f32.mrb[0].mxu0
        %v2587 = vadd.f32 %v2350, %v2586
        %v2588 = vpop.f32.mrb[0].mxu0
        %v2589 = vpop.f32.mrb[0].mxu0
        %v2590 = vadd.f32 %v2350, %v2589
        %v2591 = vpop.f32.mrb[0].mxu0
        %2592 = vdwg.mxu0
        %v2593 = vmax.f32 %v2467, 0.0
        %v2594 = vmax.f32 %v2470, 0.0
        %v2595 = vmax.f32 %v2475, 0.0
        %v2596 = vmax.f32 %v2478, 0.0
        %v2597 = vmax.f32 %v2483, 0.0
        %v2598 = vmax.f32 %v2486, 0.0
        %v2599 = vmax.f32 %v2491, 0.0
        %v2600 = vmax.f32 %v2494, 0.0
        %v2601 = vmax.f32 %v2499, 0.0
        %v2602 = vmax.f32 %v2502, 0.0
        %v2603 = vmax.f32 %v2507, 0.0
        %v2604 = vmax.f32 %v2510, 0.0
        %v2605 = vmax.f32 %v2515, 0.0
        %v2606 = vmax.f32 %v2518, 0.0
        %v2607 = vmax.f32 %v2523, 0.0
        %v2608 = vmax.f32 %v2526, 0.0
        %v2609 = vmax.f32 %v2531, 0.0
        %v2610 = vmax.f32 %v2534, 0.0
        %v2611 = vmax.f32 %v2539, 0.0
        %v2612 = vmax.f32 %v2542, 0.0
        %v2613 = vmax.f32 %v2547, 0.0
        %v2614 = vmax.f32 %v2550, 0.0
        %v2615 = vmax.f32 %v2555, 0.0
        %v2616 = vmax.f32 %v2558, 0.0
        %v2617 = vmax.f32 %v2563, 0.0
        %v2618 = vmax.f32 %v2566, 0.0
        %v2619 = vmax.f32 %v2571, 0.0
        %v2620 = vmax.f32 %v2574, 0.0
        %v2621 = vmax.f32 %v2579, 0.0
        %v2622 = vmax.f32 %v2582, 0.0
        %v2623 = vmax.f32 %v2587, 0.0
        %v2624 = vmax.f32 %v2590, 0.0
        %2625 = vst.msk [vmem:[%s445 + $0x8] sm:$0xff] %vm407, %v2593
        %2626 = vst.msk [vmem:[%s445 + $0x10] sm:$0xff] %vm407, %v2594
        %2627 = vst.msk [vmem:[%s445 + $0x28] sm:$0xff] %vm407, %v2595
        %2628 = vst.msk [vmem:[%s445 + $0x30] sm:$0xff] %vm407, %v2596
        %2629 = vst.msk [vmem:[%s445 + $0x48] sm:$0xff] %vm407, %v2597
        %2630 = vst.msk [vmem:[%s445 + $0x50] sm:$0xff] %vm407, %v2598
        %2631 = vst.msk [vmem:[%s445 + $0x68] sm:$0xff] %vm407, %v2599
        %2632 = vst.msk [vmem:[%s445 + $0x70] sm:$0xff] %vm407, %v2600
        %2633 = vst.msk [vmem:[%s445 + $0x88] sm:$0xff] %vm407, %v2601
        %2634 = vst.msk [vmem:[%s445 + $0x90] sm:$0xff] %vm407, %v2602
        %2635 = vst.msk [vmem:[%s445 + $0xa8] sm:$0xff] %vm407, %v2603
        %2636 = vst.msk [vmem:[%s445 + $0xb0] sm:$0xff] %vm407, %v2604
        %2637 = vst.msk [vmem:[%s445 + $0xc8] sm:$0xff] %vm407, %v2605
        %2638 = vst.msk [vmem:[%s445 + $0xd0] sm:$0xff] %vm407, %v2606
        %2639 = vst.msk [vmem:[%s445 + $0xe8] sm:$0xff] %vm407, %v2607
        %2640 = vst.msk [vmem:[%s445 + $0xf0] sm:$0xff] %vm407, %v2608
        %2641 = vst.msk [vmem:[%s445 + $0x108] sm:$0xff] %vm407, %v2609
        %2642 = vst.msk [vmem:[%s445 + $0x110] sm:$0xff] %vm407, %v2610
        %2643 = vst.msk [vmem:[%s445 + $0x128] sm:$0xff] %vm407, %v2611
        %2644 = vst.msk [vmem:[%s445 + $0x130] sm:$0xff] %vm407, %v2612
        %2645 = vst.msk [vmem:[%s445 + $0x148] sm:$0xff] %vm407, %v2613
        %2646 = vst.msk [vmem:[%s445 + $0x150] sm:$0xff] %vm407, %v2614
        %2647 = vst.msk [vmem:[%s445 + $0x168] sm:$0xff] %vm407, %v2615
        %2648 = vst.msk [vmem:[%s445 + $0x170] sm:$0xff] %vm407, %v2616
        %2649 = vst.msk [vmem:[%s445 + $0x188] sm:$0xff] %vm407, %v2617
        %2650 = vst.msk [vmem:[%s445 + $0x190] sm:$0xff] %vm407, %v2618
        %2651 = vst.msk [vmem:[%s445 + $0x1a8] sm:$0xff] %vm407, %v2619
        %2652 = vst.msk [vmem:[%s445 + $0x1b0] sm:$0xff] %vm407, %v2620
        %2653 = vst.msk [vmem:[%s445 + $0x1c8] sm:$0xff] %vm407, %v2621
        %2654 = vst.msk [vmem:[%s445 + $0x1d0] sm:$0xff] %vm407, %v2622
        %2655 = vst.msk [vmem:[%s445 + $0x1e8] sm:$0xff] %vm407, %v2623
        %2656 = vst.msk [vmem:[%s445 + $0x1f0] sm:$0xff] %vm407, %v2624
        %v2657 = vld [vmem:[#allocation2 + $0x7] sm:$0xff]
        %v2658 = vld [vmem:[#allocation2 + $0xf] sm:$0xff]
        %v2659 = vld [vmem:[#allocation2 + $0x27] sm:$0xff]
        %v2660 = vld [vmem:[#allocation2 + $0x2f] sm:$0xff]
        %v2661 = vld [vmem:[#allocation2 + $0x47] sm:$0xff]
        %v2662 = vld [vmem:[#allocation2 + $0x4f] sm:$0xff]
        %v2663 = vld [vmem:[#allocation2 + $0x67] sm:$0xff]
        %v2664 = vld [vmem:[#allocation2 + $0x6f] sm:$0xff]
        %v2665 = vld [vmem:[#allocation2 + $0x87] sm:$0xff]
        %v2666 = vld [vmem:[#allocation2 + $0x8f] sm:$0xff]
        %v2667 = vld [vmem:[#allocation2 + $0xa7] sm:$0xff]
        %v2668 = vld [vmem:[#allocation2 + $0xaf] sm:$0xff]
        %v2669 = vld [vmem:[#allocation2 + $0xc7] sm:$0xff]
        %v2670 = vld [vmem:[#allocation2 + $0xcf] sm:$0xff]
        %v2671 = vld [vmem:[#allocation2 + $0xe7] sm:$0xff]
        %v2672 = vld [vmem:[#allocation2 + $0xef] sm:$0xff]
        %v2673 = vld [vmem:[#allocation2 + $0x107] sm:$0xff]
        %v2674 = vld [vmem:[#allocation2 + $0x10f] sm:$0xff]
        %v2675 = vld [vmem:[#allocation2 + $0x127] sm:$0xff]
        %v2676 = vld [vmem:[#allocation2 + $0x12f] sm:$0xff]
        %v2677 = vld [vmem:[#allocation2 + $0x147] sm:$0xff]
        %v2678 = vld [vmem:[#allocation2 + $0x14f] sm:$0xff]
        %v2679 = vld [vmem:[#allocation2 + $0x167] sm:$0xff]
        %v2680 = vld [vmem:[#allocation2 + $0x16f] sm:$0xff]
        %v2681 = vld [vmem:[#allocation2 + $0x187] sm:$0xff]
        %v2682 = vld [vmem:[#allocation2 + $0x18f] sm:$0xff]
        %v2683 = vld [vmem:[#allocation2 + $0x1a7] sm:$0xff]
        %v2684 = vld [vmem:[#allocation2 + $0x1af] sm:$0xff]
        %v2685 = vld [vmem:[#allocation2 + $0x1c7] sm:$0xff]
        %v2686 = vld [vmem:[#allocation2 + $0x1cf] sm:$0xff]
        %v2687 = vld [vmem:[#allocation2 + $0x1e7] sm:$0xff]
        %v2688 = vld [vmem:[#allocation2 + $0x1ef] sm:$0xff]
        %v2689 = vld [vmem:[#allocation2 + $0x207] sm:$0xff]
        %v2690 = vld [vmem:[#allocation2 + $0x20f] sm:$0xff]
        %v2691 = vld [vmem:[#allocation2 + $0x227] sm:$0xff]
        %v2692 = vld [vmem:[#allocation2 + $0x22f] sm:$0xff]
        %v2693 = vld [vmem:[#allocation2 + $0x8] sm:$0xff]
        %v2694 = vld [vmem:[#allocation2 + $0x10] sm:$0xff]
        %v2695 = vld [vmem:[#allocation2 + $0x28] sm:$0xff]
        %v2696 = vld [vmem:[#allocation2 + $0x30] sm:$0xff]
        %v2697 = vld [vmem:[#allocation2 + $0x48] sm:$0xff]
        %v2698 = vld [vmem:[#allocation2 + $0x50] sm:$0xff]
        %v2699 = vld [vmem:[#allocation2 + $0x68] sm:$0xff]
        %v2700 = vld [vmem:[#allocation2 + $0x70] sm:$0xff]
        %v2701 = vld [vmem:[#allocation2 + $0x88] sm:$0xff]
        %v2702 = vld [vmem:[#allocation2 + $0x90] sm:$0xff]
        %v2703 = vld [vmem:[#allocation2 + $0xa8] sm:$0xff]
        %v2704 = vld [vmem:[#allocation2 + $0xb0] sm:$0xff]
        %v2705 = vld [vmem:[#allocation2 + $0xc8] sm:$0xff]
        %v2706 = vld [vmem:[#allocation2 + $0xd0] sm:$0xff]
        %v2707 = vld [vmem:[#allocation2 + $0xe8] sm:$0xff]
        %v2708 = vld [vmem:[#allocation2 + $0xf0] sm:$0xff]
        %v2709 = vld [vmem:[#allocation2 + $0x108] sm:$0xff]
        %v2710 = vld [vmem:[#allocation2 + $0x110] sm:$0xff]
        %v2711 = vld [vmem:[#allocation2 + $0x128] sm:$0xff]
        %v2712 = vld [vmem:[#allocation2 + $0x130] sm:$0xff]
        %v2713 = vld [vmem:[#allocation2 + $0x148] sm:$0xff]
        %v2714 = vld [vmem:[#allocation2 + $0x150] sm:$0xff]
        %v2715 = vld [vmem:[#allocation2 + $0x168] sm:$0xff]
        %v2716 = vld [vmem:[#allocation2 + $0x170] sm:$0xff]
        %v2717 = vld [vmem:[#allocation2 + $0x188] sm:$0xff]
        %v2718 = vld [vmem:[#allocation2 + $0x190] sm:$0xff]
        %v2719 = vld [vmem:[#allocation2 + $0x1a8] sm:$0xff]
        %v2720 = vld [vmem:[#allocation2 + $0x1b0] sm:$0xff]
        %v2721 = vld [vmem:[#allocation2 + $0x1c8] sm:$0xff]
        %v2722 = vld [vmem:[#allocation2 + $0x1d0] sm:$0xff]
        %v2723 = vld [vmem:[#allocation2 + $0x1e8] sm:$0xff]
        %v2724 = vld [vmem:[#allocation2 + $0x1f0] sm:$0xff]
        %v2725 = vld [vmem:[#allocation2 + $0x208] sm:$0xff]
        %v2726 = vld [vmem:[#allocation2 + $0x210] sm:$0xff]
        %v2727 = vld [vmem:[#allocation2 + $0x228] sm:$0xff]
        %v2728 = vld [vmem:[#allocation2 + $0x230] sm:$0xff]
        %v2729 = vld [vmem:[#allocation2 + $0x9] sm:$0xff]
        %v2730 = vld [vmem:[#allocation2 + $0x11] sm:$0xff]
        %v2731 = vld [vmem:[#allocation2 + $0x29] sm:$0xff]
        %v2732 = vld [vmem:[#allocation2 + $0x31] sm:$0xff]
        %v2733 = vld [vmem:[#allocation2 + $0x49] sm:$0xff]
        %v2734 = vld [vmem:[#allocation2 + $0x51] sm:$0xff]
        %v2735 = vld [vmem:[#allocation2 + $0x69] sm:$0xff]
        %v2736 = vld [vmem:[#allocation2 + $0x71] sm:$0xff]
        %v2737 = vld [vmem:[#allocation2 + $0x89] sm:$0xff]
        %v2738 = vld [vmem:[#allocation2 + $0x91] sm:$0xff]
        %v2739 = vld [vmem:[#allocation2 + $0xa9] sm:$0xff]
        %v2740 = vld [vmem:[#allocation2 + $0xb1] sm:$0xff]
        %v2741 = vld [vmem:[#allocation2 + $0xc9] sm:$0xff]
        %v2742 = vld [vmem:[#allocation2 + $0xd1] sm:$0xff]
        %v2743 = vld [vmem:[#allocation2 + $0xe9] sm:$0xff]
        %v2744 = vld [vmem:[#allocation2 + $0xf1] sm:$0xff]
        %v2745 = vld [vmem:[#allocation2 + $0x109] sm:$0xff]
        %v2746 = vld [vmem:[#allocation2 + $0x111] sm:$0xff]
        %v2747 = vld [vmem:[#allocation2 + $0x129] sm:$0xff]
        %v2748 = vld [vmem:[#allocation2 + $0x131] sm:$0xff]
        %v2749 = vld [vmem:[#allocation2 + $0x149] sm:$0xff]
        %v2750 = vld [vmem:[#allocation2 + $0x151] sm:$0xff]
        %v2751 = vld [vmem:[#allocation2 + $0x169] sm:$0xff]
        %v2752 = vld [vmem:[#allocation2 + $0x171] sm:$0xff]
        %v2753 = vld [vmem:[#allocation2 + $0x189] sm:$0xff]
        %v2754 = vld [vmem:[#allocation2 + $0x191] sm:$0xff]
        %v2755 = vld [vmem:[#allocation2 + $0x1a9] sm:$0xff]
        %v2756 = vld [vmem:[#allocation2 + $0x1b1] sm:$0xff]
        %v2757 = vld [vmem:[#allocation2 + $0x1c9] sm:$0xff]
        %v2758 = vld [vmem:[#allocation2 + $0x1d1] sm:$0xff]
        %v2759 = vld [vmem:[#allocation2 + $0x1e9] sm:$0xff]
        %v2760 = vld [vmem:[#allocation2 + $0x1f1] sm:$0xff]
        %v2761 = vld [vmem:[#allocation2 + $0x209] sm:$0xff]
        %v2762 = vld [vmem:[#allocation2 + $0x211] sm:$0xff]
        %v2763 = vld [vmem:[#allocation2 + $0x229] sm:$0xff]
        %v2764 = vld [vmem:[#allocation2 + $0x231] sm:$0xff]
        %2801 = vrot.lane.b32.xlu0 %v2693, 8
        %v2802 = vpop.permute.xlu0 %2801
        %2803 = vrot.lane.b32.xlu0 %v2694, 8
        %v2804 = vpop.permute.xlu0 %2803
        %2805 = vrot.lane.b32.xlu0 %v2695, 8
        %v2806 = vpop.permute.xlu0 %2805
        %2807 = vrot.lane.b32.xlu0 %v2696, 8
        %v2808 = vpop.permute.xlu0 %2807
        %2809 = vrot.lane.b32.xlu0 %v2697, 8
        %v2810 = vpop.permute.xlu0 %2809
        %2811 = vrot.lane.b32.xlu0 %v2698, 8
        %v2812 = vpop.permute.xlu0 %2811
        %2813 = vrot.lane.b32.xlu0 %v2699, 8
        %v2814 = vpop.permute.xlu0 %2813
        %2815 = vrot.lane.b32.xlu0 %v2700, 8
        %v2816 = vpop.permute.xlu0 %2815
        %2817 = vrot.lane.b32.xlu0 %v2701, 8
        %v2818 = vpop.permute.xlu0 %2817
        %2819 = vrot.lane.b32.xlu0 %v2702, 8
        %v2820 = vpop.permute.xlu0 %2819
        %2821 = vrot.lane.b32.xlu0 %v2703, 8
        %v2822 = vpop.permute.xlu0 %2821
        %2823 = vrot.lane.b32.xlu0 %v2704, 8
        %v2824 = vpop.permute.xlu0 %2823
        %2825 = vrot.lane.b32.xlu0 %v2705, 8
        %v2826 = vpop.permute.xlu0 %2825
        %2827 = vrot.lane.b32.xlu0 %v2706, 8
        %v2828 = vpop.permute.xlu0 %2827
        %2829 = vrot.lane.b32.xlu0 %v2707, 8
        %v2830 = vpop.permute.xlu0 %2829
        %2831 = vrot.lane.b32.xlu0 %v2708, 8
        %v2832 = vpop.permute.xlu0 %2831
        %2833 = vrot.lane.b32.xlu0 %v2709, 8
        %v2834 = vpop.permute.xlu0 %2833
        %2835 = vrot.lane.b32.xlu0 %v2710, 8
        %v2836 = vpop.permute.xlu0 %2835
        %2837 = vrot.lane.b32.xlu0 %v2711, 8
        %v2838 = vpop.permute.xlu0 %2837
        %2839 = vrot.lane.b32.xlu0 %v2712, 8
        %v2840 = vpop.permute.xlu0 %2839
        %2841 = vrot.lane.b32.xlu0 %v2713, 8
        %v2842 = vpop.permute.xlu0 %2841
        %2843 = vrot.lane.b32.xlu0 %v2714, 8
        %v2844 = vpop.permute.xlu0 %2843
        %2845 = vrot.lane.b32.xlu0 %v2715, 8
        %v2846 = vpop.permute.xlu0 %2845
        %2847 = vrot.lane.b32.xlu0 %v2716, 8
        %v2848 = vpop.permute.xlu0 %2847
        %2849 = vrot.lane.b32.xlu0 %v2717, 8
        %v2850 = vpop.permute.xlu0 %2849
        %2851 = vrot.lane.b32.xlu0 %v2718, 8
        %v2852 = vpop.permute.xlu0 %2851
        %2853 = vrot.lane.b32.xlu0 %v2719, 8
        %v2854 = vpop.permute.xlu0 %2853
        %2855 = vrot.lane.b32.xlu0 %v2720, 8
        %v2856 = vpop.permute.xlu0 %2855
        %2857 = vrot.lane.b32.xlu0 %v2721, 8
        %v2858 = vpop.permute.xlu0 %2857
        %2859 = vrot.lane.b32.xlu0 %v2722, 8
        %v2860 = vpop.permute.xlu0 %2859
        %2861 = vrot.lane.b32.xlu0 %v2723, 8
        %v2862 = vpop.permute.xlu0 %2861
        %2863 = vrot.lane.b32.xlu0 %v2724, 8
        %v2864 = vpop.permute.xlu0 %2863
        %2865 = vrot.lane.b32.xlu0 %v2725, 8
        %v2866 = vpop.permute.xlu0 %2865
        %2867 = vrot.lane.b32.xlu0 %v2726, 8
        %v2868 = vpop.permute.xlu0 %2867
        %2869 = vrot.lane.b32.xlu0 %v2727, 8
        %v2870 = vpop.permute.xlu0 %2869
        %2871 = vrot.lane.b32.xlu0 %v2728, 8
        %v2872 = vpop.permute.xlu0 %2871
        %2945 = vrot.lane.b32.xlu0 %v2729, 16
        %v2946 = vpop.permute.xlu0 %2945
        %2947 = vrot.lane.b32.xlu0 %v2730, 16
        %v2948 = vpop.permute.xlu0 %2947
        %2949 = vrot.lane.b32.xlu0 %v2731, 16
        %v2950 = vpop.permute.xlu0 %2949
        %2951 = vrot.lane.b32.xlu0 %v2732, 16
        %v2952 = vpop.permute.xlu0 %2951
        %2953 = vrot.lane.b32.xlu0 %v2733, 16
        %v2954 = vpop.permute.xlu0 %2953
        %2955 = vrot.lane.b32.xlu0 %v2734, 16
        %v2956 = vpop.permute.xlu0 %2955
        %2957 = vrot.lane.b32.xlu0 %v2735, 16
        %v2958 = vpop.permute.xlu0 %2957
        %2959 = vrot.lane.b32.xlu0 %v2736, 16
        %v2960 = vpop.permute.xlu0 %2959
        %2961 = vrot.lane.b32.xlu0 %v2737, 16
        %v2962 = vpop.permute.xlu0 %2961
        %2963 = vrot.lane.b32.xlu0 %v2738, 16
        %v2964 = vpop.permute.xlu0 %2963
        %2965 = vrot.lane.b32.xlu0 %v2739, 16
        %v2966 = vpop.permute.xlu0 %2965
        %2967 = vrot.lane.b32.xlu0 %v2740, 16
        %v2968 = vpop.permute.xlu0 %2967
        %2969 = vrot.lane.b32.xlu0 %v2741, 16
        %v2970 = vpop.permute.xlu0 %2969
        %2971 = vrot.lane.b32.xlu0 %v2742, 16
        %v2972 = vpop.permute.xlu0 %2971
        %2973 = vrot.lane.b32.xlu0 %v2743, 16
        %v2974 = vpop.permute.xlu0 %2973
        %2975 = vrot.lane.b32.xlu0 %v2744, 16
        %v2976 = vpop.permute.xlu0 %2975
        %2977 = vrot.lane.b32.xlu0 %v2745, 16
        %v2978 = vpop.permute.xlu0 %2977
        %2979 = vrot.lane.b32.xlu0 %v2746, 16
        %v2980 = vpop.permute.xlu0 %2979
        %2981 = vrot.lane.b32.xlu0 %v2747, 16
        %v2982 = vpop.permute.xlu0 %2981
        %2983 = vrot.lane.b32.xlu0 %v2748, 16
        %v2984 = vpop.permute.xlu0 %2983
        %2985 = vrot.lane.b32.xlu0 %v2749, 16
        %v2986 = vpop.permute.xlu0 %2985
        %2987 = vrot.lane.b32.xlu0 %v2750, 16
        %v2988 = vpop.permute.xlu0 %2987
        %2989 = vrot.lane.b32.xlu0 %v2751, 16
        %v2990 = vpop.permute.xlu0 %2989
        %2991 = vrot.lane.b32.xlu0 %v2752, 16
        %v2992 = vpop.permute.xlu0 %2991
        %2993 = vrot.lane.b32.xlu0 %v2753, 16
        %v2994 = vpop.permute.xlu0 %2993
        %2995 = vrot.lane.b32.xlu0 %v2754, 16
        %v2996 = vpop.permute.xlu0 %2995
        %2997 = vrot.lane.b32.xlu0 %v2755, 16
        %v2998 = vpop.permute.xlu0 %2997
        %2999 = vrot.lane.b32.xlu0 %v2756, 16
        %v3000 = vpop.permute.xlu0 %2999
        %3001 = vrot.lane.b32.xlu0 %v2757, 16
        %v3002 = vpop.permute.xlu0 %3001
        %3003 = vrot.lane.b32.xlu0 %v2758, 16
        %v3004 = vpop.permute.xlu0 %3003
        %3005 = vrot.lane.b32.xlu0 %v2759, 16
        %v3006 = vpop.permute.xlu0 %3005
        %3007 = vrot.lane.b32.xlu0 %v2760, 16
        %v3008 = vpop.permute.xlu0 %3007
        %3009 = vrot.lane.b32.xlu0 %v2761, 16
        %v3010 = vpop.permute.xlu0 %3009
        %3011 = vrot.lane.b32.xlu0 %v2762, 16
        %v3012 = vpop.permute.xlu0 %3011
        %3013 = vrot.lane.b32.xlu0 %v2763, 16
        %v3014 = vpop.permute.xlu0 %3013
        %3015 = vrot.lane.b32.xlu0 %v2764, 16
        %v3016 = vpop.permute.xlu0 %3015
        %v3053 = vsel %vm407, %v2657, %v2802
        %v3054 = vsel %vm407, %v2658, %v2804
        %v3055 = vsel %vm407, %v2659, %v2806
        %v3056 = vsel %vm407, %v2660, %v2808
        %v3057 = vsel %vm407, %v2661, %v2810
        %v3058 = vsel %vm407, %v2662, %v2812
        %v3059 = vsel %vm407, %v2663, %v2814
        %v3060 = vsel %vm407, %v2664, %v2816
        %v3061 = vsel %vm407, %v2665, %v2818
        %v3062 = vsel %vm407, %v2666, %v2820
        %v3063 = vsel %vm407, %v2667, %v2822
        %v3064 = vsel %vm407, %v2668, %v2824
        %v3065 = vsel %vm407, %v2669, %v2826
        %v3066 = vsel %vm407, %v2670, %v2828
        %v3067 = vsel %vm407, %v2671, %v2830
        %v3068 = vsel %vm407, %v2672, %v2832
        %v3069 = vsel %vm407, %v2673, %v2834
        %v3070 = vsel %vm407, %v2674, %v2836
        %v3071 = vsel %vm407, %v2675, %v2838
        %v3072 = vsel %vm407, %v2676, %v2840
        %v3073 = vsel %vm407, %v2677, %v2842
        %v3074 = vsel %vm407, %v2678, %v2844
        %v3075 = vsel %vm407, %v2679, %v2846
        %v3076 = vsel %vm407, %v2680, %v2848
        %v3077 = vsel %vm407, %v2681, %v2850
        %v3078 = vsel %vm407, %v2682, %v2852
        %v3079 = vsel %vm407, %v2683, %v2854
        %v3080 = vsel %vm407, %v2684, %v2856
        %v3081 = vsel %vm407, %v2685, %v2858
        %v3082 = vsel %vm407, %v2686, %v2860
        %v3083 = vsel %vm407, %v2687, %v2862
        %v3084 = vsel %vm407, %v2688, %v2864
        %v3085 = vsel %vm407, %v2689, %v2866
        %v3086 = vsel %vm407, %v2690, %v2868
        %v3087 = vsel %vm407, %v2691, %v2870
        %v3088 = vsel %vm407, %v2692, %v2872
        %v3089 = vsel %vm1992, %v3053, %v2946
        %v3090 = vsel %vm1992, %v3054, %v2948
        %v3091 = vsel %vm1992, %v3055, %v2950
        %v3092 = vsel %vm1992, %v3056, %v2952
        %v3093 = vsel %vm1992, %v3057, %v2954
        %v3094 = vsel %vm1992, %v3058, %v2956
        %v3095 = vsel %vm1992, %v3059, %v2958
        %v3096 = vsel %vm1992, %v3060, %v2960
        %v3097 = vsel %vm1992, %v3061, %v2962
        %v3098 = vsel %vm1992, %v3062, %v2964
        %v3099 = vsel %vm1992, %v3063, %v2966
        %v3100 = vsel %vm1992, %v3064, %v2968
        %v3101 = vsel %vm1992, %v3065, %v2970
        %v3102 = vsel %vm1992, %v3066, %v2972
        %v3103 = vsel %vm1992, %v3067, %v2974
        %v3104 = vsel %vm1992, %v3068, %v2976
        %v3105 = vsel %vm1992, %v3069, %v2978
        %v3106 = vsel %vm1992, %v3070, %v2980
        %v3107 = vsel %vm1992, %v3071, %v2982
        %v3108 = vsel %vm1992, %v3072, %v2984
        %v3109 = vsel %vm1992, %v3073, %v2986
        %v3110 = vsel %vm1992, %v3074, %v2988
        %v3111 = vsel %vm1992, %v3075, %v2990
        %v3112 = vsel %vm1992, %v3076, %v2992
        %v3113 = vsel %vm1992, %v3077, %v2994
        %v3114 = vsel %vm1992, %v3078, %v2996
        %v3115 = vsel %vm1992, %v3079, %v2998
        %v3116 = vsel %vm1992, %v3080, %v3000
        %v3117 = vsel %vm1992, %v3081, %v3002
        %v3118 = vsel %vm1992, %v3082, %v3004
        %v3119 = vsel %vm1992, %v3083, %v3006
        %v3120 = vsel %vm1992, %v3084, %v3008
        %v3121 = vsel %vm1992, %v3085, %v3010
        %v3122 = vsel %vm1992, %v3086, %v3012
        %v3123 = vsel %vm1992, %v3087, %v3014
        %v3124 = vsel %vm1992, %v3088, %v3016
        %3157 = vrot.lane.b32.xlu0 %v3091, 24
        %v3158 = vpop.permute.xlu0 %3157
        %3159 = vrot.lane.b32.xlu0 %v3092, 24
        %v3160 = vpop.permute.xlu0 %3159
        %3161 = vrot.lane.b32.xlu0 %v3093, 24
        %v3162 = vpop.permute.xlu0 %3161
        %3163 = vrot.lane.b32.xlu0 %v3094, 24
        %v3164 = vpop.permute.xlu0 %3163
        %3165 = vrot.lane.b32.xlu0 %v3095, 24
        %v3166 = vpop.permute.xlu0 %3165
        %3167 = vrot.lane.b32.xlu0 %v3096, 24
        %v3168 = vpop.permute.xlu0 %3167
        %3169 = vrot.lane.b32.xlu0 %v3097, 24
        %v3170 = vpop.permute.xlu0 %3169
        %3171 = vrot.lane.b32.xlu0 %v3098, 24
        %v3172 = vpop.permute.xlu0 %3171
        %3173 = vrot.lane.b32.xlu0 %v3099, 24
        %v3174 = vpop.permute.xlu0 %3173
        %3175 = vrot.lane.b32.xlu0 %v3100, 24
        %v3176 = vpop.permute.xlu0 %3175
        %3177 = vrot.lane.b32.xlu0 %v3101, 24
        %v3178 = vpop.permute.xlu0 %3177
        %3179 = vrot.lane.b32.xlu0 %v3102, 24
        %v3180 = vpop.permute.xlu0 %3179
        %3181 = vrot.lane.b32.xlu0 %v3103, 24
        %v3182 = vpop.permute.xlu0 %3181
        %3183 = vrot.lane.b32.xlu0 %v3104, 24
        %v3184 = vpop.permute.xlu0 %3183
        %3185 = vrot.lane.b32.xlu0 %v3105, 24
        %v3186 = vpop.permute.xlu0 %3185
        %3187 = vrot.lane.b32.xlu0 %v3106, 24
        %v3188 = vpop.permute.xlu0 %3187
        %3189 = vrot.lane.b32.xlu0 %v3107, 24
        %v3190 = vpop.permute.xlu0 %3189
        %3191 = vrot.lane.b32.xlu0 %v3108, 24
        %v3192 = vpop.permute.xlu0 %3191
        %3193 = vrot.lane.b32.xlu0 %v3109, 24
        %v3194 = vpop.permute.xlu0 %3193
        %3195 = vrot.lane.b32.xlu0 %v3110, 24
        %v3196 = vpop.permute.xlu0 %3195
        %3197 = vrot.lane.b32.xlu0 %v3111, 24
        %v3198 = vpop.permute.xlu0 %3197
        %3199 = vrot.lane.b32.xlu0 %v3112, 24
        %v3200 = vpop.permute.xlu0 %3199
        %3201 = vrot.lane.b32.xlu0 %v3113, 24
        %v3202 = vpop.permute.xlu0 %3201
        %3203 = vrot.lane.b32.xlu0 %v3114, 24
        %v3204 = vpop.permute.xlu0 %3203
        %3205 = vrot.lane.b32.xlu0 %v3115, 24
        %v3206 = vpop.permute.xlu0 %3205
        %3207 = vrot.lane.b32.xlu0 %v3116, 24
        %v3208 = vpop.permute.xlu0 %3207
        %3209 = vrot.lane.b32.xlu0 %v3117, 24
        %v3210 = vpop.permute.xlu0 %3209
        %3211 = vrot.lane.b32.xlu0 %v3118, 24
        %v3212 = vpop.permute.xlu0 %3211
        %3213 = vrot.lane.b32.xlu0 %v3119, 24
        %v3214 = vpop.permute.xlu0 %3213
        %3215 = vrot.lane.b32.xlu0 %v3120, 24
        %v3216 = vpop.permute.xlu0 %3215
        %3217 = vrot.lane.b32.xlu0 %v3121, 24
        %v3218 = vpop.permute.xlu0 %3217
        %3219 = vrot.lane.b32.xlu0 %v3122, 24
        %v3220 = vpop.permute.xlu0 %3219
        %3255 = vrot.lane.b32.xlu0 %v3093, 48
        %v3256 = vpop.permute.xlu0 %3255
        %3257 = vrot.lane.b32.xlu0 %v3094, 48
        %v3258 = vpop.permute.xlu0 %3257
        %3259 = vrot.lane.b32.xlu0 %v3095, 48
        %v3260 = vpop.permute.xlu0 %3259
        %3261 = vrot.lane.b32.xlu0 %v3096, 48
        %v3262 = vpop.permute.xlu0 %3261
        %3263 = vrot.lane.b32.xlu0 %v3097, 48
        %v3264 = vpop.permute.xlu0 %3263
        %3265 = vrot.lane.b32.xlu0 %v3098, 48
        %v3266 = vpop.permute.xlu0 %3265
        %3267 = vrot.lane.b32.xlu0 %v3099, 48
        %v3268 = vpop.permute.xlu0 %3267
        %3269 = vrot.lane.b32.xlu0 %v3100, 48
        %v3270 = vpop.permute.xlu0 %3269
        %3271 = vrot.lane.b32.xlu0 %v3101, 48
        %v3272 = vpop.permute.xlu0 %3271
        %3273 = vrot.lane.b32.xlu0 %v3102, 48
        %v3274 = vpop.permute.xlu0 %3273
        %3275 = vrot.lane.b32.xlu0 %v3103, 48
        %v3276 = vpop.permute.xlu0 %3275
        %3277 = vrot.lane.b32.xlu0 %v3104, 48
        %v3278 = vpop.permute.xlu0 %3277
        %3279 = vrot.lane.b32.xlu0 %v3105, 48
        %v3280 = vpop.permute.xlu0 %3279
        %3281 = vrot.lane.b32.xlu0 %v3106, 48
        %v3282 = vpop.permute.xlu0 %3281
        %3283 = vrot.lane.b32.xlu0 %v3107, 48
        %v3284 = vpop.permute.xlu0 %3283
        %3285 = vrot.lane.b32.xlu0 %v3108, 48
        %v3286 = vpop.permute.xlu0 %3285
        %3287 = vrot.lane.b32.xlu0 %v3109, 48
        %v3288 = vpop.permute.xlu0 %3287
        %3289 = vrot.lane.b32.xlu0 %v3110, 48
        %v3290 = vpop.permute.xlu0 %3289
        %3291 = vrot.lane.b32.xlu0 %v3111, 48
        %v3292 = vpop.permute.xlu0 %3291
        %3293 = vrot.lane.b32.xlu0 %v3112, 48
        %v3294 = vpop.permute.xlu0 %3293
        %3295 = vrot.lane.b32.xlu0 %v3113, 48
        %v3296 = vpop.permute.xlu0 %3295
        %3297 = vrot.lane.b32.xlu0 %v3114, 48
        %v3298 = vpop.permute.xlu0 %3297
        %3299 = vrot.lane.b32.xlu0 %v3115, 48
        %v3300 = vpop.permute.xlu0 %3299
        %3301 = vrot.lane.b32.xlu0 %v3116, 48
        %v3302 = vpop.permute.xlu0 %3301
        %3303 = vrot.lane.b32.xlu0 %v3117, 48
        %v3304 = vpop.permute.xlu0 %3303
        %3305 = vrot.lane.b32.xlu0 %v3118, 48
        %v3306 = vpop.permute.xlu0 %3305
        %3307 = vrot.lane.b32.xlu0 %v3119, 48
        %v3308 = vpop.permute.xlu0 %3307
        %3309 = vrot.lane.b32.xlu0 %v3120, 48
        %v3310 = vpop.permute.xlu0 %3309
        %3311 = vrot.lane.b32.xlu0 %v3121, 48
        %v3312 = vpop.permute.xlu0 %3311
        %3313 = vrot.lane.b32.xlu0 %v3122, 48
        %v3314 = vpop.permute.xlu0 %3313
        %3315 = vrot.lane.b32.xlu0 %v3123, 48
        %v3316 = vpop.permute.xlu0 %3315
        %3317 = vrot.lane.b32.xlu0 %v3124, 48
        %v3318 = vpop.permute.xlu0 %3317
        %v3351 = vsel %vm1206, %v3089, %v3158
        %v3352 = vsel %vm1206, %v3090, %v3160
        %v3353 = vsel %vm1206, %v3091, %v3162
        %v3354 = vsel %vm1206, %v3092, %v3164
        %v3355 = vsel %vm1206, %v3093, %v3166
        %v3356 = vsel %vm1206, %v3094, %v3168
        %v3357 = vsel %vm1206, %v3095, %v3170
        %v3358 = vsel %vm1206, %v3096, %v3172
        %v3359 = vsel %vm1206, %v3097, %v3174
        %v3360 = vsel %vm1206, %v3098, %v3176
        %v3361 = vsel %vm1206, %v3099, %v3178
        %v3362 = vsel %vm1206, %v3100, %v3180
        %v3363 = vsel %vm1206, %v3101, %v3182
        %v3364 = vsel %vm1206, %v3102, %v3184
        %v3365 = vsel %vm1206, %v3103, %v3186
        %v3366 = vsel %vm1206, %v3104, %v3188
        %v3367 = vsel %vm1206, %v3105, %v3190
        %v3368 = vsel %vm1206, %v3106, %v3192
        %v3369 = vsel %vm1206, %v3107, %v3194
        %v3370 = vsel %vm1206, %v3108, %v3196
        %v3371 = vsel %vm1206, %v3109, %v3198
        %v3372 = vsel %vm1206, %v3110, %v3200
        %v3373 = vsel %vm1206, %v3111, %v3202
        %v3374 = vsel %vm1206, %v3112, %v3204
        %v3375 = vsel %vm1206, %v3113, %v3206
        %v3376 = vsel %vm1206, %v3114, %v3208
        %v3377 = vsel %vm1206, %v3115, %v3210
        %v3378 = vsel %vm1206, %v3116, %v3212
        %v3379 = vsel %vm1206, %v3117, %v3214
        %v3380 = vsel %vm1206, %v3118, %v3216
        %v3381 = vsel %vm1206, %v3119, %v3218
        %v3382 = vsel %vm1206, %v3120, %v3220
        %v3383 = vsel %vm2287, %v3351, %v3256
        %v3384 = vsel %vm2287, %v3352, %v3258
        %v3385 = vsel %vm2287, %v3353, %v3260
        %v3386 = vsel %vm2287, %v3354, %v3262
        %v3387 = vsel %vm2287, %v3355, %v3264
        %v3388 = vsel %vm2287, %v3356, %v3266
        %v3389 = vsel %vm2287, %v3357, %v3268
        %v3390 = vsel %vm2287, %v3358, %v3270
        %v3391 = vsel %vm2287, %v3359, %v3272
        %v3392 = vsel %vm2287, %v3360, %v3274
        %v3393 = vsel %vm2287, %v3361, %v3276
        %v3394 = vsel %vm2287, %v3362, %v3278
        %v3395 = vsel %vm2287, %v3363, %v3280
        %v3396 = vsel %vm2287, %v3364, %v3282
        %v3397 = vsel %vm2287, %v3365, %v3284
        %v3398 = vsel %vm2287, %v3366, %v3286
        %v3399 = vsel %vm2287, %v3367, %v3288
        %v3400 = vsel %vm2287, %v3368, %v3290
        %v3401 = vsel %vm2287, %v3369, %v3292
        %v3402 = vsel %vm2287, %v3370, %v3294
        %v3403 = vsel %vm2287, %v3371, %v3296
        %v3404 = vsel %vm2287, %v3372, %v3298
        %v3405 = vsel %vm2287, %v3373, %v3300
        %v3406 = vsel %vm2287, %v3374, %v3302
        %v3407 = vsel %vm2287, %v3375, %v3304
        %v3408 = vsel %vm2287, %v3376, %v3306
        %v3409 = vsel %vm2287, %v3377, %v3308
        %v3410 = vsel %vm2287, %v3378, %v3310
        %v3411 = vsel %vm2287, %v3379, %v3312
        %v3412 = vsel %vm2287, %v3380, %v3314
        %v3413 = vsel %vm2287, %v3381, %v3316
        %v3414 = vsel %vm2287, %v3382, %v3318
        %v3415 = vpack.c.bf16 %v3384, %v3383
        %v3416 = vpack.c.bf16 %v3386, %v3385
        %v3417 = vpack.c.bf16 %v3388, %v3387
        %v3418 = vpack.c.bf16 %v3390, %v3389
        %v3419 = vpack.c.bf16 %v3392, %v3391
        %v3420 = vpack.c.bf16 %v3394, %v3393
        %v3421 = vpack.c.bf16 %v3396, %v3395
        %v3422 = vpack.c.bf16 %v3398, %v3397
        %v3423 = vpack.c.bf16 %v3400, %v3399
        %v3424 = vpack.c.bf16 %v3402, %v3401
        %v3425 = vpack.c.bf16 %v3404, %v3403
        %v3426 = vpack.c.bf16 %v3406, %v3405
        %v3427 = vpack.c.bf16 %v3408, %v3407
        %v3428 = vpack.c.bf16 %v3410, %v3409
        %v3429 = vpack.c.bf16 %v3412, %v3411
        %v3430 = vpack.c.bf16 %v3414, %v3413
        %v3431 = vld [vmem:[%s5] sm:$0xf]
        %v3432 = vld [vmem:[%s5 + $0x4] sm:$0xf]
        %v3433 = vld [vmem:[%s5 + $0x8] sm:$0xf]
        %v3434 = vld [vmem:[%s5 + $0xc] sm:$0xf]
        %v3435 = vld [vmem:[%s5 + $0x10] sm:$0xf]
        %v3436 = vld [vmem:[%s5 + $0x14] sm:$0xf]
        %v3437 = vld [vmem:[%s5 + $0x18] sm:$0xf]
        %v3438 = vld [vmem:[%s5 + $0x1c] sm:$0xf]
        %v3439 = vld [vmem:[%s5 + $0x20] sm:$0xf]
        %v3440 = vld [vmem:[%s6] sm:$0x1]
        %v3442 = vlaneseq
        %v3443 = vshrl.u32 %v3442, 7
        %v3444 = vsub.s32 0, %v3443
        %v3445 = vrot.slane %v3440, %v3444
        %v3456 = vunpack.c.l.b16 %v3431
        %v3457 = vunpack.c.l.b16 %v3432
        %v3458 = vunpack.c.l.b16 %v3433
        %v3459 = vunpack.c.l.b16 %v3434
        %v3460 = vunpack.c.l.b16 %v3435
        %v3461 = vunpack.c.l.b16 %v3436
        %v3462 = vunpack.c.l.b16 %v3437
        %v3463 = vunpack.c.l.b16 %v3438
        %v3464 = vunpack.c.l.b16 %v3439
        %v3465 = vpack.c.b16 %v3457, %v3456
        %v3466 = vpack.c.b16 %v3459, %v3458
        %v3467 = vpack.c.b16 %v3461, %v3460
        %v3468 = vpack.c.b16 %v3463, %v3462
        %v3469 = vpack.c.b16 %v3464, %v3464
        %v3475 = vsel %vm2379, %v3415, 0
        %v3478 = vsel %vm2379, %v3416, 0
        %v3481 = vsel %vm2379, %v3417, 0
        %v3484 = vsel %vm2379, %v3418, 0
        %v3487 = vsel %vm2379, %v3419, 0
        %v3490 = vsel %vm2379, %v3420, 0
        %v3493 = vsel %vm2379, %v3421, 0
        %v3496 = vsel %vm2379, %v3422, 0
        %v3499 = vsel %vm2379, %v3423, 0
        %v3502 = vsel %vm2379, %v3424, 0
        %v3505 = vsel %vm2379, %v3425, 0
        %v3508 = vsel %vm2379, %v3426, 0
        %v3511 = vsel %vm2379, %v3427, 0
        %v3514 = vsel %vm2379, %v3428, 0
        %v3517 = vsel %vm2379, %v3429, 0
        %v3520 = vsel %vm2379, %v3430, 0
        %v3523 = vsel %vm2428, %v3469, 0
        %3525 = vmatprep.subr.bf16.mxu0 0
        %3526 = vmatpush1.bf16.msra.mxu0 %v3465
        %3527 = vmatprep.subr.bf16.mxu0 0
        %3528 = vmatpush1.bf16.msra.mxu0 %v3466
        %3529 = vmatprep.subr.bf16.mxu0 0
        %3530 = vmatpush1.bf16.msra.mxu0 %v3467
        %3531 = vmatprep.subr.bf16.mxu0 0
        %3532 = vmatpush1.bf16.msra.mxu0 %v3468
        %3533 = vmatprep.subr.bf16.mxu0 0
        %3534 = vmatpush1.bf16.msra.mxu0 %v3523
        %3535 = vmatprep.subr.bf16.mxu0 0
        %3536 = vmatpush1.bf16.msra.mxu0 0
        %3537 = vmatprep.subr.bf16.mxu0 0
        %3538 = vmatpush1.bf16.msra.mxu0 0
        %3539 = vmatprep.subr.bf16.mxu0 0
        %3540 = vmatpush1.bf16.msra.mxu0 0
        %3541 = vmatprep.subr.bf16.mxu0 0
        %3542 = vmatpush1.bf16.msra.mxu0 0
        %3543 = vmatprep.subr.bf16.mxu0 0
        %3544 = vmatpush1.bf16.msra.mxu0 0
        %3545 = vmatprep.subr.bf16.mxu0 0
        %3546 = vmatpush1.bf16.msra.mxu0 0
        %3547 = vmatprep.subr.bf16.mxu0 0
        %3548 = vmatpush1.bf16.msra.mxu0 0
        %3549 = vmatprep.subr.bf16.mxu0 0
        %3550 = vmatpush1.bf16.msra.mxu0 0
        %3551 = vmatprep.subr.bf16.mxu0 0
        %3552 = vmatpush1.bf16.msra.mxu0 0
        %3553 = vmatprep.subr.bf16.mxu0 0
        %3554 = vmatpush1.bf16.msra.mxu0 0
        %3555 = vmatprep.subr.bf16.mxu0 0
        %3556 = vmatpush1.bf16.msra.mxu0 0
        %3557 = vmatprep.mubr.bf16.mxu0 0
        %3558 = vmatmul.mubr.bf16.gmra.mrb[0].mxu0 %v3475
        %v3559 = vpop.f32.mrb[0].mxu0
        %v3560 = vadd.f32 %v3445, %v3559
        %v3561 = vpop.f32.mrb[0].mxu0
        %v3562 = vpop.f32.mrb[0].mxu0
        %v3563 = vadd.f32 %v3445, %v3562
        %v3564 = vpop.f32.mrb[0].mxu0
        %3565 = vmatprep.mubr.bf16.mxu0 0
        %3566 = vmatmul.mubr.bf16.gmra.mrb[0].mxu0 %v3478
        %v3567 = vpop.f32.mrb[0].mxu0
        %v3568 = vadd.f32 %v3445, %v3567
        %v3569 = vpop.f32.mrb[0].mxu0
        %v3570 = vpop.f32.mrb[0].mxu0
        %v3571 = vadd.f32 %v3445, %v3570
        %v3572 = vpop.f32.mrb[0].mxu0
        %3573 = vmatprep.mubr.bf16.mxu0 0
        %3574 = vmatmul.mubr.bf16.gmra.mrb[0].mxu0 %v3481
        %v3575 = vpop.f32.mrb[0].mxu0
        %v3576 = vadd.f32 %v3445, %v3575
        %v3577 = vpop.f32.mrb[0].mxu0
        %v3578 = vpop.f32.mrb[0].mxu0
        %v3579 = vadd.f32 %v3445, %v3578
        %v3580 = vpop.f32.mrb[0].mxu0
        %3581 = vmatprep.mubr.bf16.mxu0 0
        %3582 = vmatmul.mubr.bf16.gmra.mrb[0].mxu0 %v3484
        %v3583 = vpop.f32.mrb[0].mxu0
        %v3584 = vadd.f32 %v3445, %v3583
        %v3585 = vpop.f32.mrb[0].mxu0
        %v3586 = vpop.f32.mrb[0].mxu0
        %v3587 = vadd.f32 %v3445, %v3586
        %v3588 = vpop.f32.mrb[0].mxu0
        %3589 = vmatprep.mubr.bf16.mxu0 0
        %3590 = vmatmul.mubr.bf16.gmra.mrb[0].mxu0 %v3487
        %v3591 = vpop.f32.mrb[0].mxu0
        %v3592 = vadd.f32 %v3445, %v3591
        %v3593 = vpop.f32.mrb[0].mxu0
        %v3594 = vpop.f32.mrb[0].mxu0
        %v3595 = vadd.f32 %v3445, %v3594
        %v3596 = vpop.f32.mrb[0].mxu0
        %3597 = vmatprep.mubr.bf16.mxu0 0
        %3598 = vmatmul.mubr.bf16.gmra.mrb[0].mxu0 %v3490
        %v3599 = vpop.f32.mrb[0].mxu0
        %v3600 = vadd.f32 %v3445, %v3599
        %v3601 = vpop.f32.mrb[0].mxu0
        %v3602 = vpop.f32.mrb[0].mxu0
        %v3603 = vadd.f32 %v3445, %v3602
        %v3604 = vpop.f32.mrb[0].mxu0
        %3605 = vmatprep.mubr.bf16.mxu0 0
        %3606 = vmatmul.mubr.bf16.gmra.mrb[0].mxu0 %v3493
        %v3607 = vpop.f32.mrb[0].mxu0
        %v3608 = vadd.f32 %v3445, %v3607
        %v3609 = vpop.f32.mrb[0].mxu0
        %v3610 = vpop.f32.mrb[0].mxu0
        %v3611 = vadd.f32 %v3445, %v3610
        %v3612 = vpop.f32.mrb[0].mxu0
        %3613 = vmatprep.mubr.bf16.mxu0 0
        %3614 = vmatmul.mubr.bf16.gmra.mrb[0].mxu0 %v3496
        %v3615 = vpop.f32.mrb[0].mxu0
        %v3616 = vadd.f32 %v3445, %v3615
        %v3617 = vpop.f32.mrb[0].mxu0
        %v3618 = vpop.f32.mrb[0].mxu0
        %v3619 = vadd.f32 %v3445, %v3618
        %v3620 = vpop.f32.mrb[0].mxu0
        %3621 = vmatprep.mubr.bf16.mxu0 0
        %3622 = vmatmul.mubr.bf16.gmra.mrb[0].mxu0 %v3499
        %v3623 = vpop.f32.mrb[0].mxu0
        %v3624 = vadd.f32 %v3445, %v3623
        %v3625 = vpop.f32.mrb[0].mxu0
        %v3626 = vpop.f32.mrb[0].mxu0
        %v3627 = vadd.f32 %v3445, %v3626
        %v3628 = vpop.f32.mrb[0].mxu0
        %3629 = vmatprep.mubr.bf16.mxu0 0
        %3630 = vmatmul.mubr.bf16.gmra.mrb[0].mxu0 %v3502
        %v3631 = vpop.f32.mrb[0].mxu0
        %v3632 = vadd.f32 %v3445, %v3631
        %v3633 = vpop.f32.mrb[0].mxu0
        %v3634 = vpop.f32.mrb[0].mxu0
        %v3635 = vadd.f32 %v3445, %v3634
        %v3636 = vpop.f32.mrb[0].mxu0
        %3637 = vmatprep.mubr.bf16.mxu0 0
        %3638 = vmatmul.mubr.bf16.gmra.mrb[0].mxu0 %v3505
        %v3639 = vpop.f32.mrb[0].mxu0
        %v3640 = vadd.f32 %v3445, %v3639
        %v3641 = vpop.f32.mrb[0].mxu0
        %v3642 = vpop.f32.mrb[0].mxu0
        %v3643 = vadd.f32 %v3445, %v3642
        %v3644 = vpop.f32.mrb[0].mxu0
        %3645 = vmatprep.mubr.bf16.mxu0 0
        %3646 = vmatmul.mubr.bf16.gmra.mrb[0].mxu0 %v3508
        %v3647 = vpop.f32.mrb[0].mxu0
        %v3648 = vadd.f32 %v3445, %v3647
        %v3649 = vpop.f32.mrb[0].mxu0
        %v3650 = vpop.f32.mrb[0].mxu0
        %v3651 = vadd.f32 %v3445, %v3650
        %v3652 = vpop.f32.mrb[0].mxu0
        %3653 = vmatprep.mubr.bf16.mxu0 0
        %3654 = vmatmul.mubr.bf16.gmra.mrb[0].mxu0 %v3511
        %v3655 = vpop.f32.mrb[0].mxu0
        %v3656 = vadd.f32 %v3445, %v3655
        %v3657 = vpop.f32.mrb[0].mxu0
        %v3658 = vpop.f32.mrb[0].mxu0
        %v3659 = vadd.f32 %v3445, %v3658
        %v3660 = vpop.f32.mrb[0].mxu0
        %3661 = vmatprep.mubr.bf16.mxu0 0
        %3662 = vmatmul.mubr.bf16.gmra.mrb[0].mxu0 %v3514
        %v3663 = vpop.f32.mrb[0].mxu0
        %v3664 = vadd.f32 %v3445, %v3663
        %v3665 = vpop.f32.mrb[0].mxu0
        %v3666 = vpop.f32.mrb[0].mxu0
        %v3667 = vadd.f32 %v3445, %v3666
        %v3668 = vpop.f32.mrb[0].mxu0
        %3669 = vmatprep.mubr.bf16.mxu0 0
        %3670 = vmatmul.mubr.bf16.gmra.mrb[0].mxu0 %v3517
        %v3671 = vpop.f32.mrb[0].mxu0
        %v3672 = vadd.f32 %v3445, %v3671
        %v3673 = vpop.f32.mrb[0].mxu0
        %v3674 = vpop.f32.mrb[0].mxu0
        %v3675 = vadd.f32 %v3445, %v3674
        %v3676 = vpop.f32.mrb[0].mxu0
        %3677 = vmatprep.mubr.bf16.mxu0 0
        %3678 = vmatmul.mubr.bf16.gmra.mrb[0].mxu0 %v3520
        %v3679 = vpop.f32.mrb[0].mxu0
        %v3680 = vadd.f32 %v3445, %v3679
        %v3681 = vpop.f32.mrb[0].mxu0
        %v3682 = vpop.f32.mrb[0].mxu0
        %v3683 = vadd.f32 %v3445, %v3682
        %v3684 = vpop.f32.mrb[0].mxu0
        %3685 = vdwg.mxu0
        %v3686 = vmax.f32 %v3560, 0.0
        %v3687 = vmax.f32 %v3563, 0.0
        %v3688 = vmax.f32 %v3568, 0.0
        %v3689 = vmax.f32 %v3571, 0.0
        %v3690 = vmax.f32 %v3576, 0.0
        %v3691 = vmax.f32 %v3579, 0.0
        %v3692 = vmax.f32 %v3584, 0.0
        %v3693 = vmax.f32 %v3587, 0.0
        %v3694 = vmax.f32 %v3592, 0.0
        %v3695 = vmax.f32 %v3595, 0.0
        %v3696 = vmax.f32 %v3600, 0.0
        %v3697 = vmax.f32 %v3603, 0.0
        %v3698 = vmax.f32 %v3608, 0.0
        %v3699 = vmax.f32 %v3611, 0.0
        %v3700 = vmax.f32 %v3616, 0.0
        %v3701 = vmax.f32 %v3619, 0.0
        %v3702 = vmax.f32 %v3624, 0.0
        %v3703 = vmax.f32 %v3627, 0.0
        %v3704 = vmax.f32 %v3632, 0.0
        %v3705 = vmax.f32 %v3635, 0.0
        %v3706 = vmax.f32 %v3640, 0.0
        %v3707 = vmax.f32 %v3643, 0.0
        %v3708 = vmax.f32 %v3648, 0.0
        %v3709 = vmax.f32 %v3651, 0.0
        %v3710 = vmax.f32 %v3656, 0.0
        %v3711 = vmax.f32 %v3659, 0.0
        %v3712 = vmax.f32 %v3664, 0.0
        %v3713 = vmax.f32 %v3667, 0.0
        %v3714 = vmax.f32 %v3672, 0.0
        %v3715 = vmax.f32 %v3675, 0.0
        %v3716 = vmax.f32 %v3680, 0.0
        %v3717 = vmax.f32 %v3683, 0.0
        %v3718 = vadd.f32 %v3686, %v1496
        %v3719 = vadd.f32 %v3687, %v1497
        %v3720 = vadd.f32 %v3688, %v1498
        %v3721 = vadd.f32 %v3689, %v1499
        %v3722 = vadd.f32 %v3690, %v1500
        %v3723 = vadd.f32 %v3691, %v1501
        %v3724 = vadd.f32 %v3692, %v1502
        %v3725 = vadd.f32 %v3693, %v1503
        %v3726 = vadd.f32 %v3694, %v1504
        %v3727 = vadd.f32 %v3695, %v1505
        %v3728 = vadd.f32 %v3696, %v1506
        %v3729 = vadd.f32 %v3697, %v1507
        %v3730 = vadd.f32 %v3698, %v1508
        %v3731 = vadd.f32 %v3699, %v1509
        %v3732 = vadd.f32 %v3700, %v1510
        %v3733 = vadd.f32 %v3701, %v1511
        %v3734 = vadd.f32 %v3702, %v1512
        %v3735 = vadd.f32 %v3703, %v1513
        %v3736 = vadd.f32 %v3704, %v1514
        %v3737 = vadd.f32 %v3705, %v1515
        %v3738 = vadd.f32 %v3706, %v1516
        %v3739 = vadd.f32 %v3707, %v1517
        %v3740 = vadd.f32 %v3708, %v1518
        %v3741 = vadd.f32 %v3709, %v1519
        %v3742 = vadd.f32 %v3710, %v1520
        %v3743 = vadd.f32 %v3711, %v1521
        %v3744 = vadd.f32 %v3712, %v1522
        %v3745 = vadd.f32 %v3713, %v1523
        %v3746 = vadd.f32 %v3714, %v1524
        %v3747 = vadd.f32 %v3715, %v1525
        %v3748 = vadd.f32 %v3716, %v1526
        %v3749 = vadd.f32 %v3717, %v1527
        %v3750 = vpack.c.bf16 %v3719, %v3718
        %v3751 = vpack.c.bf16 %v3721, %v3720
        %v3752 = vpack.c.bf16 %v3723, %v3722
        %v3753 = vpack.c.bf16 %v3725, %v3724
        %v3754 = vpack.c.bf16 %v3727, %v3726
        %v3755 = vpack.c.bf16 %v3729, %v3728
        %v3756 = vpack.c.bf16 %v3731, %v3730
        %v3757 = vpack.c.bf16 %v3733, %v3732
        %v3758 = vpack.c.bf16 %v3735, %v3734
        %v3759 = vpack.c.bf16 %v3737, %v3736
        %v3760 = vpack.c.bf16 %v3739, %v3738
        %v3761 = vpack.c.bf16 %v3741, %v3740
        %v3762 = vpack.c.bf16 %v3743, %v3742
        %v3763 = vpack.c.bf16 %v3745, %v3744
        %v3764 = vpack.c.bf16 %v3747, %v3746
        %v3765 = vpack.c.bf16 %v3749, %v3748
        %v3766 = vlaneseq
        %v3767 = vshrl.u32 %v3766, 7
        %v3768 = vlaneseq
        %v3769 = vand.u32 %v3768, 127
        %vm3770 = vcmp.eq.s32.totalorder %v3767, %v3769
        %v3771 = vsel %vm3770, 1, 0
        %v3772 = vcvt.s32.f32 %v3771
        %v3773 = vpack.c.bf16 %v3772, %v3772
        %v3775 = vsel %vm407, %v3773, 0
        %v3778 = vsel %vm407, %v3750, 0
        %v3781 = vsel %vm407, %v3751, 0
        %v3784 = vsel %vm407, %v3752, 0
        %v3787 = vsel %vm407, %v3753, 0
        %v3790 = vsel %vm407, %v3754, 0
        %v3793 = vsel %vm407, %v3755, 0
        %v3796 = vsel %vm407, %v3756, 0
        %v3799 = vsel %vm407, %v3757, 0
        %v3802 = vsel %vm407, %v3758, 0
        %v3805 = vsel %vm407, %v3759, 0
        %v3808 = vsel %vm407, %v3760, 0
        %v3811 = vsel %vm407, %v3761, 0
        %v3814 = vsel %vm407, %v3762, 0
        %v3817 = vsel %vm407, %v3763, 0
        %v3820 = vsel %vm407, %v3764, 0
        %v3823 = vsel %vm407, %v3765, 0
        %3825 = vmatprep.subr.bf16.mxu0 0
        %3826 = vmatpush1.bf16.xpose.msra.mxu0 %v3778
        %3827 = vmatprep.subr.bf16.mxu0 0
        %3828 = vmatpush1.bf16.xpose.msra.mxu0 %v3781
        %3829 = vmatprep.subr.bf16.mxu0 0
        %3830 = vmatpush1.bf16.xpose.msra.mxu0 %v3784
        %3831 = vmatprep.subr.bf16.mxu0 0
        %3832 = vmatpush1.bf16.xpose.msra.mxu0 %v3787
        %3833 = vmatprep.subr.bf16.mxu0 0
        %3834 = vmatpush1.bf16.xpose.msra.mxu0 %v3790
        %3835 = vmatprep.subr.bf16.mxu0 0
        %3836 = vmatpush1.bf16.xpose.msra.mxu0 %v3793
        %3837 = vmatprep.subr.bf16.mxu0 0
        %3838 = vmatpush1.bf16.xpose.msra.mxu0 %v3796
        %3839 = vmatprep.subr.bf16.mxu0 0
        %3840 = vmatpush1.bf16.xpose.msra.mxu0 %v3799
        %3841 = vmatprep.subr.bf16.mxu0 0
        %3842 = vmatpush1.bf16.xpose.msra.mxu0 %v3802
        %3843 = vmatprep.subr.bf16.mxu0 0
        %3844 = vmatpush1.bf16.xpose.msra.mxu0 %v3805
        %3845 = vmatprep.subr.bf16.mxu0 0
        %3846 = vmatpush1.bf16.xpose.msra.mxu0 %v3808
        %3847 = vmatprep.subr.bf16.mxu0 0
        %3848 = vmatpush1.bf16.xpose.msra.mxu0 %v3811
        %3849 = vmatprep.subr.bf16.mxu0 0
        %3850 = vmatpush1.bf16.xpose.msra.mxu0 %v3814
        %3851 = vmatprep.subr.bf16.mxu0 0
        %3852 = vmatpush1.bf16.xpose.msra.mxu0 %v3817
        %3853 = vmatprep.subr.bf16.mxu0 0
        %3854 = vmatpush1.bf16.xpose.msra.mxu0 %v3820
        %3855 = vmatprep.subr.bf16.mxu0 0
        %3856 = vmatpush1.bf16.xpose.msra.mxu0 %v3823
        %3857 = vmatprep.mubr.bf16.mxu0 0
        %3858 = vmatmul.mubr.bf16.gmra.mrb[0].mxu0 %v3775
        %v3859 = vpop.f32.mrb[0].mxu0
        %v3860 = vadd.f32 0.0, %v3859
        %v3861 = vpop.f32.mrb[0].mxu0
        %v3862 = vadd.f32 0.0, %v3861
        %v3863 = vpop.f32.mrb[0].mxu0
        %v3864 = vpop.f32.mrb[0].mxu0
        %3865 = vdwg.mxu0
        %3866 = vst [vmem:[%s363] sm:$0xff] %v3860
        %3867 = vst [vmem:[%s363 + $0x8] sm:$0xff] %v3862
        %v3868 = vld [vmem:[%s7] sm:$0xf]
        %v3869 = vld [vmem:[%s7 + $0x4] sm:$0xf]
        %v3870 = vld [vmem:[%s8] sm:$0xff]
        %v3871 = vld [vmem:[%s8 + $0x8] sm:$0xff]
        %3873 = vset.pattern.permute.xlu0 0
        %3874 = vperm.xlu0 %3873, %v3870
        %v3875 = vpop.permute.xlu0 %3874
        %3878 = vset.pattern.permute.xlu0 0
        %3879 = vperm.xlu0 %3878, %v3871
        %v3880 = vpop.permute.xlu0 %3879
        %v3884 = vunpack.c.l.b16 %v3868
        %v3885 = vunpack.c.l.b16 %v3869
        %v3886 = vpack.c.b16 %v3885, %v3884
        %v3888 = vsel %vm407, %v3886, 0
        %3890 = vmatprep.subr.bf16.mxu0 0
        %3891 = vmatpush1.bf16.xpose.msra.mxu0 %v3778
        %3892 = vmatprep.subr.bf16.mxu0 0
        %3893 = vmatpush1.bf16.xpose.msra.mxu0 %v3781
        %3894 = vmatprep.subr.bf16.mxu0 0
        %3895 = vmatpush1.bf16.xpose.msra.mxu0 %v3784
        %3896 = vmatprep.subr.bf16.mxu0 0
        %3897 = vmatpush1.bf16.xpose.msra.mxu0 %v3787
        %3898 = vmatprep.subr.bf16.mxu0 0
        %3899 = vmatpush1.bf16.xpose.msra.mxu0 %v3790
        %3900 = vmatprep.subr.bf16.mxu0 0
        %3901 = vmatpush1.bf16.xpose.msra.mxu0 %v3793
        %3902 = vmatprep.subr.bf16.mxu0 0
        %3903 = vmatpush1.bf16.xpose.msra.mxu0 %v3796
        %3904 = vmatprep.subr.bf16.mxu0 0
        %3905 = vmatpush1.bf16.xpose.msra.mxu0 %v3799
        %3906 = vmatprep.subr.bf16.mxu0 0
        %3907 = vmatpush1.bf16.xpose.msra.mxu0 %v3802
        %3908 = vmatprep.subr.bf16.mxu0 0
        %3909 = vmatpush1.bf16.xpose.msra.mxu0 %v3805
        %3910 = vmatprep.subr.bf16.mxu0 0
        %3911 = vmatpush1.bf16.xpose.msra.mxu0 %v3808
        %3912 = vmatprep.subr.bf16.mxu0 0
        %3913 = vmatpush1.bf16.xpose.msra.mxu0 %v3811
        %3914 = vmatprep.subr.bf16.mxu0 0
        %3915 = vmatpush1.bf16.xpose.msra.mxu0 %v3814
        %3916 = vmatprep.subr.bf16.mxu0 0
        %3917 = vmatpush1.bf16.xpose.msra.mxu0 %v3817
        %3918 = vmatprep.subr.bf16.mxu0 0
        %3919 = vmatpush1.bf16.xpose.msra.mxu0 %v3820
        %3920 = vmatprep.subr.bf16.mxu0 0
        %3921 = vmatpush1.bf16.xpose.msra.mxu0 %v3823
        %3922 = vmatprep.mubr.bf16.mxu0 0
        %3923 = vmatmul.mubr.bf16.gmra.mrb[0].mxu0 %v3888
        %v3924 = vpop.f32.mrb[0].mxu0
        %v3925 = vadd.f32 %v3875, %v3924
        %v3926 = vpop.f32.mrb[0].mxu0
        %v3927 = vadd.f32 %v3875, %v3926
        %v3928 = vpop.f32.mrb[0].mxu0
        %v3929 = vadd.f32 %v3880, %v3928
        %v3930 = vpop.f32.mrb[0].mxu0
        %v3931 = vadd.f32 %v3880, %v3930
        %3932 = vdwg.mxu0
        %3933 = vst [vmem:[%s356] sm:$0xff] %v3925
        %3934 = vst [vmem:[%s356 + $0x8] sm:$0xff] %v3927
        %3935 = vst [vmem:[%s356 + $0x10] sm:$0xff] %v3929
        %3936 = vst [vmem:[%s356 + $0x18] sm:$0xff] %v3931
        %s3937 = sand.u32 %s230, 1
        %s3938 = scalar_lea.sflag [#allocation4], %s3937
        %s3939 = sand.u32 %s230, 1
        %s3940 = smul.addr %s3939, 32
        %s3941 = scalar_lea.vmem [#allocation3], %s3940
        %s3942 = sand.u32 %s256, 1
        %s3943 = scalar_lea.sflag [#allocation6], %s3942
        %s3944 = sand.u32 %s256, 1
        %s3945 = smul.addr %s3944, 16
        %s3946 = scalar_lea.vmem [#allocation5], %s3945
        // Predicated region
        $region57: #{tpu_custom_call.1} parent=55 // pred_check
          %p3947 = pneg %p240
        $region58: #{tpu_custom_call.1} parent=55 // pred_check_branch
          %3949 = sbr.rel (%p3947) target = $region60
        $region59: #{tpu_custom_call.1} parent=55 // pred_region
          %s3951 = ssub.s32 512, 512
          %3952 = vsyncadd %s3938, %s3951
          %s3953 = smul.addr %s28, 4
          %s3954 = smul.addr %s3953, 128
          %s3955 = scalar_lea.hbm %s9, %s3954
          %s3956 = sshll.u32 %s3941, 4
          %s3957 = int_to_ptr.vmem [resolvable:$true] %s3956
          %3962 = dma.vmem_to_hbm [thread:$0]  %s3957, 512, %s3955, %s3938, 256, 256, 16
        $region60: #{tpu_custom_call.1} parent=55 // pred_fallthru
          _
        // Predicated region
        $region61: #{tpu_custom_call.1} parent=55 // pred_check
          %p3963 = pneg %p266
        $region62: #{tpu_custom_call.1} parent=55 // pred_check_branch
          %3965 = sbr.rel (%p3963) target = $region64
        $region63: #{tpu_custom_call.1} parent=55 // pred_region
          %s3967 = ssub.s32 256, 256
          %3968 = vsyncadd %s3943, %s3967
          %s3969 = smul.addr %s28, 2
          %s3970 = smul.addr %s3969, 128
          %s3971 = scalar_lea.hbm %s10, %s3970
          %s3973 = sshll.u32 %s3946, 4
          %s3974 = int_to_ptr.vmem [resolvable:$true] %s3973
          %3976 = dma.vmem_to_hbm [thread:$0]  %s3974, 256, %s3971, %s3943
        $region64: #{tpu_custom_call.1} parent=55 // pred_fallthru
          _
      $region56: #{tpu_custom_call.1} parent=5 // pred_fallthru
        _
      %p3977 = scmp.le.s32.totalorder 2, %s23
      // Predicated region
      $region65: #{tpu_custom_call.1} parent=5 // pred_check
        %p3978 = pneg %p3977
      $region66: #{tpu_custom_call.1} parent=5 // pred_check_branch
        %3980 = sbr.rel (%p3978) target = $region68
      $region67: #{tpu_custom_call.1} parent=5 // pred_region
        %s3981 = ssub.s32 %s23, 2
        // Predicated region
        $region69: #{tpu_custom_call.1} parent=67 // pred_check
          %p3982 = pneg %p246
        $region70: #{tpu_custom_call.1} parent=67 // pred_check_branch
          %3984 = sbr.rel (%p3982) target = $region72
        $region71: #{tpu_custom_call.1} parent=67 // pred_region
          %s3985 = sand.u32 %s231, 1
          %s3986 = scalar_lea.sflag [#allocation4], %s3985
          %s3987 = sand.u32 %s231, 1
          %s3988 = smul.addr %s3987, 32
          %s3989 = scalar_lea.vmem [#allocation3], %s3988
          %3990 = dma.done %s3986, 512
        $region72: #{tpu_custom_call.1} parent=67 // pred_fallthru
          _
        // Predicated region
        $region73: #{tpu_custom_call.1} parent=67 // pred_check
          %p3991 = pneg %p272
        $region74: #{tpu_custom_call.1} parent=67 // pred_check_branch
          %3993 = sbr.rel (%p3991) target = $region76
        $region75: #{tpu_custom_call.1} parent=67 // pred_region
          %s3994 = sand.u32 %s257, 1
          %s3995 = scalar_lea.sflag [#allocation6], %s3994
          %s3996 = sand.u32 %s257, 1
          %s3997 = smul.addr %s3996, 16
          %s3998 = scalar_lea.vmem [#allocation5], %s3997
          %3999 = dma.done %s3995, 256
        $region76: #{tpu_custom_call.1} parent=67 // pred_fallthru
          _
      $region68: #{tpu_custom_call.1} parent=5 // pred_fallthru
        _
    $region6: #{tpu_custom_call.1} parent=1 // loop_footer
      %s27 = sadd.s32 1, %s23
    $region7: #{tpu_custom_call.1} parent=1 // loop_footer_branch
      %22 = sbr.rel target = $region3
    $region8: #{tpu_custom_call.1} parent=1 // loop_exit
      _
    %4000 = vsyncpa [#allocation4], 1
    %s4001 = scalar_lea.sflag [#allocation4], 1
    %4002 = vsyncpa %s4001, 1
    %4003 = vsyncpa [#allocation6], 1
    %s4004 = scalar_lea.sflag [#allocation6], 1
    %4005 = vsyncpa %s4004, 1

</llo_original>
